<compile_context>
chip_gen: v7x
topology: tpu7x:2x2x1
jax: 0.10.0
libtpu: 0.0.40
codegen_flags: <defaults>
</compile_context>

<pallas_src>
import functools

import jax
import jax.numpy as jnp
from jax.experimental import pallas as pl
from jax.experimental.pallas import tpu as pltpu

PP = 128  # lane-padded projection dim (proj_dim = 64 zero-padded to a full vreg lane width)


# ---------------------------------------------------------------------------
# Fused kernel: Conv1d + global-attention logits + span extraction + head MLP
# ---------------------------------------------------------------------------
def gap_head_kernel(offs_ref,                      # SMEM (B, 2*N) int32  (scalar prefetch)
                    x_ref,                         # (B, S, H)
                    wk_ref,                        # (H, K*PP)  all conv taps, lane-padded
                    bconv_ref,                     # (1, PP)
                    watt_ref, batt_ref,            # (PP, 1), (1, 1)
                    bn1s_ref, bn1b_ref,            # (N, PP)   per-span BN1 scale / shift
                    w1_ref,                        # (N, PP, HID)  per-span slices of fc Linear
                    b1_ref, bn2s_ref, bn2b_ref,    # (1, HID)
                    w2a_ref, w2b_ref, w2c_ref,     # (HID, 3), (NU, 3), (NF, 3)
                    b2_ref,                        # (1, 3)
                    urls_ref, feats_ref,           # (B, NU), (B, NF)
                    out_ref,                       # (B, 3)
                    *, seq_len, k_taps, cnn_context, n_spans):
    S, K, C, N = seq_len, k_taps, cnn_context, n_spans
    B = x_ref.shape[0]

    wk = wk_ref[...]
    bconv = bconv_ref[...]
    watt = watt_ref[...]
    batt = batt_ref[...]
    bn1s = bn1s_ref[...]
    bn1b = bn1b_ref[...]
    w1 = w1_ref[...]
    b1 = b1_ref[...]
    bn2s = bn2s_ref[...]
    bn2b = bn2b_ref[...]
    w2a = w2a_ref[...]
    w2b = w2b_ref[...]
    w2c = w2c_ref[...]
    b2 = b2_ref[...]
    urls = urls_ref[...]
    feats = feats_ref[...]

    t_ids = jax.lax.broadcasted_iota(jnp.int32, (S, 1), 0)   # sequence positions

    for b in range(B):                                       # static unroll, B is tiny
        # --- context Conv1d: one MXU push for all K taps, shifts on the 128-wide result ---
        yb = jnp.dot(x_ref[b], wk, preferred_element_type=jnp.float32)   # (S, K*PP)
        acc = None
        for j in range(K):
            slab = yb[:, j * PP:(j + 1) * PP]                # lane-aligned 128-wide slice
            d = j - C                                        # conv[s] needs y_j[s + d]
            if d != 0:
                slab = pltpu.roll(slab, shift=(-d) % S, axis=0)          # XLU sublane roll
                keep = jnp.logical_and(t_ids + d >= 0, t_ids + d < S)    # zero the wrap rows
                slab = jnp.where(keep, slab, 0.0)
            acc = slab if acc is None else acc + slab
        conv_b = acc + bconv                                 # (S, PP); lanes >= 64 are zero

        # --- global attention logits for the span extractor ---
        att_b = jnp.dot(conv_b, watt, preferred_element_type=jnp.float32) + batt   # (S, 1)

        # --- SelfAttentiveSpanExtractor + fc head, fused; offsets read from SMEM ---
        h = b1                                               # (1, HID), start at the bias
        for n in range(N):                                   # static unroll over spans
            start = offs_ref[b, 2 * n]
            end = offs_ref[b, 2 * n + 1]
            m = jnp.logical_and(t_ids >= start, t_ids <= end).astype(jnp.float32)  # (S, 1)
            # allennlp-0.8 masked_softmax: softmax(logits * mask) * mask, renormalized
            lm = att_b * m
            mx = jnp.max(lm, axis=0, keepdims=True)
            e = jnp.exp(lm - mx)
            sm = e / jnp.sum(e, axis=0, keepdims=True)
            w = sm * m
            w = w / (jnp.sum(w, axis=0, keepdims=True) + 1e-13)
            attended = jnp.sum(w * conv_b, axis=0, keepdims=True)        # (1, PP)
            # BatchNorm1d (eval) on this span's slab, then its slice of the first Linear
            xn = attended * bn1s[n:n + 1, :] + bn1b[n:n + 1, :]
            h = h + jnp.dot(xn, w1[n], preferred_element_type=jnp.float32)
        h = jnp.maximum(h, 0.0)                              # ReLU
        h = h * bn2s + bn2b                                  # BatchNorm1d (eval); Dropout(0.6)=id
        # new_last_layer on concat([fc_output, in_urls, other_feats]) as a split matmul
        o = (jnp.dot(h, w2a, preferred_element_type=jnp.float32)
             + jnp.dot(urls[b:b + 1, :], w2b, preferred_element_type=jnp.float32)
             + jnp.dot(feats[b:b + 1, :], w2c, preferred_element_type=jnp.float32)
             + b2)
        out_ref[b:b + 1, :] = o.astype(out_ref.dtype)


def gap_head_forward(bert_outputs, offsets, in_urls, other_feats, params, cnn_context):
    """bert_outputs: (B, S, H); offsets: (B, N, 2) int; returns (B, 3) logits."""
    B, S, H = bert_outputs.shape
    N = offsets.shape[1]
    K = 1 + 2 * cnn_context
    HID = params["b1"].shape[1]
    NU = in_urls.shape[1]
    NF = other_feats.shape[1]
    offs_flat = offsets.reshape(B, 2 * N).astype(jnp.int32)

    kernel = functools.partial(gap_head_kernel, seq_len=S, k_taps=K,
                               cnn_context=cnn_context, n_spans=N)
    grid_spec = pltpu.PrefetchScalarGridSpec(
        num_scalar_prefetch=1,                       # offsets -> SMEM
        grid=(1,),                                   # single step: whole head in one launch
        in_specs=[
            pl.BlockSpec((B, S, H), lambda i, offs: (0, 0, 0)),      # bert_outputs
            pl.BlockSpec((H, K * PP), lambda i, offs: (0, 0)),       # conv weights (all taps)
            pl.BlockSpec((1, PP), lambda i, offs: (0, 0)),           # conv bias
            pl.BlockSpec((PP, 1), lambda i, offs: (0, 0)),           # attention weight
            pl.BlockSpec((1, 1), lambda i, offs: (0, 0)),            # attention bias
            pl.BlockSpec((N, PP), lambda i, offs: (0, 0)),           # BN1 scale (per span)
            pl.BlockSpec((N, PP), lambda i, offs: (0, 0)),           # BN1 shift (per span)
            pl.BlockSpec((N, PP, HID), lambda i, offs: (0, 0, 0)),   # fc Linear weight
            pl.BlockSpec((1, HID), lambda i, offs: (0, 0)),          # fc Linear bias
            pl.BlockSpec((1, HID), lambda i, offs: (0, 0)),          # BN2 scale
            pl.BlockSpec((1, HID), lambda i, offs: (0, 0)),          # BN2 shift
            pl.BlockSpec((HID, 3), lambda i, offs: (0, 0)),          # last layer: fc part
            pl.BlockSpec((NU, 3), lambda i, offs: (0, 0)),           # last layer: urls part
            pl.BlockSpec((NF, 3), lambda i, offs: (0, 0)),           # last layer: feats part
            pl.BlockSpec((1, 3), lambda i, offs: (0, 0)),            # last layer bias
            pl.BlockSpec((B, NU), lambda i, offs: (0, 0)),           # in_urls
            pl.BlockSpec((B, NF), lambda i, offs: (0, 0)),           # other_feats
        ],
        out_specs=pl.BlockSpec((B, 3), lambda i, offs: (0, 0)),
    )
    return pl.pallas_call(
        kernel,
        out_shape=jax.ShapeDtypeStruct((B, 3), jnp.float32),
        grid_spec=grid_spec,
        compiler_params=pltpu.CompilerParams(dimension_semantics=("arbitrary",)),
    )(offs_flat, bert_outputs,
      params["wk_flat"], params["b_conv_pad"], params["w_att_pad"], params["b_att"],
      params["bn1_scale_pad"], params["bn1_shift_pad"], params["w1_pad"],
      params["b1"], params["bn2_scale"], params["bn2_shift"],
      params["w2a"], params["w2b"], params["w2c"], params["b2"],
      in_urls, other_feats)


# ---------------------------------------------------------------------------
# Pure-JAX reference (allennlp 0.8 SelfAttentiveSpanExtractor semantics)
# ---------------------------------------------------------------------------
def self_attentive_span_extract(conv_output, att_logits, offsets):
    # conv_output: (B, S, P); att_logits: (B, S, 1); offsets: (B, N, 2) int (inclusive)
    starts = offsets[..., 0]
    ends = offsets[..., 1]
    widths = ends - starts
    max_w = int(jnp.max(widths)) + 1        # offsets are concrete here (reference is un-jitted)
    rng = jnp.arange(max_w)[None, None, :]
    span_mask = (rng <= widths[..., None]).astype(jnp.float32)
    raw_idx = ends[..., None] - rng
    span_mask = span_mask * (raw_idx >= 0).astype(jnp.float32)
    idx = jnp.maximum(raw_idx, 0)
    gather = jax.vmap(lambda seq, i: seq[i])                  # (S, P), (N, W) -> (N, W, P)
    span_emb = gather(conv_output, idx)                       # (B, N, W, P)
    span_logits = gather(att_logits, idx)[..., 0]             # (B, N, W)
    # allennlp masked_softmax (non memory-efficient variant)
    w = jax.nn.softmax(span_logits * span_mask, axis=-1)
    w = w * span_mask
    w = w / (jnp.sum(w, axis=-1, keepdims=True) + 1e-13)
    attended = jnp.einsum("bnw,bnwp->bnp", w, span_emb)       # (B, N, P)
    return attended.reshape(conv_output.shape[0], -1)


def gap_head_reference(bert_outputs, offsets, in_urls, other_feats, params, cnn_context):
    B, S, H = bert_outputs.shape
    K = params["w_conv"].shape[0]
    x_pad = jnp.pad(bert_outputs, ((0, 0), (cnn_context, cnn_context), (0, 0)))
    windows = jnp.stack([x_pad[:, j:j + S, :] for j in range(K)], axis=2)     # (B, S, K, H)
    conv_out = jnp.einsum("bsjh,jhp->bsp", windows, params["w_conv"]) + params["b_conv"]
    att_logits = conv_out @ params["w_att"] + params["b_att"]
    extracted = self_attentive_span_extract(conv_out, att_logits, offsets)
    x = extracted * params["bn1_scale"] + params["bn1_shift"]
    h = jnp.maximum(x @ params["w1"] + params["b1"], 0.0)
    h = h * params["bn2_scale"] + params["bn2_shift"]
    cat = jnp.concatenate([h, in_urls, other_feats], axis=1)
    return cat @ params["w2_full"] + params["b2"]


# ---------------------------------------------------------------------------
# Parameter construction (deterministic, mirrors Head.__init__ shapes + inits)
# ---------------------------------------------------------------------------
def make_params(key, bert_hidden, cnn_context, proj_dim, hidden_size,
                n_spans=3, n_urls=3, n_feats=14):
    k_taps = 1 + 2 * cnn_context
    keys = jax.random.split(key, 8)
    # Conv1d(bert_hidden -> proj_dim, kernel=k): PyTorch default uniform init.
    bound_c = 1.0 / (bert_hidden * k_taps) ** 0.5
    w_conv_t = jax.random.uniform(keys[0], (proj_dim, bert_hidden, k_taps),
                                  minval=-bound_c, maxval=bound_c)
    w_conv = jnp.transpose(w_conv_t, (2, 1, 0))               # (K, H, P)
    b_conv = jax.random.uniform(keys[1], (1, proj_dim), minval=-bound_c, maxval=bound_c)
    # SelfAttentiveSpanExtractor global attention: Linear(proj_dim -> 1).
    bound_a = 1.0 / proj_dim ** 0.5
    w_att = jax.random.uniform(keys[2], (proj_dim, 1), minval=-bound_a, maxval=bound_a)
    b_att = jax.random.uniform(keys[3], (1, 1), minval=-bound_a, maxval=bound_a)
    # fc: BN(3P) -> Linear(3P -> hidden, kaiming normal, bias 0) -> ReLU -> BN(hidden)
    fan_in = n_spans * proj_dim
    w1 = jax.random.normal(keys[4], (fan_in, hidden_size)) * (2.0 / fan_in) ** 0.5
    b1 = jnp.zeros((1, hidden_size))
    eps = 1e-5
    bn1_scale = jnp.full((1, fan_in), 1.0 / (1.0 + eps) ** 0.5)   # gamma=1, mean=0, var=1
    bn1_shift = jnp.zeros((1, fan_in))
    bn2_scale = jnp.full((1, hidden_size), 1.0 / (1.0 + eps) ** 0.5)
    bn2_shift = jnp.zeros((1, hidden_size))
    # new_last_layer: Linear(hidden + 9 + 1 + 3 + 2 + 2 = hidden + 17 -> 3), default init.
    n_extra = n_urls + n_feats
    bound_l = 1.0 / (hidden_size + n_extra) ** 0.5
    w2 = jax.random.uniform(keys[5], (hidden_size + n_extra, 3),
                            minval=-bound_l, maxval=bound_l)
    b2 = jax.random.uniform(keys[6], (1, 3), minval=-bound_l, maxval=bound_l)

    # ---- lane-padded kernel layouts (built once on the host, P=64 -> PP=128) ----
    wk_flat = jnp.zeros((bert_hidden, k_taps * PP), jnp.float32)
    for j in range(k_taps):
        wk_flat = wk_flat.at[:, j * PP:j * PP + proj_dim].set(w_conv[j])
    b_conv_pad = jnp.zeros((1, PP), jnp.float32).at[:, :proj_dim].set(b_conv)
    w_att_pad = jnp.zeros((PP, 1), jnp.float32).at[:proj_dim, :].set(w_att)
    bn1_scale_pad = jnp.ones((n_spans, PP), jnp.float32)
    bn1_shift_pad = jnp.zeros((n_spans, PP), jnp.float32)
    w1_pad = jnp.zeros((n_spans, PP, hidden_size), jnp.float32)
    for n in range(n_spans):
        sl = slice(n * proj_dim, (n + 1) * proj_dim)
        bn1_scale_pad = bn1_scale_pad.at[n, :proj_dim].set(bn1_scale[0, sl])
        bn1_shift_pad = bn1_shift_pad.at[n, :proj_dim].set(bn1_shift[0, sl])
        w1_pad = w1_pad.at[n, :proj_dim, :].set(w1[sl, :])

    return dict(
        # original layouts (used by the pure-JAX reference)
        w_conv=w_conv, b_conv=b_conv, w_att=w_att, b_att=b_att,
        bn1_scale=bn1_scale, bn1_shift=bn1_shift, w1=w1, b1=b1,
        bn2_scale=bn2_scale, bn2_shift=bn2_shift, w2_full=w2, b2=b2,
        w2a=w2[:hidden_size], w2b=w2[hidden_size:hidden_size + n_urls],
        w2c=w2[hidden_size + n_urls:],
        # lane-padded layouts (used by the fused kernel)
        wk_flat=wk_flat, b_conv_pad=b_conv_pad, w_att_pad=w_att_pad,
        bn1_scale_pad=bn1_scale_pad, bn1_shift_pad=bn1_shift_pad, w1_pad=w1_pad,
    )


if __name__ == "__main__":
    B, S = 2, 16
    BERT_HIDDEN = 768          # bert-base-*
    CNN_CONTEXT = 1            # k = 3
    PROJ_DIM = 64
    HIDDEN = 32

    key = jax.random.PRNGKey(0)
    k_bert, k_urls, k_feats, k_params = jax.random.split(key, 4)

    # Stand-in for bert_outputs[layer] (see TODO above).
    bert_outputs = 0.5 * jax.random.normal(k_bert, (B, S, BERT_HIDDEN), jnp.float32)
    # 3 (start, end) spans per example, inclusive indices into the sequence.
    offsets = jnp.array([[[1, 3], [5, 5], [7, 10]],
                         [[0, 2], [4, 8], [12, 15]]], dtype=jnp.int32)
    in_urls = (jax.random.uniform(k_urls, (B, 3)) > 0.5).astype(jnp.float32)
    other_feats = jax.random.normal(k_feats, (B, 14), jnp.float32)

    params = make_params(k_params, BERT_HIDDEN, CNN_CONTEXT, PROJ_DIM, HIDDEN)

    out = gap_head_forward(bert_outputs, offsets, in_urls, other_feats, params, CNN_CONTEXT)
    out = jax.block_until_ready(out)

    ref = gap_head_reference(bert_outputs, offsets, in_urls, other_feats, params, CNN_CONTEXT)
    assert out.shape == (B, 3)
    assert jnp.allclose(out, ref, rtol=1e-4, atol=1e-4), (out, ref)
    print("KERNEL_OK")
</pallas_src>

<mosaic_0001>
module attributes {stable_mosaic.version = 11 : i64} {
  func.func @gap_head_kernel(%arg0: i32, %arg1: memref<2x6xi32, #tpu.memory_space<smem>>, %arg2: memref<2x16x768xf32, #tpu.memory_space<vmem>>, %arg3: memref<768x384xf32, #tpu.memory_space<vmem>>, %arg4: memref<1x128xf32, #tpu.memory_space<vmem>>, %arg5: memref<128x1xf32, #tpu.memory_space<vmem>>, %arg6: memref<1x1xf32, #tpu.memory_space<vmem>>, %arg7: memref<3x128xf32, #tpu.memory_space<vmem>>, %arg8: memref<3x128xf32, #tpu.memory_space<vmem>>, %arg9: memref<3x128x32xf32, #tpu.memory_space<vmem>>, %arg10: memref<1x32xf32, #tpu.memory_space<vmem>>, %arg11: memref<1x32xf32, #tpu.memory_space<vmem>>, %arg12: memref<1x32xf32, #tpu.memory_space<vmem>>, %arg13: memref<32x3xf32, #tpu.memory_space<vmem>>, %arg14: memref<3x3xf32, #tpu.memory_space<vmem>>, %arg15: memref<14x3xf32, #tpu.memory_space<vmem>>, %arg16: memref<1x3xf32, #tpu.memory_space<vmem>>, %arg17: memref<2x3xf32, #tpu.memory_space<vmem>>, %arg18: memref<2x14xf32, #tpu.memory_space<vmem>>, %arg19: memref<2x3xf32, #tpu.memory_space<vmem>>) attributes {dimension_semantics = [#tpu.dimension_semantics<arbitrary>], iteration_bounds = array<i64: 1>, scalar_prefetch = 1 : i64, scratch_operands = 0 : i64, tpu.core_type = #tpu.core_type<tc>, window_params = [{pipeline_mode = #tpu.pipeline_mode<synchronous>, transform_indices = @transform_0, window_bounds = array<i64: 2, 16, 768>}, {pipeline_mode = #tpu.pipeline_mode<synchronous>, transform_indices = @transform_1, window_bounds = array<i64: 768, 384>}, {pipeline_mode = #tpu.pipeline_mode<synchronous>, transform_indices = @transform_2, window_bounds = array<i64: 1, 128>}, {pipeline_mode = #tpu.pipeline_mode<synchronous>, transform_indices = @transform_3, window_bounds = array<i64: 128, 1>}, {pipeline_mode = #tpu.pipeline_mode<synchronous>, transform_indices = @transform_4, window_bounds = array<i64: 1, 1>}, {pipeline_mode = #tpu.pipeline_mode<synchronous>, transform_indices = @transform_5, window_bounds = array<i64: 3, 128>}, {pipeline_mode = #tpu.pipeline_mode<synchronous>, transform_indices = @transform_6, window_bounds = array<i64: 3, 128>}, {pipeline_mode = #tpu.pipeline_mode<synchronous>, transform_indices = @transform_7, window_bounds = array<i64: 3, 128, 32>}, {pipeline_mode = #tpu.pipeline_mode<synchronous>, transform_indices = @transform_8, window_bounds = array<i64: 1, 32>}, {pipeline_mode = #tpu.pipeline_mode<synchronous>, transform_indices = @transform_9, window_bounds = array<i64: 1, 32>}, {pipeline_mode = #tpu.pipeline_mode<synchronous>, transform_indices = @transform_10, window_bounds = array<i64: 1, 32>}, {pipeline_mode = #tpu.pipeline_mode<synchronous>, transform_indices = @transform_11, window_bounds = array<i64: 32, 3>}, {pipeline_mode = #tpu.pipeline_mode<synchronous>, transform_indices = @transform_12, window_bounds = array<i64: 3, 3>}, {pipeline_mode = #tpu.pipeline_mode<synchronous>, transform_indices = @transform_13, window_bounds = array<i64: 14, 3>}, {pipeline_mode = #tpu.pipeline_mode<synchronous>, transform_indices = @transform_14, window_bounds = array<i64: 1, 3>}, {pipeline_mode = #tpu.pipeline_mode<synchronous>, transform_indices = @transform_15, window_bounds = array<i64: 2, 3>}, {pipeline_mode = #tpu.pipeline_mode<synchronous>, transform_indices = @transform_16, window_bounds = array<i64: 2, 14>}, {pipeline_mode = #tpu.pipeline_mode<synchronous>, transform_indices = @transform_17, window_bounds = array<i64: 2, 3>}]} {
    %c0 = arith.constant 0 : index
    %c0_0 = arith.constant 0 : index
    %0 = vector.load %arg3[%c0, %c0_0] : memref<768x384xf32, #tpu.memory_space<vmem>>, vector<768x384xf32>
    %c0_1 = arith.constant 0 : index
    %c0_2 = arith.constant 0 : index
    %1 = vector.load %arg4[%c0_1, %c0_2] : memref<1x128xf32, #tpu.memory_space<vmem>>, vector<1x128xf32>
    %c0_3 = arith.constant 0 : index
    %c0_4 = arith.constant 0 : index
    %2 = vector.load %arg5[%c0_3, %c0_4] : memref<128x1xf32, #tpu.memory_space<vmem>>, vector<128x1xf32>
    %c0_5 = arith.constant 0 : index
    %c0_6 = arith.constant 0 : index
    %3 = vector.load %arg6[%c0_5, %c0_6] : memref<1x1xf32, #tpu.memory_space<vmem>>, vector<1x1xf32>
    %c0_7 = arith.constant 0 : index
    %c0_8 = arith.constant 0 : index
    %4 = vector.load %arg7[%c0_7, %c0_8] : memref<3x128xf32, #tpu.memory_space<vmem>>, vector<3x128xf32>
    %c0_9 = arith.constant 0 : index
    %c0_10 = arith.constant 0 : index
    %5 = vector.load %arg8[%c0_9, %c0_10] : memref<3x128xf32, #tpu.memory_space<vmem>>, vector<3x128xf32>
    %c0_11 = arith.constant 0 : index
    %c0_12 = arith.constant 0 : index
    %c0_13 = arith.constant 0 : index
    %6 = vector.load %arg9[%c0_11, %c0_12, %c0_13] : memref<3x128x32xf32, #tpu.memory_space<vmem>>, vector<3x128x32xf32>
    %c0_14 = arith.constant 0 : index
    %c0_15 = arith.constant 0 : index
    %7 = vector.load %arg10[%c0_14, %c0_15] : memref<1x32xf32, #tpu.memory_space<vmem>>, vector<1x32xf32>
    %c0_16 = arith.constant 0 : index
    %c0_17 = arith.constant 0 : index
    %8 = vector.load %arg11[%c0_16, %c0_17] : memref<1x32xf32, #tpu.memory_space<vmem>>, vector<1x32xf32>
    %c0_18 = arith.constant 0 : index
    %c0_19 = arith.constant 0 : index
    %9 = vector.load %arg12[%c0_18, %c0_19] : memref<1x32xf32, #tpu.memory_space<vmem>>, vector<1x32xf32>
    %c0_20 = arith.constant 0 : index
    %c0_21 = arith.constant 0 : index
    %10 = vector.load %arg13[%c0_20, %c0_21] : memref<32x3xf32, #tpu.memory_space<vmem>>, vector<32x3xf32>
    %c0_22 = arith.constant 0 : index
    %c0_23 = arith.constant 0 : index
    %11 = vector.load %arg14[%c0_22, %c0_23] : memref<3x3xf32, #tpu.memory_space<vmem>>, vector<3x3xf32>
    %c0_24 = arith.constant 0 : index
    %c0_25 = arith.constant 0 : index
    %12 = vector.load %arg15[%c0_24, %c0_25] : memref<14x3xf32, #tpu.memory_space<vmem>>, vector<14x3xf32>
    %c0_26 = arith.constant 0 : index
    %c0_27 = arith.constant 0 : index
    %13 = vector.load %arg16[%c0_26, %c0_27] : memref<1x3xf32, #tpu.memory_space<vmem>>, vector<1x3xf32>
    %c0_28 = arith.constant 0 : index
    %c0_29 = arith.constant 0 : index
    %14 = vector.load %arg17[%c0_28, %c0_29] : memref<2x3xf32, #tpu.memory_space<vmem>>, vector<2x3xf32>
    %c0_30 = arith.constant 0 : index
    %c0_31 = arith.constant 0 : index
    %15 = vector.load %arg18[%c0_30, %c0_31] : memref<2x14xf32, #tpu.memory_space<vmem>>, vector<2x14xf32>
    %16 = tpu.iota {dimensions = array<i32: 0>} : vector<16x1xi32>
    %c0_32 = arith.constant 0 : index
    %c0_33 = arith.constant 0 : index
    %c0_34 = arith.constant 0 : index
    %17 = vector.load %arg2[%c0_32, %c0_33, %c0_34] : memref<2x16x768xf32, #tpu.memory_space<vmem>>, vector<1x16x768xf32>
    %18 = vector.shape_cast %17 : vector<1x16x768xf32> to vector<16x768xf32>
    %cst = arith.constant dense<0.000000e+00> : vector<16x384xf32>
    %19 = tpu.matmul %18, %0, %cst {dimension_numbers = #tpu.dot_dimension_numbers<[1], [0], [0], [1], [0, 0, 1, 1], [], []>} : vector<16x768xf32>, vector<768x384xf32>, vector<16x384xf32> -> vector<16x384xf32>
    %20 = vector.extract_strided_slice %19 {offsets = [0, 0], sizes = [16, 128], strides = [1, 1]} : vector<16x384xf32> to vector<16x128xf32>
    %c1_i32 = arith.constant 1 : i32
    %21 = tpu.dynamic_rotate %20 by %c1_i32 dim 0 : vector<16x128xf32>, i32 -> vector<16x128xf32>
    %c-1_i32 = arith.constant -1 : i32
    %22 = vector.broadcast %c-1_i32 : i32 to vector<16x1xi32>
    %23 = arith.addi %16, %22 : vector<16x1xi32>
    %c0_i32 = arith.constant 0 : i32
    %24 = vector.broadcast %c0_i32 : i32 to vector<16x1xi32>
    %25 = arith.cmpi sge, %23, %24 : vector<16x1xi32>
    %c-1_i32_35 = arith.constant -1 : i32
    %26 = vector.broadcast %c-1_i32_35 : i32 to vector<16x1xi32>
    %27 = arith.addi %16, %26 : vector<16x1xi32>
    %c16_i32 = arith.constant 16 : i32
    %28 = vector.broadcast %c16_i32 : i32 to vector<16x1xi32>
    %29 = arith.cmpi slt, %27, %28 : vector<16x1xi32>
    %30 = arith.andi %25, %29 : vector<16x1xi1>
    %cst_36 = arith.constant 0.000000e+00 : f32
    %31 = vector.shape_cast %30 : vector<16x1xi1> to vector<16x1xi1>
    %32 = vector.broadcast %31 : vector<16x1xi1> to vector<16x128xi1>
    %33 = vector.broadcast %cst_36 : f32 to vector<16x128xf32>
    %34 = arith.select %32, %21, %33 : vector<16x128xi1>, vector<16x128xf32>
    %35 = vector.extract_strided_slice %19 {offsets = [0, 128], sizes = [16, 128], strides = [1, 1]} : vector<16x384xf32> to vector<16x128xf32>
    %36 = arith.addf %34, %35 : vector<16x128xf32>
    %37 = vector.extract_strided_slice %19 {offsets = [0, 256], sizes = [16, 128], strides = [1, 1]} : vector<16x384xf32> to vector<16x128xf32>
    %c15_i32 = arith.constant 15 : i32
    %38 = tpu.dynamic_rotate %37 by %c15_i32 dim 0 : vector<16x128xf32>, i32 -> vector<16x128xf32>
    %c1_i32_37 = arith.constant 1 : i32
    %39 = vector.broadcast %c1_i32_37 : i32 to vector<16x1xi32>
    %40 = arith.addi %16, %39 : vector<16x1xi32>
    %c0_i32_38 = arith.constant 0 : i32
    %41 = vector.broadcast %c0_i32_38 : i32 to vector<16x1xi32>
    %42 = arith.cmpi sge, %40, %41 : vector<16x1xi32>
    %c1_i32_39 = arith.constant 1 : i32
    %43 = vector.broadcast %c1_i32_39 : i32 to vector<16x1xi32>
    %44 = arith.addi %16, %43 : vector<16x1xi32>
    %c16_i32_40 = arith.constant 16 : i32
    %45 = vector.broadcast %c16_i32_40 : i32 to vector<16x1xi32>
    %46 = arith.cmpi slt, %44, %45 : vector<16x1xi32>
    %47 = arith.andi %42, %46 : vector<16x1xi1>
    %cst_41 = arith.constant 0.000000e+00 : f32
    %48 = vector.shape_cast %47 : vector<16x1xi1> to vector<16x1xi1>
    %49 = vector.broadcast %48 : vector<16x1xi1> to vector<16x128xi1>
    %50 = vector.broadcast %cst_41 : f32 to vector<16x128xf32>
    %51 = arith.select %49, %38, %50 : vector<16x128xi1>, vector<16x128xf32>
    %52 = arith.addf %36, %51 : vector<16x128xf32>
    %53 = vector.broadcast %1 : vector<1x128xf32> to vector<16x128xf32>
    %54 = arith.addf %52, %53 : vector<16x128xf32>
    %cst_42 = arith.constant dense<0.000000e+00> : vector<16x1xf32>
    %55 = tpu.matmul %54, %2, %cst_42 {dimension_numbers = #tpu.dot_dimension_numbers<[1], [0], [0], [1], [0, 0, 1, 1], [], []>} : vector<16x128xf32>, vector<128x1xf32>, vector<16x1xf32> -> vector<16x1xf32>
    %56 = vector.broadcast %3 : vector<1x1xf32> to vector<16x1xf32>
    %57 = arith.addf %55, %56 : vector<16x1xf32>
    %c0_43 = arith.constant 0 : index
    %c0_44 = arith.constant 0 : index
    %58 = memref.load %arg1[%c0_43, %c0_44] : memref<2x6xi32, #tpu.memory_space<smem>>
    %c0_45 = arith.constant 0 : index
    %c1 = arith.constant 1 : index
    %59 = memref.load %arg1[%c0_45, %c1] : memref<2x6xi32, #tpu.memory_space<smem>>
    %60 = vector.broadcast %58 : i32 to vector<16x1xi32>
    %61 = arith.cmpi sge, %16, %60 : vector<16x1xi32>
    %62 = vector.broadcast %59 : i32 to vector<16x1xi32>
    %63 = arith.cmpi sle, %16, %62 : vector<16x1xi32>
    %64 = arith.andi %61, %63 : vector<16x1xi1>
    %65 = arith.extui %64 : vector<16x1xi1> to vector<16x1xi32>
    %66 = arith.sitofp %65 : vector<16x1xi32> to vector<16x1xf32>
    %67 = arith.mulf %57, %66 : vector<16x1xf32>
    %cst_46 = arith.constant dense<0xFF800000> : vector<1xf32>
    %68 = vector.multi_reduction <maximumf>, %67, %cst_46 [0] : vector<16x1xf32> to vector<1xf32>
    %69 = vector.shape_cast %68 : vector<1xf32> to vector<1x1xf32>
    %70 = vector.broadcast %69 : vector<1x1xf32> to vector<16x1xf32>
    %71 = arith.subf %67, %70 : vector<16x1xf32>
    %72 = math.exp %71 : vector<16x1xf32>
    %cst_47 = arith.constant dense<0.000000e+00> : vector<1xf32>
    %73 = vector.multi_reduction <add>, %72, %cst_47 [0] : vector<16x1xf32> to vector<1xf32>
    %74 = vector.shape_cast %73 : vector<1xf32> to vector<1x1xf32>
    %75 = vector.broadcast %74 : vector<1x1xf32> to vector<16x1xf32>
    %76 = arith.divf %72, %75 : vector<16x1xf32>
    %77 = arith.mulf %76, %66 : vector<16x1xf32>
    %cst_48 = arith.constant dense<0.000000e+00> : vector<1xf32>
    %78 = vector.multi_reduction <add>, %77, %cst_48 [0] : vector<16x1xf32> to vector<1xf32>
    %79 = vector.shape_cast %78 : vector<1xf32> to vector<1x1xf32>
    %cst_49 = arith.constant 9.99999982E-14 : f32
    %80 = vector.broadcast %cst_49 : f32 to vector<1x1xf32>
    %81 = arith.addf %79, %80 : vector<1x1xf32>
    %82 = vector.broadcast %81 : vector<1x1xf32> to vector<16x1xf32>
    %83 = arith.divf %77, %82 : vector<16x1xf32>
    %84 = vector.broadcast %83 : vector<16x1xf32> to vector<16x128xf32>
    %85 = arith.mulf %84, %54 : vector<16x128xf32>
    %cst_50 = arith.constant dense<0.000000e+00> : vector<128xf32>
    %86 = vector.multi_reduction <add>, %85, %cst_50 [0] : vector<16x128xf32> to vector<128xf32>
    %87 = vector.shape_cast %86 : vector<128xf32> to vector<1x128xf32>
    %88 = vector.extract_strided_slice %4 {offsets = [0, 0], sizes = [1, 128], strides = [1, 1]} : vector<3x128xf32> to vector<1x128xf32>
    %89 = arith.mulf %87, %88 : vector<1x128xf32>
    %90 = vector.extract_strided_slice %5 {offsets = [0, 0], sizes = [1, 128], strides = [1, 1]} : vector<3x128xf32> to vector<1x128xf32>
    %91 = arith.addf %89, %90 : vector<1x128xf32>
    %92 = vector.extract_strided_slice %6 {offsets = [0, 0, 0], sizes = [1, 128, 32], strides = [1, 1, 1]} : vector<3x128x32xf32> to vector<1x128x32xf32>
    %93 = vector.shape_cast %92 : vector<1x128x32xf32> to vector<128x32xf32>
    %cst_51 = arith.constant dense<0.000000e+00> : vector<1x32xf32>
    %94 = tpu.matmul %91, %93, %cst_51 {dimension_numbers = #tpu.dot_dimension_numbers<[1], [0], [0], [1], [0, 0, 1, 1], [], []>} : vector<1x128xf32>, vector<128x32xf32>, vector<1x32xf32> -> vector<1x32xf32>
    %95 = arith.addf %7, %94 : vector<1x32xf32>
    %c0_52 = arith.constant 0 : index
    %c2 = arith.constant 2 : index
    %96 = memref.load %arg1[%c0_52, %c2] : memref<2x6xi32, #tpu.memory_space<smem>>
    %c0_53 = arith.constant 0 : index
    %c3 = arith.constant 3 : index
    %97 = memref.load %arg1[%c0_53, %c3] : memref<2x6xi32, #tpu.memory_space<smem>>
    %98 = vector.broadcast %96 : i32 to vector<16x1xi32>
    %99 = arith.cmpi sge, %16, %98 : vector<16x1xi32>
    %100 = vector.broadcast %97 : i32 to vector<16x1xi32>
    %101 = arith.cmpi sle, %16, %100 : vector<16x1xi32>
    %102 = arith.andi %99, %101 : vector<16x1xi1>
    %103 = arith.extui %102 : vector<16x1xi1> to vector<16x1xi32>
    %104 = arith.sitofp %103 : vector<16x1xi32> to vector<16x1xf32>
    %105 = arith.mulf %57, %104 : vector<16x1xf32>
    %cst_54 = arith.constant dense<0xFF800000> : vector<1xf32>
    %106 = vector.multi_reduction <maximumf>, %105, %cst_54 [0] : vector<16x1xf32> to vector<1xf32>
    %107 = vector.shape_cast %106 : vector<1xf32> to vector<1x1xf32>
    %108 = vector.broadcast %107 : vector<1x1xf32> to vector<16x1xf32>
    %109 = arith.subf %105, %108 : vector<16x1xf32>
    %110 = math.exp %109 : vector<16x1xf32>
    %cst_55 = arith.constant dense<0.000000e+00> : vector<1xf32>
    %111 = vector.multi_reduction <add>, %110, %cst_55 [0] : vector<16x1xf32> to vector<1xf32>
    %112 = vector.shape_cast %111 : vector<1xf32> to vector<1x1xf32>
    %113 = vector.broadcast %112 : vector<1x1xf32> to vector<16x1xf32>
    %114 = arith.divf %110, %113 : vector<16x1xf32>
    %115 = arith.mulf %114, %104 : vector<16x1xf32>
    %cst_56 = arith.constant dense<0.000000e+00> : vector<1xf32>
    %116 = vector.multi_reduction <add>, %115, %cst_56 [0] : vector<16x1xf32> to vector<1xf32>
    %117 = vector.shape_cast %116 : vector<1xf32> to vector<1x1xf32>
    %cst_57 = arith.constant 9.99999982E-14 : f32
    %118 = vector.broadcast %cst_57 : f32 to vector<1x1xf32>
    %119 = arith.addf %117, %118 : vector<1x1xf32>
    %120 = vector.broadcast %119 : vector<1x1xf32> to vector<16x1xf32>
    %121 = arith.divf %115, %120 : vector<16x1xf32>
    %122 = vector.broadcast %121 : vector<16x1xf32> to vector<16x128xf32>
    %123 = arith.mulf %122, %54 : vector<16x128xf32>
    %cst_58 = arith.constant dense<0.000000e+00> : vector<128xf32>
    %124 = vector.multi_reduction <add>, %123, %cst_58 [0] : vector<16x128xf32> to vector<128xf32>
    %125 = vector.shape_cast %124 : vector<128xf32> to vector<1x128xf32>
    %126 = vector.extract_strided_slice %4 {offsets = [1, 0], sizes = [1, 128], strides = [1, 1]} : vector<3x128xf32> to vector<1x128xf32>
    %127 = arith.mulf %125, %126 : vector<1x128xf32>
    %128 = vector.extract_strided_slice %5 {offsets = [1, 0], sizes = [1, 128], strides = [1, 1]} : vector<3x128xf32> to vector<1x128xf32>
    %129 = arith.addf %127, %128 : vector<1x128xf32>
    %130 = vector.extract_strided_slice %6 {offsets = [1, 0, 0], sizes = [1, 128, 32], strides = [1, 1, 1]} : vector<3x128x32xf32> to vector<1x128x32xf32>
    %131 = vector.shape_cast %130 : vector<1x128x32xf32> to vector<128x32xf32>
    %cst_59 = arith.constant dense<0.000000e+00> : vector<1x32xf32>
    %132 = tpu.matmul %129, %131, %cst_59 {dimension_numbers = #tpu.dot_dimension_numbers<[1], [0], [0], [1], [0, 0, 1, 1], [], []>} : vector<1x128xf32>, vector<128x32xf32>, vector<1x32xf32> -> vector<1x32xf32>
    %133 = arith.addf %95, %132 : vector<1x32xf32>
    %c0_60 = arith.constant 0 : index
    %c4 = arith.constant 4 : index
    %134 = memref.load %arg1[%c0_60, %c4] : memref<2x6xi32, #tpu.memory_space<smem>>
    %c0_61 = arith.constant 0 : index
    %c5 = arith.constant 5 : index
    %135 = memref.load %arg1[%c0_61, %c5] : memref<2x6xi32, #tpu.memory_space<smem>>
    %136 = vector.broadcast %134 : i32 to vector<16x1xi32>
    %137 = arith.cmpi sge, %16, %136 : vector<16x1xi32>
    %138 = vector.broadcast %135 : i32 to vector<16x1xi32>
    %139 = arith.cmpi sle, %16, %138 : vector<16x1xi32>
    %140 = arith.andi %137, %139 : vector<16x1xi1>
    %141 = arith.extui %140 : vector<16x1xi1> to vector<16x1xi32>
    %142 = arith.sitofp %141 : vector<16x1xi32> to vector<16x1xf32>
    %143 = arith.mulf %57, %142 : vector<16x1xf32>
    %cst_62 = arith.constant dense<0xFF800000> : vector<1xf32>
    %144 = vector.multi_reduction <maximumf>, %143, %cst_62 [0] : vector<16x1xf32> to vector<1xf32>
    %145 = vector.shape_cast %144 : vector<1xf32> to vector<1x1xf32>
    %146 = vector.broadcast %145 : vector<1x1xf32> to vector<16x1xf32>
    %147 = arith.subf %143, %146 : vector<16x1xf32>
    %148 = math.exp %147 : vector<16x1xf32>
    %cst_63 = arith.constant dense<0.000000e+00> : vector<1xf32>
    %149 = vector.multi_reduction <add>, %148, %cst_63 [0] : vector<16x1xf32> to vector<1xf32>
    %150 = vector.shape_cast %149 : vector<1xf32> to vector<1x1xf32>
    %151 = vector.broadcast %150 : vector<1x1xf32> to vector<16x1xf32>
    %152 = arith.divf %148, %151 : vector<16x1xf32>
    %153 = arith.mulf %152, %142 : vector<16x1xf32>
    %cst_64 = arith.constant dense<0.000000e+00> : vector<1xf32>
    %154 = vector.multi_reduction <add>, %153, %cst_64 [0] : vector<16x1xf32> to vector<1xf32>
    %155 = vector.shape_cast %154 : vector<1xf32> to vector<1x1xf32>
    %cst_65 = arith.constant 9.99999982E-14 : f32
    %156 = vector.broadcast %cst_65 : f32 to vector<1x1xf32>
    %157 = arith.addf %155, %156 : vector<1x1xf32>
    %158 = vector.broadcast %157 : vector<1x1xf32> to vector<16x1xf32>
    %159 = arith.divf %153, %158 : vector<16x1xf32>
    %160 = vector.broadcast %159 : vector<16x1xf32> to vector<16x128xf32>
    %161 = arith.mulf %160, %54 : vector<16x128xf32>
    %cst_66 = arith.constant dense<0.000000e+00> : vector<128xf32>
    %162 = vector.multi_reduction <add>, %161, %cst_66 [0] : vector<16x128xf32> to vector<128xf32>
    %163 = vector.shape_cast %162 : vector<128xf32> to vector<1x128xf32>
    %164 = vector.extract_strided_slice %4 {offsets = [2, 0], sizes = [1, 128], strides = [1, 1]} : vector<3x128xf32> to vector<1x128xf32>
    %165 = arith.mulf %163, %164 : vector<1x128xf32>
    %166 = vector.extract_strided_slice %5 {offsets = [2, 0], sizes = [1, 128], strides = [1, 1]} : vector<3x128xf32> to vector<1x128xf32>
    %167 = arith.addf %165, %166 : vector<1x128xf32>
    %168 = vector.extract_strided_slice %6 {offsets = [2, 0, 0], sizes = [1, 128, 32], strides = [1, 1, 1]} : vector<3x128x32xf32> to vector<1x128x32xf32>
    %169 = vector.shape_cast %168 : vector<1x128x32xf32> to vector<128x32xf32>
    %cst_67 = arith.constant dense<0.000000e+00> : vector<1x32xf32>
    %170 = tpu.matmul %167, %169, %cst_67 {dimension_numbers = #tpu.dot_dimension_numbers<[1], [0], [0], [1], [0, 0, 1, 1], [], []>} : vector<1x128xf32>, vector<128x32xf32>, vector<1x32xf32> -> vector<1x32xf32>
    %171 = arith.addf %133, %170 : vector<1x32xf32>
    %cst_68 = arith.constant 0.000000e+00 : f32
    %172 = vector.broadcast %cst_68 : f32 to vector<1x32xf32>
    %173 = arith.maximumf %171, %172 : vector<1x32xf32>
    %174 = arith.mulf %173, %8 : vector<1x32xf32>
    %175 = arith.addf %174, %9 : vector<1x32xf32>
    %cst_69 = arith.constant dense<0.000000e+00> : vector<1x3xf32>
    %176 = tpu.matmul %175, %10, %cst_69 {dimension_numbers = #tpu.dot_dimension_numbers<[1], [0], [0], [1], [0, 0, 1, 1], [], []>} : vector<1x32xf32>, vector<32x3xf32>, vector<1x3xf32> -> vector<1x3xf32>
    %177 = vector.extract_strided_slice %14 {offsets = [0, 0], sizes = [1, 3], strides = [1, 1]} : vector<2x3xf32> to vector<1x3xf32>
    %cst_70 = arith.constant dense<0.000000e+00> : vector<1x3xf32>
    %178 = tpu.matmul %177, %11, %cst_70 {dimension_numbers = #tpu.dot_dimension_numbers<[1], [0], [0], [1], [0, 0, 1, 1], [], []>} : vector<1x3xf32>, vector<3x3xf32>, vector<1x3xf32> -> vector<1x3xf32>
    %179 = arith.addf %176, %178 : vector<1x3xf32>
    %180 = vector.extract_strided_slice %15 {offsets = [0, 0], sizes = [1, 14], strides = [1, 1]} : vector<2x14xf32> to vector<1x14xf32>
    %cst_71 = arith.constant dense<0.000000e+00> : vector<1x3xf32>
    %181 = tpu.matmul %180, %12, %cst_71 {dimension_numbers = #tpu.dot_dimension_numbers<[1], [0], [0], [1], [0, 0, 1, 1], [], []>} : vector<1x14xf32>, vector<14x3xf32>, vector<1x3xf32> -> vector<1x3xf32>
    %182 = arith.addf %179, %181 : vector<1x3xf32>
    %183 = arith.addf %182, %13 : vector<1x3xf32>
    %c0_72 = arith.constant 0 : index
    %c0_73 = arith.constant 0 : index
    %184 = vector.load %arg19[%c0_72, %c0_73] : memref<2x3xf32, #tpu.memory_space<vmem>>, vector<1x3xf32>
    tpu.vector_store %arg19[%c0_72, %c0_73], %183 {strides = array<i32>} : memref<2x3xf32, #tpu.memory_space<vmem>>, vector<1x3xf32>,
    %c1_74 = arith.constant 1 : index
    %c0_75 = arith.constant 0 : index
    %c0_76 = arith.constant 0 : index
    %185 = vector.load %arg2[%c1_74, %c0_75, %c0_76] : memref<2x16x768xf32, #tpu.memory_space<vmem>>, vector<1x16x768xf32>
    %186 = vector.shape_cast %185 : vector<1x16x768xf32> to vector<16x768xf32>
    %cst_77 = arith.constant dense<0.000000e+00> : vector<16x384xf32>
    %187 = tpu.matmul %186, %0, %cst_77 {dimension_numbers = #tpu.dot_dimension_numbers<[1], [0], [0], [1], [0, 0, 1, 1], [], []>} : vector<16x768xf32>, vector<768x384xf32>, vector<16x384xf32> -> vector<16x384xf32>
    %188 = vector.extract_strided_slice %187 {offsets = [0, 0], sizes = [16, 128], strides = [1, 1]} : vector<16x384xf32> to vector<16x128xf32>
    %c1_i32_78 = arith.constant 1 : i32
    %189 = tpu.dynamic_rotate %188 by %c1_i32_78 dim 0 : vector<16x128xf32>, i32 -> vector<16x128xf32>
    %c-1_i32_79 = arith.constant -1 : i32
    %190 = vector.broadcast %c-1_i32_79 : i32 to vector<16x1xi32>
    %191 = arith.addi %16, %190 : vector<16x1xi32>
    %c0_i32_80 = arith.constant 0 : i32
    %192 = vector.broadcast %c0_i32_80 : i32 to vector<16x1xi32>
    %193 = arith.cmpi sge, %191, %192 : vector<16x1xi32>
    %c-1_i32_81 = arith.constant -1 : i32
    %194 = vector.broadcast %c-1_i32_81 : i32 to vector<16x1xi32>
    %195 = arith.addi %16, %194 : vector<16x1xi32>
    %c16_i32_82 = arith.constant 16 : i32
    %196 = vector.broadcast %c16_i32_82 : i32 to vector<16x1xi32>
    %197 = arith.cmpi slt, %195, %196 : vector<16x1xi32>
    %198 = arith.andi %193, %197 : vector<16x1xi1>
    %cst_83 = arith.constant 0.000000e+00 : f32
    %199 = vector.shape_cast %198 : vector<16x1xi1> to vector<16x1xi1>
    %200 = vector.broadcast %199 : vector<16x1xi1> to vector<16x128xi1>
    %201 = vector.broadcast %cst_83 : f32 to vector<16x128xf32>
    %202 = arith.select %200, %189, %201 : vector<16x128xi1>, vector<16x128xf32>
    %203 = vector.extract_strided_slice %187 {offsets = [0, 128], sizes = [16, 128], strides = [1, 1]} : vector<16x384xf32> to vector<16x128xf32>
    %204 = arith.addf %202, %203 : vector<16x128xf32>
    %205 = vector.extract_strided_slice %187 {offsets = [0, 256], sizes = [16, 128], strides = [1, 1]} : vector<16x384xf32> to vector<16x128xf32>
    %c15_i32_84 = arith.constant 15 : i32
    %206 = tpu.dynamic_rotate %205 by %c15_i32_84 dim 0 : vector<16x128xf32>, i32 -> vector<16x128xf32>
    %c1_i32_85 = arith.constant 1 : i32
    %207 = vector.broadcast %c1_i32_85 : i32 to vector<16x1xi32>
    %208 = arith.addi %16, %207 : vector<16x1xi32>
    %c0_i32_86 = arith.constant 0 : i32
    %209 = vector.broadcast %c0_i32_86 : i32 to vector<16x1xi32>
    %210 = arith.cmpi sge, %208, %209 : vector<16x1xi32>
    %c1_i32_87 = arith.constant 1 : i32
    %211 = vector.broadcast %c1_i32_87 : i32 to vector<16x1xi32>
    %212 = arith.addi %16, %211 : vector<16x1xi32>
    %c16_i32_88 = arith.constant 16 : i32
    %213 = vector.broadcast %c16_i32_88 : i32 to vector<16x1xi32>
    %214 = arith.cmpi slt, %212, %213 : vector<16x1xi32>
    %215 = arith.andi %210, %214 : vector<16x1xi1>
    %cst_89 = arith.constant 0.000000e+00 : f32
    %216 = vector.shape_cast %215 : vector<16x1xi1> to vector<16x1xi1>
    %217 = vector.broadcast %216 : vector<16x1xi1> to vector<16x128xi1>
    %218 = vector.broadcast %cst_89 : f32 to vector<16x128xf32>
    %219 = arith.select %217, %206, %218 : vector<16x128xi1>, vector<16x128xf32>
    %220 = arith.addf %204, %219 : vector<16x128xf32>
    %221 = vector.broadcast %1 : vector<1x128xf32> to vector<16x128xf32>
    %222 = arith.addf %220, %221 : vector<16x128xf32>
    %cst_90 = arith.constant dense<0.000000e+00> : vector<16x1xf32>
    %223 = tpu.matmul %222, %2, %cst_90 {dimension_numbers = #tpu.dot_dimension_numbers<[1], [0], [0], [1], [0, 0, 1, 1], [], []>} : vector<16x128xf32>, vector<128x1xf32>, vector<16x1xf32> -> vector<16x1xf32>
    %224 = vector.broadcast %3 : vector<1x1xf32> to vector<16x1xf32>
    %225 = arith.addf %223, %224 : vector<16x1xf32>
    %c1_91 = arith.constant 1 : index
    %c0_92 = arith.constant 0 : index
    %226 = memref.load %arg1[%c1_91, %c0_92] : memref<2x6xi32, #tpu.memory_space<smem>>
    %c1_93 = arith.constant 1 : index
    %c1_94 = arith.constant 1 : index
    %227 = memref.load %arg1[%c1_93, %c1_94] : memref<2x6xi32, #tpu.memory_space<smem>>
    %228 = vector.broadcast %226 : i32 to vector<16x1xi32>
    %229 = arith.cmpi sge, %16, %228 : vector<16x1xi32>
    %230 = vector.broadcast %227 : i32 to vector<16x1xi32>
    %231 = arith.cmpi sle, %16, %230 : vector<16x1xi32>
    %232 = arith.andi %229, %231 : vector<16x1xi1>
    %233 = arith.extui %232 : vector<16x1xi1> to vector<16x1xi32>
    %234 = arith.sitofp %233 : vector<16x1xi32> to vector<16x1xf32>
    %235 = arith.mulf %225, %234 : vector<16x1xf32>
    %cst_95 = arith.constant dense<0xFF800000> : vector<1xf32>
    %236 = vector.multi_reduction <maximumf>, %235, %cst_95 [0] : vector<16x1xf32> to vector<1xf32>
    %237 = vector.shape_cast %236 : vector<1xf32> to vector<1x1xf32>
    %238 = vector.broadcast %237 : vector<1x1xf32> to vector<16x1xf32>
    %239 = arith.subf %235, %238 : vector<16x1xf32>
    %240 = math.exp %239 : vector<16x1xf32>
    %cst_96 = arith.constant dense<0.000000e+00> : vector<1xf32>
    %241 = vector.multi_reduction <add>, %240, %cst_96 [0] : vector<16x1xf32> to vector<1xf32>
    %242 = vector.shape_cast %241 : vector<1xf32> to vector<1x1xf32>
    %243 = vector.broadcast %242 : vector<1x1xf32> to vector<16x1xf32>
    %244 = arith.divf %240, %243 : vector<16x1xf32>
    %245 = arith.mulf %244, %234 : vector<16x1xf32>
    %cst_97 = arith.constant dense<0.000000e+00> : vector<1xf32>
    %246 = vector.multi_reduction <add>, %245, %cst_97 [0] : vector<16x1xf32> to vector<1xf32>
    %247 = vector.shape_cast %246 : vector<1xf32> to vector<1x1xf32>
    %cst_98 = arith.constant 9.99999982E-14 : f32
    %248 = vector.broadcast %cst_98 : f32 to vector<1x1xf32>
    %249 = arith.addf %247, %248 : vector<1x1xf32>
    %250 = vector.broadcast %249 : vector<1x1xf32> to vector<16x1xf32>
    %251 = arith.divf %245, %250 : vector<16x1xf32>
    %252 = vector.broadcast %251 : vector<16x1xf32> to vector<16x128xf32>
    %253 = arith.mulf %252, %222 : vector<16x128xf32>
    %cst_99 = arith.constant dense<0.000000e+00> : vector<128xf32>
    %254 = vector.multi_reduction <add>, %253, %cst_99 [0] : vector<16x128xf32> to vector<128xf32>
    %255 = vector.shape_cast %254 : vector<128xf32> to vector<1x128xf32>
    %256 = vector.extract_strided_slice %4 {offsets = [0, 0], sizes = [1, 128], strides = [1, 1]} : vector<3x128xf32> to vector<1x128xf32>
    %257 = arith.mulf %255, %256 : vector<1x128xf32>
    %258 = vector.extract_strided_slice %5 {offsets = [0, 0], sizes = [1, 128], strides = [1, 1]} : vector<3x128xf32> to vector<1x128xf32>
    %259 = arith.addf %257, %258 : vector<1x128xf32>
    %260 = vector.extract_strided_slice %6 {offsets = [0, 0, 0], sizes = [1, 128, 32], strides = [1, 1, 1]} : vector<3x128x32xf32> to vector<1x128x32xf32>
    %261 = vector.shape_cast %260 : vector<1x128x32xf32> to vector<128x32xf32>
    %cst_100 = arith.constant dense<0.000000e+00> : vector<1x32xf32>
    %262 = tpu.matmul %259, %261, %cst_100 {dimension_numbers = #tpu.dot_dimension_numbers<[1], [0], [0], [1], [0, 0, 1, 1], [], []>} : vector<1x128xf32>, vector<128x32xf32>, vector<1x32xf32> -> vector<1x32xf32>
    %263 = arith.addf %7, %262 : vector<1x32xf32>
    %c1_101 = arith.constant 1 : index
    %c2_102 = arith.constant 2 : index
    %264 = memref.load %arg1[%c1_101, %c2_102] : memref<2x6xi32, #tpu.memory_space<smem>>
    %c1_103 = arith.constant 1 : index
    %c3_104 = arith.constant 3 : index
    %265 = memref.load %arg1[%c1_103, %c3_104] : memref<2x6xi32, #tpu.memory_space<smem>>
    %266 = vector.broadcast %264 : i32 to vector<16x1xi32>
    %267 = arith.cmpi sge, %16, %266 : vector<16x1xi32>
    %268 = vector.broadcast %265 : i32 to vector<16x1xi32>
    %269 = arith.cmpi sle, %16, %268 : vector<16x1xi32>
    %270 = arith.andi %267, %269 : vector<16x1xi1>
    %271 = arith.extui %270 : vector<16x1xi1> to vector<16x1xi32>
    %272 = arith.sitofp %271 : vector<16x1xi32> to vector<16x1xf32>
    %273 = arith.mulf %225, %272 : vector<16x1xf32>
    %cst_105 = arith.constant dense<0xFF800000> : vector<1xf32>
    %274 = vector.multi_reduction <maximumf>, %273, %cst_105 [0] : vector<16x1xf32> to vector<1xf32>
    %275 = vector.shape_cast %274 : vector<1xf32> to vector<1x1xf32>
    %276 = vector.broadcast %275 : vector<1x1xf32> to vector<16x1xf32>
    %277 = arith.subf %273, %276 : vector<16x1xf32>
    %278 = math.exp %277 : vector<16x1xf32>
    %cst_106 = arith.constant dense<0.000000e+00> : vector<1xf32>
    %279 = vector.multi_reduction <add>, %278, %cst_106 [0] : vector<16x1xf32> to vector<1xf32>
    %280 = vector.shape_cast %279 : vector<1xf32> to vector<1x1xf32>
    %281 = vector.broadcast %280 : vector<1x1xf32> to vector<16x1xf32>
    %282 = arith.divf %278, %281 : vector<16x1xf32>
    %283 = arith.mulf %282, %272 : vector<16x1xf32>
    %cst_107 = arith.constant dense<0.000000e+00> : vector<1xf32>
    %284 = vector.multi_reduction <add>, %283, %cst_107 [0] : vector<16x1xf32> to vector<1xf32>
    %285 = vector.shape_cast %284 : vector<1xf32> to vector<1x1xf32>
    %cst_108 = arith.constant 9.99999982E-14 : f32
    %286 = vector.broadcast %cst_108 : f32 to vector<1x1xf32>
    %287 = arith.addf %285, %286 : vector<1x1xf32>
    %288 = vector.broadcast %287 : vector<1x1xf32> to vector<16x1xf32>
    %289 = arith.divf %283, %288 : vector<16x1xf32>
    %290 = vector.broadcast %289 : vector<16x1xf32> to vector<16x128xf32>
    %291 = arith.mulf %290, %222 : vector<16x128xf32>
    %cst_109 = arith.constant dense<0.000000e+00> : vector<128xf32>
    %292 = vector.multi_reduction <add>, %291, %cst_109 [0] : vector<16x128xf32> to vector<128xf32>
    %293 = vector.shape_cast %292 : vector<128xf32> to vector<1x128xf32>
    %294 = vector.extract_strided_slice %4 {offsets = [1, 0], sizes = [1, 128], strides = [1, 1]} : vector<3x128xf32> to vector<1x128xf32>
    %295 = arith.mulf %293, %294 : vector<1x128xf32>
    %296 = vector.extract_strided_slice %5 {offsets = [1, 0], sizes = [1, 128], strides = [1, 1]} : vector<3x128xf32> to vector<1x128xf32>
    %297 = arith.addf %295, %296 : vector<1x128xf32>
    %298 = vector.extract_strided_slice %6 {offsets = [1, 0, 0], sizes = [1, 128, 32], strides = [1, 1, 1]} : vector<3x128x32xf32> to vector<1x128x32xf32>
    %299 = vector.shape_cast %298 : vector<1x128x32xf32> to vector<128x32xf32>
    %cst_110 = arith.constant dense<0.000000e+00> : vector<1x32xf32>
    %300 = tpu.matmul %297, %299, %cst_110 {dimension_numbers = #tpu.dot_dimension_numbers<[1], [0], [0], [1], [0, 0, 1, 1], [], []>} : vector<1x128xf32>, vector<128x32xf32>, vector<1x32xf32> -> vector<1x32xf32>
    %301 = arith.addf %263, %300 : vector<1x32xf32>
    %c1_111 = arith.constant 1 : index
    %c4_112 = arith.constant 4 : index
    %302 = memref.load %arg1[%c1_111, %c4_112] : memref<2x6xi32, #tpu.memory_space<smem>>
    %c1_113 = arith.constant 1 : index
    %c5_114 = arith.constant 5 : index
    %303 = memref.load %arg1[%c1_113, %c5_114] : memref<2x6xi32, #tpu.memory_space<smem>>
    %304 = vector.broadcast %302 : i32 to vector<16x1xi32>
    %305 = arith.cmpi sge, %16, %304 : vector<16x1xi32>
    %306 = vector.broadcast %303 : i32 to vector<16x1xi32>
    %307 = arith.cmpi sle, %16, %306 : vector<16x1xi32>
    %308 = arith.andi %305, %307 : vector<16x1xi1>
    %309 = arith.extui %308 : vector<16x1xi1> to vector<16x1xi32>
    %310 = arith.sitofp %309 : vector<16x1xi32> to vector<16x1xf32>
    %311 = arith.mulf %225, %310 : vector<16x1xf32>
    %cst_115 = arith.constant dense<0xFF800000> : vector<1xf32>
    %312 = vector.multi_reduction <maximumf>, %311, %cst_115 [0] : vector<16x1xf32> to vector<1xf32>
    %313 = vector.shape_cast %312 : vector<1xf32> to vector<1x1xf32>
    %314 = vector.broadcast %313 : vector<1x1xf32> to vector<16x1xf32>
    %315 = arith.subf %311, %314 : vector<16x1xf32>
    %316 = math.exp %315 : vector<16x1xf32>
    %cst_116 = arith.constant dense<0.000000e+00> : vector<1xf32>
    %317 = vector.multi_reduction <add>, %316, %cst_116 [0] : vector<16x1xf32> to vector<1xf32>
    %318 = vector.shape_cast %317 : vector<1xf32> to vector<1x1xf32>
    %319 = vector.broadcast %318 : vector<1x1xf32> to vector<16x1xf32>
    %320 = arith.divf %316, %319 : vector<16x1xf32>
    %321 = arith.mulf %320, %310 : vector<16x1xf32>
    %cst_117 = arith.constant dense<0.000000e+00> : vector<1xf32>
    %322 = vector.multi_reduction <add>, %321, %cst_117 [0] : vector<16x1xf32> to vector<1xf32>
    %323 = vector.shape_cast %322 : vector<1xf32> to vector<1x1xf32>
    %cst_118 = arith.constant 9.99999982E-14 : f32
    %324 = vector.broadcast %cst_118 : f32 to vector<1x1xf32>
    %325 = arith.addf %323, %324 : vector<1x1xf32>
    %326 = vector.broadcast %325 : vector<1x1xf32> to vector<16x1xf32>
    %327 = arith.divf %321, %326 : vector<16x1xf32>
    %328 = vector.broadcast %327 : vector<16x1xf32> to vector<16x128xf32>
    %329 = arith.mulf %328, %222 : vector<16x128xf32>
    %cst_119 = arith.constant dense<0.000000e+00> : vector<128xf32>
    %330 = vector.multi_reduction <add>, %329, %cst_119 [0] : vector<16x128xf32> to vector<128xf32>
    %331 = vector.shape_cast %330 : vector<128xf32> to vector<1x128xf32>
    %332 = vector.extract_strided_slice %4 {offsets = [2, 0], sizes = [1, 128], strides = [1, 1]} : vector<3x128xf32> to vector<1x128xf32>
    %333 = arith.mulf %331, %332 : vector<1x128xf32>
    %334 = vector.extract_strided_slice %5 {offsets = [2, 0], sizes = [1, 128], strides = [1, 1]} : vector<3x128xf32> to vector<1x128xf32>
    %335 = arith.addf %333, %334 : vector<1x128xf32>
    %336 = vector.extract_strided_slice %6 {offsets = [2, 0, 0], sizes = [1, 128, 32], strides = [1, 1, 1]} : vector<3x128x32xf32> to vector<1x128x32xf32>
    %337 = vector.shape_cast %336 : vector<1x128x32xf32> to vector<128x32xf32>
    %cst_120 = arith.constant dense<0.000000e+00> : vector<1x32xf32>
    %338 = tpu.matmul %335, %337, %cst_120 {dimension_numbers = #tpu.dot_dimension_numbers<[1], [0], [0], [1], [0, 0, 1, 1], [], []>} : vector<1x128xf32>, vector<128x32xf32>, vector<1x32xf32> -> vector<1x32xf32>
    %339 = arith.addf %301, %338 : vector<1x32xf32>
    %cst_121 = arith.constant 0.000000e+00 : f32
    %340 = vector.broadcast %cst_121 : f32 to vector<1x32xf32>
    %341 = arith.maximumf %339, %340 : vector<1x32xf32>
    %342 = arith.mulf %341, %8 : vector<1x32xf32>
    %343 = arith.addf %342, %9 : vector<1x32xf32>
    %cst_122 = arith.constant dense<0.000000e+00> : vector<1x3xf32>
    %344 = tpu.matmul %343, %10, %cst_122 {dimension_numbers = #tpu.dot_dimension_numbers<[1], [0], [0], [1], [0, 0, 1, 1], [], []>} : vector<1x32xf32>, vector<32x3xf32>, vector<1x3xf32> -> vector<1x3xf32>
    %345 = vector.extract_strided_slice %14 {offsets = [1, 0], sizes = [1, 3], strides = [1, 1]} : vector<2x3xf32> to vector<1x3xf32>
    %cst_123 = arith.constant dense<0.000000e+00> : vector<1x3xf32>
    %346 = tpu.matmul %345, %11, %cst_123 {dimension_numbers = #tpu.dot_dimension_numbers<[1], [0], [0], [1], [0, 0, 1, 1], [], []>} : vector<1x3xf32>, vector<3x3xf32>, vector<1x3xf32> -> vector<1x3xf32>
    %347 = arith.addf %344, %346 : vector<1x3xf32>
    %348 = vector.extract_strided_slice %15 {offsets = [1, 0], sizes = [1, 14], strides = [1, 1]} : vector<2x14xf32> to vector<1x14xf32>
    %cst_124 = arith.constant dense<0.000000e+00> : vector<1x3xf32>
    %349 = tpu.matmul %348, %12, %cst_124 {dimension_numbers = #tpu.dot_dimension_numbers<[1], [0], [0], [1], [0, 0, 1, 1], [], []>} : vector<1x14xf32>, vector<14x3xf32>, vector<1x3xf32> -> vector<1x3xf32>
    %350 = arith.addf %347, %349 : vector<1x3xf32>
    %351 = arith.addf %350, %13 : vector<1x3xf32>
    %c1_125 = arith.constant 1 : index
    %c0_126 = arith.constant 0 : index
    %352 = vector.load %arg19[%c1_125, %c0_126] : memref<2x3xf32, #tpu.memory_space<vmem>>, vector<1x3xf32>
    tpu.vector_store %arg19[%c1_125, %c0_126], %351 {strides = array<i32>} : memref<2x3xf32, #tpu.memory_space<vmem>>, vector<1x3xf32>,
    return
  }
  func.func @transform_0(%arg0: i32, %arg1: memref<2x6xi32, #tpu.memory_space<smem>>) -> (i32, i32, i32) {
    %c0_i32 = arith.constant 0 : i32
    %c0_i32_0 = arith.constant 0 : i32
    %c0_i32_1 = arith.constant 0 : i32
    %c0_i32_2 = arith.constant 0 : i32
    return %c0_i32, %c0_i32_0, %c0_i32_1 : i32, i32, i32
  }
  func.func @transform_1(%arg0: i32, %arg1: memref<2x6xi32, #tpu.memory_space<smem>>) -> (i32, i32) {
    %c0_i32 = arith.constant 0 : i32
    %c0_i32_0 = arith.constant 0 : i32
    %c0_i32_1 = arith.constant 0 : i32
    return %c0_i32, %c0_i32_0 : i32, i32
  }
  func.func @transform_2(%arg0: i32, %arg1: memref<2x6xi32, #tpu.memory_space<smem>>) -> (i32, i32) {
    %c0_i32 = arith.constant 0 : i32
    %c0_i32_0 = arith.constant 0 : i32
    %c0_i32_1 = arith.constant 0 : i32
    return %c0_i32, %c0_i32_0 : i32, i32
  }
  func.func @transform_3(%arg0: i32, %arg1: memref<2x6xi32, #tpu.memory_space<smem>>) -> (i32, i32) {
    %c0_i32 = arith.constant 0 : i32
    %c0_i32_0 = arith.constant 0 : i32
    %c0_i32_1 = arith.constant 0 : i32
    return %c0_i32, %c0_i32_0 : i32, i32
  }
  func.func @transform_4(%arg0: i32, %arg1: memref<2x6xi32, #tpu.memory_space<smem>>) -> (i32, i32) {
    %c0_i32 = arith.constant 0 : i32
    %c0_i32_0 = arith.constant 0 : i32
    %c0_i32_1 = arith.constant 0 : i32
    return %c0_i32, %c0_i32_0 : i32, i32
  }
  func.func @transform_5(%arg0: i32, %arg1: memref<2x6xi32, #tpu.memory_space<smem>>) -> (i32, i32) {
    %c0_i32 = arith.constant 0 : i32
    %c0_i32_0 = arith.constant 0 : i32
    %c0_i32_1 = arith.constant 0 : i32
    return %c0_i32, %c0_i32_0 : i32, i32
  }
  func.func @transform_6(%arg0: i32, %arg1: memref<2x6xi32, #tpu.memory_space<smem>>) -> (i32, i32) {
    %c0_i32 = arith.constant 0 : i32
    %c0_i32_0 = arith.constant 0 : i32
    %c0_i32_1 = arith.constant 0 : i32
    return %c0_i32, %c0_i32_0 : i32, i32
  }
  func.func @transform_7(%arg0: i32, %arg1: memref<2x6xi32, #tpu.memory_space<smem>>) -> (i32, i32, i32) {
    %c0_i32 = arith.constant 0 : i32
    %c0_i32_0 = arith.constant 0 : i32
    %c0_i32_1 = arith.constant 0 : i32
    %c0_i32_2 = arith.constant 0 : i32
    return %c0_i32, %c0_i32_0, %c0_i32_1 : i32, i32, i32
  }
  func.func @transform_8(%arg0: i32, %arg1: memref<2x6xi32, #tpu.memory_space<smem>>) -> (i32, i32) {
    %c0_i32 = arith.constant 0 : i32
    %c0_i32_0 = arith.constant 0 : i32
    %c0_i32_1 = arith.constant 0 : i32
    return %c0_i32, %c0_i32_0 : i32, i32
  }
  func.func @transform_9(%arg0: i32, %arg1: memref<2x6xi32, #tpu.memory_space<smem>>) -> (i32, i32) {
    %c0_i32 = arith.constant 0 : i32
    %c0_i32_0 = arith.constant 0 : i32
    %c0_i32_1 = arith.constant 0 : i32
    return %c0_i32, %c0_i32_0 : i32, i32
  }
  func.func @transform_10(%arg0: i32, %arg1: memref<2x6xi32, #tpu.memory_space<smem>>) -> (i32, i32) {
    %c0_i32 = arith.constant 0 : i32
    %c0_i32_0 = arith.constant 0 : i32
    %c0_i32_1 = arith.constant 0 : i32
    return %c0_i32, %c0_i32_0 : i32, i32
  }
  func.func @transform_11(%arg0: i32, %arg1: memref<2x6xi32, #tpu.memory_space<smem>>) -> (i32, i32) {
    %c0_i32 = arith.constant 0 : i32
    %c0_i32_0 = arith.constant 0 : i32
    %c0_i32_1 = arith.constant 0 : i32
    return %c0_i32, %c0_i32_0 : i32, i32
  }
  func.func @transform_12(%arg0: i32, %arg1: memref<2x6xi32, #tpu.memory_space<smem>>) -> (i32, i32) {
    %c0_i32 = arith.constant 0 : i32
    %c0_i32_0 = arith.constant 0 : i32
    %c0_i32_1 = arith.constant 0 : i32
    return %c0_i32, %c0_i32_0 : i32, i32
  }
  func.func @transform_13(%arg0: i32, %arg1: memref<2x6xi32, #tpu.memory_space<smem>>) -> (i32, i32) {
    %c0_i32 = arith.constant 0 : i32
    %c0_i32_0 = arith.constant 0 : i32
    %c0_i32_1 = arith.constant 0 : i32
    return %c0_i32, %c0_i32_0 : i32, i32
  }
  func.func @transform_14(%arg0: i32, %arg1: memref<2x6xi32, #tpu.memory_space<smem>>) -> (i32, i32) {
    %c0_i32 = arith.constant 0 : i32
    %c0_i32_0 = arith.constant 0 : i32
    %c0_i32_1 = arith.constant 0 : i32
    return %c0_i32, %c0_i32_0 : i32, i32
  }
  func.func @transform_15(%arg0: i32, %arg1: memref<2x6xi32, #tpu.memory_space<smem>>) -> (i32, i32) {
    %c0_i32 = arith.constant 0 : i32
    %c0_i32_0 = arith.constant 0 : i32
    %c0_i32_1 = arith.constant 0 : i32
    return %c0_i32, %c0_i32_0 : i32, i32
  }
  func.func @transform_16(%arg0: i32, %arg1: memref<2x6xi32, #tpu.memory_space<smem>>) -> (i32, i32) {
    %c0_i32 = arith.constant 0 : i32
    %c0_i32_0 = arith.constant 0 : i32
    %c0_i32_1 = arith.constant 0 : i32
    return %c0_i32, %c0_i32_0 : i32, i32
  }
  func.func @transform_17(%arg0: i32, %arg1: memref<2x6xi32, #tpu.memory_space<smem>>) -> (i32, i32) {
    %c0_i32 = arith.constant 0 : i32
    %c0_i32_0 = arith.constant 0 : i32
    %c0_i32_1 = arith.constant 0 : i32
    return %c0_i32, %c0_i32_0 : i32, i32
  }
}

</mosaic_0001>

<llo_original>
// kernel: tpu_custom_call.1
$region0: #{tpu_custom_call.1}
  #allocation0 [shape = 'u32[]', space=smem, size = 0x4, offset = 0x4, fixed_abs, tag = 'smem constant byte address 0x4 - core index']
  #allocation1 [shape = 'u32[144,128]{1,0:T(1,128)}', space=vmem, size = 0x12000, scoped, tag = 'internal scratch']
  #allocation2 [shape = 's32[1]{0}', space=sflag, size = 0x4, scoped, tag = 'scoped memory for tpu_custom_call.1']
  #allocation3 [shape = 'u8[1024]{0}', space=smem, size = 0x400, scoped, tag = 'prefetched SMEM operand 0']
  #allocation4 [shape = 'f32[1,1]{1,0:T(1,128)S(1)}', space=vmem, size = 0x200, scoped, tag = 'scoped memory for tpu_custom_call.1']
  %s0 = inlined_call_operand.hbm [shape: s32[2,6], index: 0, kind: input, shape index: {}]
  %s1 = inlined_call_operand.hbm [shape: f32[2,16,768], index: 1, kind: input, shape index: {}]
  %s2 = inlined_call_operand.hbm [shape: f32[768,384], index: 2, kind: input, shape index: {}]
  %s3 = inlined_call_operand.hbm [shape: f32[1,128], index: 3, kind: input, shape index: {}]
  %s4 = inlined_call_operand.vmem [shape: f32[128,1], index: 4, kind: input, shape index: {}]
  %s5 = inlined_call_operand.<no memory space> [shape: f32[1,1], index: 5, kind: input, shape index: {}]
  %s6 = inlined_call_operand.hbm [shape: f32[3,128], index: 6, kind: input, shape index: {}]
  %s7 = inlined_call_operand.hbm [shape: f32[3,128], index: 7, kind: input, shape index: {}]
  %s8 = inlined_call_operand.vmem [shape: f32[3,128,32], index: 8, kind: input, shape index: {}]
  %s9 = inlined_call_operand.hbm [shape: f32[1,32], index: 9, kind: input, shape index: {}]
  %s10 = inlined_call_operand.hbm [shape: f32[1,32], index: 10, kind: input, shape index: {}]
  %s11 = inlined_call_operand.hbm [shape: f32[1,32], index: 11, kind: input, shape index: {}]
  %s12 = inlined_call_operand.vmem [shape: f32[32,3], index: 12, kind: input, shape index: {}]
  %s13 = inlined_call_operand.hbm [shape: f32[3,3], index: 13, kind: input, shape index: {}]
  %s14 = inlined_call_operand.vmem [shape: f32[14,3], index: 14, kind: input, shape index: {}]
  %s15 = inlined_call_operand.hbm [shape: f32[1,3], index: 15, kind: input, shape index: {}]
  %s16 = inlined_call_operand.hbm [shape: f32[2,3], index: 16, kind: input, shape index: {}]
  %s17 = inlined_call_operand.hbm [shape: f32[2,14], index: 17, kind: input, shape index: {}]
  %s18 = inlined_call_operand.hbm [shape: f32[2,3], index: 18, kind: output, shape index: {}]
  %s19 = sld [smem:[#allocation0]]
  $region126: #{tpu_custom_call.1} parent=0
    _
  %s21 = ssub.s32 1, %s19
  %s22 = scalar_select 0, %s21, %s19
  %24 = dma.hbm_to_smem %s0, 32, [#allocation3], [#allocation2]
  %v25 = vstv %s5
  %26 = vst [vmem:[#allocation4] sm:$0x1] %v25
  %27 = dma.done [#allocation2], 32
  %28 = sfence
  $region1: #{tpu_custom_call.1} parent=0
    #allocation5 [shape = 'u8[98304]{0}', space=vmem, size = 0x18000, scoped, tag = 'input window, operand 1, single buffered']
    #allocation6 [shape = 's32[1]{0}', space=sflag, size = 0x4, scoped, tag = 'scoped memory for tpu_custom_call.1']
    #allocation7 [shape = 's32[1]{0}', space=sflag, size = 0x4, scoped, tag = 'scoped memory for tpu_custom_call.1']
    #allocation8 [shape = 'u8[1179648]{0}', space=vmem, size = 0x120000, scoped, tag = 'input window, operand 2, single buffered']
    #allocation9 [shape = 's32[1]{0}', space=sflag, size = 0x4, scoped, tag = 'scoped memory for tpu_custom_call.1']
    #allocation10 [shape = 'u8[512]{0}', space=vmem, size = 0x400, scoped, tag = 'input window, operand 3, single buffered']
    #allocation11 [shape = 'u8[2048]{0}', space=vmem, size = 0x800, scoped, tag = 'input window, operand 6, single buffered']
    #allocation12 [shape = 's32[1]{0}', space=sflag, size = 0x4, scoped, tag = 'scoped memory for tpu_custom_call.1']
    #allocation13 [shape = 'u8[2048]{0}', space=vmem, size = 0x800, scoped, tag = 'input window, operand 7, single buffered']
    #allocation14 [shape = 'u8[512]{0}', space=vmem, size = 0x400, scoped, tag = 'input window, operand 9, single buffered']
    #allocation15 [shape = 's32[1]{0}', space=sflag, size = 0x4, scoped, tag = 'scoped memory for tpu_custom_call.1']
    #allocation16 [shape = 'u8[512]{0}', space=vmem, size = 0x400, scoped, tag = 'input window, operand 10, single buffered']
    #allocation17 [shape = 'u8[512]{0}', space=vmem, size = 0x400, scoped, tag = 'input window, operand 11, single buffered']
    #allocation18 [shape = 's32[1]{0}', space=sflag, size = 0x4, scoped, tag = 'scoped memory for tpu_custom_call.1']
    #allocation19 [shape = 'u8[2048]{0}', space=vmem, size = 0x800, scoped, tag = 'input window, operand 13, single buffered']
    #allocation20 [shape = 'u8[512]{0}', space=vmem, size = 0x400, scoped, tag = 'input window, operand 15, single buffered']
    #allocation21 [shape = 's32[1]{0}', space=sflag, size = 0x4, scoped, tag = 'scoped memory for tpu_custom_call.1']
    #allocation22 [shape = 'u8[1024]{0}', space=vmem, size = 0x400, scoped, tag = 'input window, operand 16, single buffered']
    #allocation23 [shape = 'u8[1024]{0}', space=vmem, size = 0x400, scoped, tag = 'input window, operand 17, single buffered']
    #allocation24 [shape = 's32[1]{0}', space=sflag, size = 0x4, scoped, tag = 'scoped memory for tpu_custom_call.1']
    #allocation25 [shape = 'u8[1024]{0}', space=vmem, size = 0x400, scoped, tag = 'output window, operand 0, single buffered']
    %29 = vsyncpa [#allocation6], 0
    %30 = vsyncpa [#allocation9], 0
    %31 = vsyncpa [#allocation12], 0
    %32 = vsyncpa [#allocation15], 0
    %33 = vsyncpa [#allocation18], 0
    %34 = vsyncpa [#allocation21], 0
    %35 = vsyncpa [#allocation24], 0
    %36 = vsyncpa [#allocation7], 0
    // Predicated region
    $region2: #{tpu_custom_call.1} parent=1 // pred_check
      _
    $region3: #{tpu_custom_call.1} parent=1 // pred_check_branch
      %38 = sbr.rel (0) target = $region5
    $region4: #{tpu_custom_call.1} parent=1 // pred_region
      %s40 = ssub.s32 3072, 3072
      %41 = vsyncadd [#allocation6], %s40
      %s42 = sshll.u32 [#allocation5], 4
      %s43 = int_to_ptr.vmem [resolvable:$true] %s42
      %48 = dma.hbm_to_vmem [thread:$0]  %s1, 3072, %s43, [#allocation6], 768, 768, 48
    $region5: #{tpu_custom_call.1} parent=1 // pred_fallthru
      _
    // Predicated region
    $region6: #{tpu_custom_call.1} parent=1 // pred_check
      _
    $region7: #{tpu_custom_call.1} parent=1 // pred_check_branch
      %50 = sbr.rel (0) target = $region9
    $region8: #{tpu_custom_call.1} parent=1 // pred_region
      %s52 = ssub.s32 36864, 36864
      %53 = vsyncadd [#allocation9], %s52
      %s54 = sshll.u32 [#allocation8], 4
      %s55 = int_to_ptr.vmem [resolvable:$true] %s54
      %60 = dma.hbm_to_vmem [thread:$0]  %s2, 36864, %s55, [#allocation9], 384, 384, 24
    $region9: #{tpu_custom_call.1} parent=1 // pred_fallthru
      _
    // Predicated region
    $region10: #{tpu_custom_call.1} parent=1 // pred_check
      _
    $region11: #{tpu_custom_call.1} parent=1 // pred_check_branch
      %62 = sbr.rel (0) target = $region13
    $region12: #{tpu_custom_call.1} parent=1 // pred_region
      %s64 = ssub.s32 16, 16
      %65 = vsyncadd [#allocation9], %s64
      %s67 = sshll.u32 [#allocation10], 4
      %s68 = int_to_ptr.vmem [resolvable:$true] %s67
      %70 = dma.hbm_to_vmem [thread:$0]  %s3, 16, %s68, [#allocation9]
    $region13: #{tpu_custom_call.1} parent=1 // pred_fallthru
      _
    // Predicated region
    $region14: #{tpu_custom_call.1} parent=1 // pred_check
      _
    $region15: #{tpu_custom_call.1} parent=1 // pred_check_branch
      %72 = sbr.rel (0) target = $region17
    $region16: #{tpu_custom_call.1} parent=1 // pred_region
      _
    $region17: #{tpu_custom_call.1} parent=1 // pred_fallthru
      _
    // Predicated region
    $region18: #{tpu_custom_call.1} parent=1 // pred_check
      _
    $region19: #{tpu_custom_call.1} parent=1 // pred_check_branch
      %74 = sbr.rel (0) target = $region21
    $region20: #{tpu_custom_call.1} parent=1 // pred_region
      _
    $region21: #{tpu_custom_call.1} parent=1 // pred_fallthru
      _
    // Predicated region
    $region22: #{tpu_custom_call.1} parent=1 // pred_check
      _
    $region23: #{tpu_custom_call.1} parent=1 // pred_check_branch
      %76 = sbr.rel (0) target = $region25
    $region24: #{tpu_custom_call.1} parent=1 // pred_region
      %s78 = ssub.s32 64, 64
      %79 = vsyncadd [#allocation12], %s78
      %s81 = sshll.u32 [#allocation11], 4
      %s82 = int_to_ptr.vmem [resolvable:$true] %s81
      %84 = dma.hbm_to_vmem [thread:$0]  %s6, 64, %s82, [#allocation12]
    $region25: #{tpu_custom_call.1} parent=1 // pred_fallthru
      _
    // Predicated region
    $region26: #{tpu_custom_call.1} parent=1 // pred_check
      _
    $region27: #{tpu_custom_call.1} parent=1 // pred_check_branch
      %86 = sbr.rel (0) target = $region29
    $region28: #{tpu_custom_call.1} parent=1 // pred_region
      %s88 = ssub.s32 64, 64
      %89 = vsyncadd [#allocation12], %s88
      %s91 = sshll.u32 [#allocation13], 4
      %s92 = int_to_ptr.vmem [resolvable:$true] %s91
      %94 = dma.hbm_to_vmem [thread:$0]  %s7, 64, %s92, [#allocation12]
    $region29: #{tpu_custom_call.1} parent=1 // pred_fallthru
      _
    // Predicated region
    $region30: #{tpu_custom_call.1} parent=1 // pred_check
      _
    $region31: #{tpu_custom_call.1} parent=1 // pred_check_branch
      %96 = sbr.rel (0) target = $region33
    $region32: #{tpu_custom_call.1} parent=1 // pred_region
      _
    $region33: #{tpu_custom_call.1} parent=1 // pred_fallthru
      _
    // Predicated region
    $region34: #{tpu_custom_call.1} parent=1 // pred_check
      _
    $region35: #{tpu_custom_call.1} parent=1 // pred_check_branch
      %98 = sbr.rel (0) target = $region37
    $region36: #{tpu_custom_call.1} parent=1 // pred_region
      %s100 = ssub.s32 16, 16
      %101 = vsyncadd [#allocation15], %s100
      %s103 = sshll.u32 [#allocation14], 4
      %s104 = int_to_ptr.vmem [resolvable:$true] %s103
      %106 = dma.hbm_to_vmem [thread:$0]  %s9, 16, %s104, [#allocation15]
    $region37: #{tpu_custom_call.1} parent=1 // pred_fallthru
      _
    // Predicated region
    $region38: #{tpu_custom_call.1} parent=1 // pred_check
      _
    $region39: #{tpu_custom_call.1} parent=1 // pred_check_branch
      %108 = sbr.rel (0) target = $region41
    $region40: #{tpu_custom_call.1} parent=1 // pred_region
      %s110 = ssub.s32 16, 16
      %111 = vsyncadd [#allocation15], %s110
      %s113 = sshll.u32 [#allocation16], 4
      %s114 = int_to_ptr.vmem [resolvable:$true] %s113
      %116 = dma.hbm_to_vmem [thread:$0]  %s10, 16, %s114, [#allocation15]
    $region41: #{tpu_custom_call.1} parent=1 // pred_fallthru
      _
    // Predicated region
    $region42: #{tpu_custom_call.1} parent=1 // pred_check
      _
    $region43: #{tpu_custom_call.1} parent=1 // pred_check_branch
      %118 = sbr.rel (0) target = $region45
    $region44: #{tpu_custom_call.1} parent=1 // pred_region
      %s120 = ssub.s32 16, 16
      %121 = vsyncadd [#allocation18], %s120
      %s123 = sshll.u32 [#allocation17], 4
      %s124 = int_to_ptr.vmem [resolvable:$true] %s123
      %126 = dma.hbm_to_vmem [thread:$0]  %s11, 16, %s124, [#allocation18]
    $region45: #{tpu_custom_call.1} parent=1 // pred_fallthru
      _
    // Predicated region
    $region46: #{tpu_custom_call.1} parent=1 // pred_check
      _
    $region47: #{tpu_custom_call.1} parent=1 // pred_check_branch
      %128 = sbr.rel (0) target = $region49
    $region48: #{tpu_custom_call.1} parent=1 // pred_region
      _
    $region49: #{tpu_custom_call.1} parent=1 // pred_fallthru
      _
    // Predicated region
    $region50: #{tpu_custom_call.1} parent=1 // pred_check
      _
    $region51: #{tpu_custom_call.1} parent=1 // pred_check_branch
      %130 = sbr.rel (0) target = $region53
    $region52: #{tpu_custom_call.1} parent=1 // pred_region
      %s132 = ssub.s32 64, 64
      %133 = vsyncadd [#allocation18], %s132
      %s135 = sshll.u32 [#allocation19], 4
      %s136 = int_to_ptr.vmem [resolvable:$true] %s135
      %138 = dma.hbm_to_vmem [thread:$0]  %s13, 64, %s136, [#allocation18]
    $region53: #{tpu_custom_call.1} parent=1 // pred_fallthru
      _
    // Predicated region
    $region54: #{tpu_custom_call.1} parent=1 // pred_check
      _
    $region55: #{tpu_custom_call.1} parent=1 // pred_check_branch
      %140 = sbr.rel (0) target = $region57
    $region56: #{tpu_custom_call.1} parent=1 // pred_region
      _
    $region57: #{tpu_custom_call.1} parent=1 // pred_fallthru
      _
    // Predicated region
    $region58: #{tpu_custom_call.1} parent=1 // pred_check
      _
    $region59: #{tpu_custom_call.1} parent=1 // pred_check_branch
      %142 = sbr.rel (0) target = $region61
    $region60: #{tpu_custom_call.1} parent=1 // pred_region
      %s144 = ssub.s32 16, 16
      %145 = vsyncadd [#allocation21], %s144
      %s147 = sshll.u32 [#allocation20], 4
      %s148 = int_to_ptr.vmem [resolvable:$true] %s147
      %150 = dma.hbm_to_vmem [thread:$0]  %s15, 16, %s148, [#allocation21]
    $region61: #{tpu_custom_call.1} parent=1 // pred_fallthru
      _
    // Predicated region
    $region62: #{tpu_custom_call.1} parent=1 // pred_check
      _
    $region63: #{tpu_custom_call.1} parent=1 // pred_check_branch
      %152 = sbr.rel (0) target = $region65
    $region64: #{tpu_custom_call.1} parent=1 // pred_region
      %s154 = ssub.s32 32, 32
      %155 = vsyncadd [#allocation21], %s154
      %s157 = sshll.u32 [#allocation22], 4
      %s158 = int_to_ptr.vmem [resolvable:$true] %s157
      %160 = dma.hbm_to_vmem [thread:$0]  %s16, 32, %s158, [#allocation21]
    $region65: #{tpu_custom_call.1} parent=1 // pred_fallthru
      _
    // Predicated region
    $region66: #{tpu_custom_call.1} parent=1 // pred_check
      _
    $region67: #{tpu_custom_call.1} parent=1 // pred_check_branch
      %162 = sbr.rel (0) target = $region69
    $region68: #{tpu_custom_call.1} parent=1 // pred_region
      %s164 = ssub.s32 32, 32
      %165 = vsyncadd [#allocation24], %s164
      %s167 = sshll.u32 [#allocation23], 4
      %s168 = int_to_ptr.vmem [resolvable:$true] %s167
      %170 = dma.hbm_to_vmem [thread:$0]  %s17, 32, %s168, [#allocation24]
    $region69: #{tpu_custom_call.1} parent=1 // pred_fallthru
      _
    // Predicated region
    $region70: #{tpu_custom_call.1} parent=1 // pred_check
      _
    $region71: #{tpu_custom_call.1} parent=1 // pred_check_branch
      %172 = sbr.rel (0) target = $region73
    $region72: #{tpu_custom_call.1} parent=1 // pred_region
      %173 = dma.done [#allocation6], 3072
    $region73: #{tpu_custom_call.1} parent=1 // pred_fallthru
      _
    // Predicated region
    $region74: #{tpu_custom_call.1} parent=1 // pred_check
      _
    $region75: #{tpu_custom_call.1} parent=1 // pred_check_branch
      %175 = sbr.rel (0) target = $region77
    $region76: #{tpu_custom_call.1} parent=1 // pred_region
      %176 = dma.done [#allocation9], 36864
    $region77: #{tpu_custom_call.1} parent=1 // pred_fallthru
      _
    // Predicated region
    $region78: #{tpu_custom_call.1} parent=1 // pred_check
      _
    $region79: #{tpu_custom_call.1} parent=1 // pred_check_branch
      %178 = sbr.rel (0) target = $region81
    $region80: #{tpu_custom_call.1} parent=1 // pred_region
      %179 = dma.done [#allocation9], 16
    $region81: #{tpu_custom_call.1} parent=1 // pred_fallthru
      _
    // Predicated region
    $region82: #{tpu_custom_call.1} parent=1 // pred_check
      _
    $region83: #{tpu_custom_call.1} parent=1 // pred_check_branch
      %181 = sbr.rel (0) target = $region85
    $region84: #{tpu_custom_call.1} parent=1 // pred_region
      %182 = dma.done [#allocation12], 64
    $region85: #{tpu_custom_call.1} parent=1 // pred_fallthru
      _
    // Predicated region
    $region86: #{tpu_custom_call.1} parent=1 // pred_check
      _
    $region87: #{tpu_custom_call.1} parent=1 // pred_check_branch
      %184 = sbr.rel (0) target = $region89
    $region88: #{tpu_custom_call.1} parent=1 // pred_region
      %185 = dma.done [#allocation12], 64
    $region89: #{tpu_custom_call.1} parent=1 // pred_fallthru
      _
    // Predicated region
    $region90: #{tpu_custom_call.1} parent=1 // pred_check
      _
    $region91: #{tpu_custom_call.1} parent=1 // pred_check_branch
      %187 = sbr.rel (0) target = $region93
    $region92: #{tpu_custom_call.1} parent=1 // pred_region
      %188 = dma.done [#allocation15], 16
    $region93: #{tpu_custom_call.1} parent=1 // pred_fallthru
      _
    // Predicated region
    $region94: #{tpu_custom_call.1} parent=1 // pred_check
      _
    $region95: #{tpu_custom_call.1} parent=1 // pred_check_branch
      %190 = sbr.rel (0) target = $region97
    $region96: #{tpu_custom_call.1} parent=1 // pred_region
      %191 = dma.done [#allocation15], 16
    $region97: #{tpu_custom_call.1} parent=1 // pred_fallthru
      _
    // Predicated region
    $region98: #{tpu_custom_call.1} parent=1 // pred_check
      _
    $region99: #{tpu_custom_call.1} parent=1 // pred_check_branch
      %193 = sbr.rel (0) target = $region101
    $region100: #{tpu_custom_call.1} parent=1 // pred_region
      %194 = dma.done [#allocation18], 16
    $region101: #{tpu_custom_call.1} parent=1 // pred_fallthru
      _
    // Predicated region
    $region102: #{tpu_custom_call.1} parent=1 // pred_check
      _
    $region103: #{tpu_custom_call.1} parent=1 // pred_check_branch
      %196 = sbr.rel (0) target = $region105
    $region104: #{tpu_custom_call.1} parent=1 // pred_region
      %197 = dma.done [#allocation18], 64
    $region105: #{tpu_custom_call.1} parent=1 // pred_fallthru
      _
    // Predicated region
    $region106: #{tpu_custom_call.1} parent=1 // pred_check
      _
    $region107: #{tpu_custom_call.1} parent=1 // pred_check_branch
      %199 = sbr.rel (0) target = $region109
    $region108: #{tpu_custom_call.1} parent=1 // pred_region
      %200 = dma.done [#allocation21], 16
    $region109: #{tpu_custom_call.1} parent=1 // pred_fallthru
      _
    // Predicated region
    $region110: #{tpu_custom_call.1} parent=1 // pred_check
      _
    $region111: #{tpu_custom_call.1} parent=1 // pred_check_branch
      %202 = sbr.rel (0) target = $region113
    $region112: #{tpu_custom_call.1} parent=1 // pred_region
      %203 = dma.done [#allocation21], 32
    $region113: #{tpu_custom_call.1} parent=1 // pred_fallthru
      _
    // Predicated region
    $region114: #{tpu_custom_call.1} parent=1 // pred_check
      _
    $region115: #{tpu_custom_call.1} parent=1 // pred_check_branch
      %205 = sbr.rel (0) target = $region117
    $region116: #{tpu_custom_call.1} parent=1 // pred_region
      %206 = dma.done [#allocation24], 32
    $region117: #{tpu_custom_call.1} parent=1 // pred_fallthru
      _
    %v207 = vld [vmem:[#allocation8] sm:$0xff]
    %v208 = vld [vmem:[#allocation8 + $0x8] sm:$0xff]
    %v209 = vld [vmem:[#allocation8 + $0x10] sm:$0xff]
    %v210 = vld [vmem:[#allocation8 + $0x18] sm:$0xff]
    %v211 = vld [vmem:[#allocation8 + $0x20] sm:$0xff]
    %v212 = vld [vmem:[#allocation8 + $0x28] sm:$0xff]
    %v213 = vld [vmem:[#allocation8 + $0x30] sm:$0xff]
    %v214 = vld [vmem:[#allocation8 + $0x38] sm:$0xff]
    %v215 = vld [vmem:[#allocation8 + $0x40] sm:$0xff]
    %v216 = vld [vmem:[#allocation8 + $0x48] sm:$0xff]
    %v217 = vld [vmem:[#allocation8 + $0x50] sm:$0xff]
    %v218 = vld [vmem:[#allocation8 + $0x58] sm:$0xff]
    %v219 = vld [vmem:[#allocation8 + $0x60] sm:$0xff]
    %v220 = vld [vmem:[#allocation8 + $0x68] sm:$0xff]
    %v221 = vld [vmem:[#allocation8 + $0x70] sm:$0xff]
    %v222 = vld [vmem:[#allocation8 + $0x78] sm:$0xff]
    %v223 = vld [vmem:[#allocation8 + $0x80] sm:$0xff]
    %v224 = vld [vmem:[#allocation8 + $0x88] sm:$0xff]
    %v225 = vld [vmem:[#allocation8 + $0x90] sm:$0xff]
    %v226 = vld [vmem:[#allocation8 + $0x98] sm:$0xff]
    %v227 = vld [vmem:[#allocation8 + $0xa0] sm:$0xff]
    %v228 = vld [vmem:[#allocation8 + $0xa8] sm:$0xff]
    %v229 = vld [vmem:[#allocation8 + $0xb0] sm:$0xff]
    %v230 = vld [vmem:[#allocation8 + $0xb8] sm:$0xff]
    %v231 = vld [vmem:[#allocation8 + $0xc0] sm:$0xff]
    %v232 = vld [vmem:[#allocation8 + $0xc8] sm:$0xff]
    %v233 = vld [vmem:[#allocation8 + $0xd0] sm:$0xff]
    %v234 = vld [vmem:[#allocation8 + $0xd8] sm:$0xff]
    %v235 = vld [vmem:[#allocation8 + $0xe0] sm:$0xff]
    %v236 = vld [vmem:[#allocation8 + $0xe8] sm:$0xff]
    %v237 = vld [vmem:[#allocation8 + $0xf0] sm:$0xff]
    %v238 = vld [vmem:[#allocation8 + $0xf8] sm:$0xff]
    %v239 = vld [vmem:[#allocation8 + $0x100] sm:$0xff]
    %v240 = vld [vmem:[#allocation8 + $0x108] sm:$0xff]
    %v241 = vld [vmem:[#allocation8 + $0x110] sm:$0xff]
    %v242 = vld [vmem:[#allocation8 + $0x118] sm:$0xff]
    %v243 = vld [vmem:[#allocation8 + $0x120] sm:$0xff]
    %v244 = vld [vmem:[#allocation8 + $0x128] sm:$0xff]
    %v245 = vld [vmem:[#allocation8 + $0x130] sm:$0xff]
    %v246 = vld [vmem:[#allocation8 + $0x138] sm:$0xff]
    %v247 = vld [vmem:[#allocation8 + $0x140] sm:$0xff]
    %v248 = vld [vmem:[#allocation8 + $0x148] sm:$0xff]
    %v249 = vld [vmem:[#allocation8 + $0x150] sm:$0xff]
    %v250 = vld [vmem:[#allocation8 + $0x158] sm:$0xff]
    %v251 = vld [vmem:[#allocation8 + $0x160] sm:$0xff]
    %v252 = vld [vmem:[#allocation8 + $0x168] sm:$0xff]
    %v253 = vld [vmem:[#allocation8 + $0x170] sm:$0xff]
    %v254 = vld [vmem:[#allocation8 + $0x178] sm:$0xff]
    %v255 = vld [vmem:[#allocation8 + $0x180] sm:$0xff]
    %v256 = vld [vmem:[#allocation8 + $0x188] sm:$0xff]
    %v257 = vld [vmem:[#allocation8 + $0x190] sm:$0xff]
    %v258 = vld [vmem:[#allocation8 + $0x198] sm:$0xff]
    %v259 = vld [vmem:[#allocation8 + $0x1a0] sm:$0xff]
    %v260 = vld [vmem:[#allocation8 + $0x1a8] sm:$0xff]
    %v261 = vld [vmem:[#allocation8 + $0x1b0] sm:$0xff]
    %v262 = vld [vmem:[#allocation8 + $0x1b8] sm:$0xff]
    %v263 = vld [vmem:[#allocation8 + $0x1c0] sm:$0xff]
    %v264 = vld [vmem:[#allocation8 + $0x1c8] sm:$0xff]
    %v265 = vld [vmem:[#allocation8 + $0x1d0] sm:$0xff]
    %v266 = vld [vmem:[#allocation8 + $0x1d8] sm:$0xff]
    %v267 = vld [vmem:[#allocation8 + $0x1e0] sm:$0xff]
    %v268 = vld [vmem:[#allocation8 + $0x1e8] sm:$0xff]
    %v269 = vld [vmem:[#allocation8 + $0x1f0] sm:$0xff]
    %v270 = vld [vmem:[#allocation8 + $0x1f8] sm:$0xff]
    %v271 = vld [vmem:[#allocation8 + $0x200] sm:$0xff]
    %v272 = vld [vmem:[#allocation8 + $0x208] sm:$0xff]
    %v273 = vld [vmem:[#allocation8 + $0x210] sm:$0xff]
    %v274 = vld [vmem:[#allocation8 + $0x218] sm:$0xff]
    %v275 = vld [vmem:[#allocation8 + $0x220] sm:$0xff]
    %v276 = vld [vmem:[#allocation8 + $0x228] sm:$0xff]
    %v277 = vld [vmem:[#allocation8 + $0x230] sm:$0xff]
    %v278 = vld [vmem:[#allocation8 + $0x238] sm:$0xff]
    %v279 = vld [vmem:[#allocation8 + $0x240] sm:$0xff]
    %v280 = vld [vmem:[#allocation8 + $0x248] sm:$0xff]
    %v281 = vld [vmem:[#allocation8 + $0x250] sm:$0xff]
    %v282 = vld [vmem:[#allocation8 + $0x258] sm:$0xff]
    %v283 = vld [vmem:[#allocation8 + $0x260] sm:$0xff]
    %v284 = vld [vmem:[#allocation8 + $0x268] sm:$0xff]
    %v285 = vld [vmem:[#allocation8 + $0x270] sm:$0xff]
    %v286 = vld [vmem:[#allocation8 + $0x278] sm:$0xff]
    %v287 = vld [vmem:[#allocation8 + $0x280] sm:$0xff]
    %v288 = vld [vmem:[#allocation8 + $0x288] sm:$0xff]
    %v289 = vld [vmem:[#allocation8 + $0x290] sm:$0xff]
    %v290 = vld [vmem:[#allocation8 + $0x298] sm:$0xff]
    %v291 = vld [vmem:[#allocation8 + $0x2a0] sm:$0xff]
    %v292 = vld [vmem:[#allocation8 + $0x2a8] sm:$0xff]
    %v293 = vld [vmem:[#allocation8 + $0x2b0] sm:$0xff]
    %v294 = vld [vmem:[#allocation8 + $0x2b8] sm:$0xff]
    %v295 = vld [vmem:[#allocation8 + $0x2c0] sm:$0xff]
    %v296 = vld [vmem:[#allocation8 + $0x2c8] sm:$0xff]
    %v297 = vld [vmem:[#allocation8 + $0x2d0] sm:$0xff]
    %v298 = vld [vmem:[#allocation8 + $0x2d8] sm:$0xff]
    %v299 = vld [vmem:[#allocation8 + $0x2e0] sm:$0xff]
    %v300 = vld [vmem:[#allocation8 + $0x2e8] sm:$0xff]
    %v301 = vld [vmem:[#allocation8 + $0x2f0] sm:$0xff]
    %v302 = vld [vmem:[#allocation8 + $0x2f8] sm:$0xff]
    %v303 = vld [vmem:[#allocation8 + $0x300] sm:$0xff]
    %v304 = vld [vmem:[#allocation8 + $0x308] sm:$0xff]
    %v305 = vld [vmem:[#allocation8 + $0x310] sm:$0xff]
    %v306 = vld [vmem:[#allocation8 + $0x318] sm:$0xff]
    %v307 = vld [vmem:[#allocation8 + $0x320] sm:$0xff]
    %v308 = vld [vmem:[#allocation8 + $0x328] sm:$0xff]
    %v309 = vld [vmem:[#allocation8 + $0x330] sm:$0xff]
    %v310 = vld [vmem:[#allocation8 + $0x338] sm:$0xff]
    %v311 = vld [vmem:[#allocation8 + $0x340] sm:$0xff]
    %v312 = vld [vmem:[#allocation8 + $0x348] sm:$0xff]
    %v313 = vld [vmem:[#allocation8 + $0x350] sm:$0xff]
    %v314 = vld [vmem:[#allocation8 + $0x358] sm:$0xff]
    %v315 = vld [vmem:[#allocation8 + $0x360] sm:$0xff]
    %v316 = vld [vmem:[#allocation8 + $0x368] sm:$0xff]
    %v317 = vld [vmem:[#allocation8 + $0x370] sm:$0xff]
    %v318 = vld [vmem:[#allocation8 + $0x378] sm:$0xff]
    %v319 = vld [vmem:[#allocation8 + $0x380] sm:$0xff]
    %v320 = vld [vmem:[#allocation8 + $0x388] sm:$0xff]
    %v321 = vld [vmem:[#allocation8 + $0x390] sm:$0xff]
    %v322 = vld [vmem:[#allocation8 + $0x398] sm:$0xff]
    %v323 = vld [vmem:[#allocation8 + $0x3a0] sm:$0xff]
    %v324 = vld [vmem:[#allocation8 + $0x3a8] sm:$0xff]
    %v325 = vld [vmem:[#allocation8 + $0x3b0] sm:$0xff]
    %v326 = vld [vmem:[#allocation8 + $0x3b8] sm:$0xff]
    %v327 = vld [vmem:[#allocation8 + $0x3c0] sm:$0xff]
    %v328 = vld [vmem:[#allocation8 + $0x3c8] sm:$0xff]
    %v329 = vld [vmem:[#allocation8 + $0x3d0] sm:$0xff]
    %v330 = vld [vmem:[#allocation8 + $0x3d8] sm:$0xff]
    %v331 = vld [vmem:[#allocation8 + $0x3e0] sm:$0xff]
    %v332 = vld [vmem:[#allocation8 + $0x3e8] sm:$0xff]
    %v333 = vld [vmem:[#allocation8 + $0x3f0] sm:$0xff]
    %v334 = vld [vmem:[#allocation8 + $0x3f8] sm:$0xff]
    %v335 = vld [vmem:[#allocation8 + $0x400] sm:$0xff]
    %v336 = vld [vmem:[#allocation8 + $0x408] sm:$0xff]
    %v337 = vld [vmem:[#allocation8 + $0x410] sm:$0xff]
    %v338 = vld [vmem:[#allocation8 + $0x418] sm:$0xff]
    %v339 = vld [vmem:[#allocation8 + $0x420] sm:$0xff]
    %v340 = vld [vmem:[#allocation8 + $0x428] sm:$0xff]
    %v341 = vld [vmem:[#allocation8 + $0x430] sm:$0xff]
    %v342 = vld [vmem:[#allocation8 + $0x438] sm:$0xff]
    %v343 = vld [vmem:[#allocation8 + $0x440] sm:$0xff]
    %v344 = vld [vmem:[#allocation8 + $0x448] sm:$0xff]
    %v345 = vld [vmem:[#allocation8 + $0x450] sm:$0xff]
    %v346 = vld [vmem:[#allocation8 + $0x458] sm:$0xff]
    %v347 = vld [vmem:[#allocation8 + $0x460] sm:$0xff]
    %v348 = vld [vmem:[#allocation8 + $0x468] sm:$0xff]
    %v349 = vld [vmem:[#allocation8 + $0x470] sm:$0xff]
    %v350 = vld [vmem:[#allocation8 + $0x478] sm:$0xff]
    %v351 = vld [vmem:[#allocation8 + $0x480] sm:$0xff]
    %v352 = vld [vmem:[#allocation8 + $0x488] sm:$0xff]
    %v353 = vld [vmem:[#allocation8 + $0x490] sm:$0xff]
    %v354 = vld [vmem:[#allocation8 + $0x498] sm:$0xff]
    %v355 = vld [vmem:[#allocation8 + $0x4a0] sm:$0xff]
    %v356 = vld [vmem:[#allocation8 + $0x4a8] sm:$0xff]
    %v357 = vld [vmem:[#allocation8 + $0x4b0] sm:$0xff]
    %v358 = vld [vmem:[#allocation8 + $0x4b8] sm:$0xff]
    %v359 = vld [vmem:[#allocation8 + $0x4c0] sm:$0xff]
    %v360 = vld [vmem:[#allocation8 + $0x4c8] sm:$0xff]
    %v361 = vld [vmem:[#allocation8 + $0x4d0] sm:$0xff]
    %v362 = vld [vmem:[#allocation8 + $0x4d8] sm:$0xff]
    %v363 = vld [vmem:[#allocation8 + $0x4e0] sm:$0xff]
    %v364 = vld [vmem:[#allocation8 + $0x4e8] sm:$0xff]
    %v365 = vld [vmem:[#allocation8 + $0x4f0] sm:$0xff]
    %v366 = vld [vmem:[#allocation8 + $0x4f8] sm:$0xff]
    %v367 = vld [vmem:[#allocation8 + $0x500] sm:$0xff]
    %v368 = vld [vmem:[#allocation8 + $0x508] sm:$0xff]
    %v369 = vld [vmem:[#allocation8 + $0x510] sm:$0xff]
    %v370 = vld [vmem:[#allocation8 + $0x518] sm:$0xff]
    %v371 = vld [vmem:[#allocation8 + $0x520] sm:$0xff]
    %v372 = vld [vmem:[#allocation8 + $0x528] sm:$0xff]
    %v373 = vld [vmem:[#allocation8 + $0x530] sm:$0xff]
    %v374 = vld [vmem:[#allocation8 + $0x538] sm:$0xff]
    %v375 = vld [vmem:[#allocation8 + $0x540] sm:$0xff]
    %v376 = vld [vmem:[#allocation8 + $0x548] sm:$0xff]
    %v377 = vld [vmem:[#allocation8 + $0x550] sm:$0xff]
    %v378 = vld [vmem:[#allocation8 + $0x558] sm:$0xff]
    %v379 = vld [vmem:[#allocation8 + $0x560] sm:$0xff]
    %v380 = vld [vmem:[#allocation8 + $0x568] sm:$0xff]
    %v381 = vld [vmem:[#allocation8 + $0x570] sm:$0xff]
    %v382 = vld [vmem:[#allocation8 + $0x578] sm:$0xff]
    %v383 = vld [vmem:[#allocation8 + $0x580] sm:$0xff]
    %v384 = vld [vmem:[#allocation8 + $0x588] sm:$0xff]
    %v385 = vld [vmem:[#allocation8 + $0x590] sm:$0xff]
    %v386 = vld [vmem:[#allocation8 + $0x598] sm:$0xff]
    %v387 = vld [vmem:[#allocation8 + $0x5a0] sm:$0xff]
    %v388 = vld [vmem:[#allocation8 + $0x5a8] sm:$0xff]
    %v389 = vld [vmem:[#allocation8 + $0x5b0] sm:$0xff]
    %v390 = vld [vmem:[#allocation8 + $0x5b8] sm:$0xff]
    %v391 = vld [vmem:[#allocation8 + $0x5c0] sm:$0xff]
    %v392 = vld [vmem:[#allocation8 + $0x5c8] sm:$0xff]
    %v393 = vld [vmem:[#allocation8 + $0x5d0] sm:$0xff]
    %v394 = vld [vmem:[#allocation8 + $0x5d8] sm:$0xff]
    %v395 = vld [vmem:[#allocation8 + $0x5e0] sm:$0xff]
    %v396 = vld [vmem:[#allocation8 + $0x5e8] sm:$0xff]
    %v397 = vld [vmem:[#allocation8 + $0x5f0] sm:$0xff]
    %v398 = vld [vmem:[#allocation8 + $0x5f8] sm:$0xff]
    %v399 = vld [vmem:[#allocation8 + $0x600] sm:$0xff]
    %v400 = vld [vmem:[#allocation8 + $0x608] sm:$0xff]
    %v401 = vld [vmem:[#allocation8 + $0x610] sm:$0xff]
    %v402 = vld [vmem:[#allocation8 + $0x618] sm:$0xff]
    %v403 = vld [vmem:[#allocation8 + $0x620] sm:$0xff]
    %v404 = vld [vmem:[#allocation8 + $0x628] sm:$0xff]
    %v405 = vld [vmem:[#allocation8 + $0x630] sm:$0xff]
    %v406 = vld [vmem:[#allocation8 + $0x638] sm:$0xff]
    %v407 = vld [vmem:[#allocation8 + $0x640] sm:$0xff]
    %v408 = vld [vmem:[#allocation8 + $0x648] sm:$0xff]
    %v409 = vld [vmem:[#allocation8 + $0x650] sm:$0xff]
    %v410 = vld [vmem:[#allocation8 + $0x658] sm:$0xff]
    %v411 = vld [vmem:[#allocation8 + $0x660] sm:$0xff]
    %v412 = vld [vmem:[#allocation8 + $0x668] sm:$0xff]
    %v413 = vld [vmem:[#allocation8 + $0x670] sm:$0xff]
    %v414 = vld [vmem:[#allocation8 + $0x678] sm:$0xff]
    %v415 = vld [vmem:[#allocation8 + $0x680] sm:$0xff]
    %v416 = vld [vmem:[#allocation8 + $0x688] sm:$0xff]
    %v417 = vld [vmem:[#allocation8 + $0x690] sm:$0xff]
    %v418 = vld [vmem:[#allocation8 + $0x698] sm:$0xff]
    %v419 = vld [vmem:[#allocation8 + $0x6a0] sm:$0xff]
    %v420 = vld [vmem:[#allocation8 + $0x6a8] sm:$0xff]
    %v421 = vld [vmem:[#allocation8 + $0x6b0] sm:$0xff]
    %v422 = vld [vmem:[#allocation8 + $0x6b8] sm:$0xff]
    %v423 = vld [vmem:[#allocation8 + $0x6c0] sm:$0xff]
    %v424 = vld [vmem:[#allocation8 + $0x6c8] sm:$0xff]
    %v425 = vld [vmem:[#allocation8 + $0x6d0] sm:$0xff]
    %v426 = vld [vmem:[#allocation8 + $0x6d8] sm:$0xff]
    %v427 = vld [vmem:[#allocation8 + $0x6e0] sm:$0xff]
    %v428 = vld [vmem:[#allocation8 + $0x6e8] sm:$0xff]
    %v429 = vld [vmem:[#allocation8 + $0x6f0] sm:$0xff]
    %v430 = vld [vmem:[#allocation8 + $0x6f8] sm:$0xff]
    %v431 = vld [vmem:[#allocation8 + $0x700] sm:$0xff]
    %v432 = vld [vmem:[#allocation8 + $0x708] sm:$0xff]
    %v433 = vld [vmem:[#allocation8 + $0x710] sm:$0xff]
    %v434 = vld [vmem:[#allocation8 + $0x718] sm:$0xff]
    %v435 = vld [vmem:[#allocation8 + $0x720] sm:$0xff]
    %v436 = vld [vmem:[#allocation8 + $0x728] sm:$0xff]
    %v437 = vld [vmem:[#allocation8 + $0x730] sm:$0xff]
    %v438 = vld [vmem:[#allocation8 + $0x738] sm:$0xff]
    %v439 = vld [vmem:[#allocation8 + $0x740] sm:$0xff]
    %v440 = vld [vmem:[#allocation8 + $0x748] sm:$0xff]
    %v441 = vld [vmem:[#allocation8 + $0x750] sm:$0xff]
    %v442 = vld [vmem:[#allocation8 + $0x758] sm:$0xff]
    %v443 = vld [vmem:[#allocation8 + $0x760] sm:$0xff]
    %v444 = vld [vmem:[#allocation8 + $0x768] sm:$0xff]
    %v445 = vld [vmem:[#allocation8 + $0x770] sm:$0xff]
    %v446 = vld [vmem:[#allocation8 + $0x778] sm:$0xff]
    %v447 = vld [vmem:[#allocation8 + $0x780] sm:$0xff]
    %v448 = vld [vmem:[#allocation8 + $0x788] sm:$0xff]
    %v449 = vld [vmem:[#allocation8 + $0x790] sm:$0xff]
    %v450 = vld [vmem:[#allocation8 + $0x798] sm:$0xff]
    %v451 = vld [vmem:[#allocation8 + $0x7a0] sm:$0xff]
    %v452 = vld [vmem:[#allocation8 + $0x7a8] sm:$0xff]
    %v453 = vld [vmem:[#allocation8 + $0x7b0] sm:$0xff]
    %v454 = vld [vmem:[#allocation8 + $0x7b8] sm:$0xff]
    %v455 = vld [vmem:[#allocation8 + $0x7c0] sm:$0xff]
    %v456 = vld [vmem:[#allocation8 + $0x7c8] sm:$0xff]
    %v457 = vld [vmem:[#allocation8 + $0x7d0] sm:$0xff]
    %v458 = vld [vmem:[#allocation8 + $0x7d8] sm:$0xff]
    %v459 = vld [vmem:[#allocation8 + $0x7e0] sm:$0xff]
    %v460 = vld [vmem:[#allocation8 + $0x7e8] sm:$0xff]
    %v461 = vld [vmem:[#allocation8 + $0x7f0] sm:$0xff]
    %v462 = vld [vmem:[#allocation8 + $0x7f8] sm:$0xff]
    %v463 = vld [vmem:[#allocation8 + $0x800] sm:$0xff]
    %v464 = vld [vmem:[#allocation8 + $0x808] sm:$0xff]
    %v465 = vld [vmem:[#allocation8 + $0x810] sm:$0xff]
    %v466 = vld [vmem:[#allocation8 + $0x818] sm:$0xff]
    %v467 = vld [vmem:[#allocation8 + $0x820] sm:$0xff]
    %v468 = vld [vmem:[#allocation8 + $0x828] sm:$0xff]
    %v469 = vld [vmem:[#allocation8 + $0x830] sm:$0xff]
    %v470 = vld [vmem:[#allocation8 + $0x838] sm:$0xff]
    %v471 = vld [vmem:[#allocation8 + $0x840] sm:$0xff]
    %v472 = vld [vmem:[#allocation8 + $0x848] sm:$0xff]
    %v473 = vld [vmem:[#allocation8 + $0x850] sm:$0xff]
    %v474 = vld [vmem:[#allocation8 + $0x858] sm:$0xff]
    %v475 = vld [vmem:[#allocation8 + $0x860] sm:$0xff]
    %v476 = vld [vmem:[#allocation8 + $0x868] sm:$0xff]
    %v477 = vld [vmem:[#allocation8 + $0x870] sm:$0xff]
    %v478 = vld [vmem:[#allocation8 + $0x878] sm:$0xff]
    %v479 = vld [vmem:[#allocation8 + $0x880] sm:$0xff]
    %v480 = vld [vmem:[#allocation8 + $0x888] sm:$0xff]
    %v481 = vld [vmem:[#allocation8 + $0x890] sm:$0xff]
    %v482 = vld [vmem:[#allocation8 + $0x898] sm:$0xff]
    %v483 = vld [vmem:[#allocation8 + $0x8a0] sm:$0xff]
    %v484 = vld [vmem:[#allocation8 + $0x8a8] sm:$0xff]
    %v485 = vld [vmem:[#allocation8 + $0x8b0] sm:$0xff]
    %v486 = vld [vmem:[#allocation8 + $0x8b8] sm:$0xff]
    %v487 = vld [vmem:[#allocation8 + $0x8c0] sm:$0xff]
    %v488 = vld [vmem:[#allocation8 + $0x8c8] sm:$0xff]
    %v489 = vld [vmem:[#allocation8 + $0x8d0] sm:$0xff]
    %v490 = vld [vmem:[#allocation8 + $0x8d8] sm:$0xff]
    %v491 = vld [vmem:[#allocation8 + $0x8e0] sm:$0xff]
    %v492 = vld [vmem:[#allocation8 + $0x8e8] sm:$0xff]
    %v493 = vld [vmem:[#allocation8 + $0x8f0] sm:$0xff]
    %v494 = vld [vmem:[#allocation8 + $0x8f8] sm:$0xff]
    %v495 = vld [vmem:[#allocation10] sm:$0x1]
    %v496 = vld [vmem:[%s4] sm:$0xff]
    %v497 = vld [vmem:[%s4 + $0x8] sm:$0xff]
    %v498 = vld [vmem:[%s4 + $0x10] sm:$0xff]
    %v499 = vld [vmem:[%s4 + $0x18] sm:$0xff]
    %v500 = vld [vmem:[%s4 + $0x20] sm:$0xff]
    %v501 = vld [vmem:[%s4 + $0x28] sm:$0xff]
    %v502 = vld [vmem:[%s4 + $0x30] sm:$0xff]
    %v503 = vld [vmem:[%s4 + $0x38] sm:$0xff]
    %v504 = vld [vmem:[%s4 + $0x40] sm:$0xff]
    %v505 = vld [vmem:[%s4 + $0x48] sm:$0xff]
    %v506 = vld [vmem:[%s4 + $0x50] sm:$0xff]
    %v507 = vld [vmem:[%s4 + $0x58] sm:$0xff]
    %v508 = vld [vmem:[%s4 + $0x60] sm:$0xff]
    %v509 = vld [vmem:[%s4 + $0x68] sm:$0xff]
    %v510 = vld [vmem:[%s4 + $0x70] sm:$0xff]
    %v511 = vld [vmem:[%s4 + $0x78] sm:$0xff]
    %v512 = vld [vmem:[#allocation4] sm:$0x1]
    %v513 = vld [vmem:[#allocation11] sm:$0x7]
    %v514 = vld [vmem:[#allocation13] sm:$0x7]
    %v515 = vld [vmem:[%s8] sm:$0xff]
    %v516 = vld [vmem:[%s8 + $0x8] sm:$0xff]
    %v517 = vld [vmem:[%s8 + $0x10] sm:$0xff]
    %v518 = vld [vmem:[%s8 + $0x18] sm:$0xff]
    %v519 = vld [vmem:[%s8 + $0x20] sm:$0xff]
    %v520 = vld [vmem:[%s8 + $0x28] sm:$0xff]
    %v521 = vld [vmem:[%s8 + $0x30] sm:$0xff]
    %v522 = vld [vmem:[%s8 + $0x38] sm:$0xff]
    %v523 = vld [vmem:[%s8 + $0x40] sm:$0xff]
    %v524 = vld [vmem:[%s8 + $0x48] sm:$0xff]
    %v525 = vld [vmem:[%s8 + $0x50] sm:$0xff]
    %v526 = vld [vmem:[%s8 + $0x58] sm:$0xff]
    %v527 = vld [vmem:[%s8 + $0x60] sm:$0xff]
    %v528 = vld [vmem:[%s8 + $0x68] sm:$0xff]
    %v529 = vld [vmem:[%s8 + $0x70] sm:$0xff]
    %v530 = vld [vmem:[%s8 + $0x78] sm:$0xff]
    %v531 = vld [vmem:[%s8 + $0x80] sm:$0xff]
    %v532 = vld [vmem:[%s8 + $0x88] sm:$0xff]
    %v533 = vld [vmem:[%s8 + $0x90] sm:$0xff]
    %v534 = vld [vmem:[%s8 + $0x98] sm:$0xff]
    %v535 = vld [vmem:[%s8 + $0xa0] sm:$0xff]
    %v536 = vld [vmem:[%s8 + $0xa8] sm:$0xff]
    %v537 = vld [vmem:[%s8 + $0xb0] sm:$0xff]
    %v538 = vld [vmem:[%s8 + $0xb8] sm:$0xff]
    %v539 = vld [vmem:[%s8 + $0xc0] sm:$0xff]
    %v540 = vld [vmem:[%s8 + $0xc8] sm:$0xff]
    %v541 = vld [vmem:[%s8 + $0xd0] sm:$0xff]
    %v542 = vld [vmem:[%s8 + $0xd8] sm:$0xff]
    %v543 = vld [vmem:[%s8 + $0xe0] sm:$0xff]
    %v544 = vld [vmem:[%s8 + $0xe8] sm:$0xff]
    %v545 = vld [vmem:[%s8 + $0xf0] sm:$0xff]
    %v546 = vld [vmem:[%s8 + $0xf8] sm:$0xff]
    %v547 = vld [vmem:[%s8 + $0x100] sm:$0xff]
    %v548 = vld [vmem:[%s8 + $0x108] sm:$0xff]
    %v549 = vld [vmem:[%s8 + $0x110] sm:$0xff]
    %v550 = vld [vmem:[%s8 + $0x118] sm:$0xff]
    %v551 = vld [vmem:[%s8 + $0x120] sm:$0xff]
    %v552 = vld [vmem:[%s8 + $0x128] sm:$0xff]
    %v553 = vld [vmem:[%s8 + $0x130] sm:$0xff]
    %v554 = vld [vmem:[%s8 + $0x138] sm:$0xff]
    %v555 = vld [vmem:[%s8 + $0x140] sm:$0xff]
    %v556 = vld [vmem:[%s8 + $0x148] sm:$0xff]
    %v557 = vld [vmem:[%s8 + $0x150] sm:$0xff]
    %v558 = vld [vmem:[%s8 + $0x158] sm:$0xff]
    %v559 = vld [vmem:[%s8 + $0x160] sm:$0xff]
    %v560 = vld [vmem:[%s8 + $0x168] sm:$0xff]
    %v561 = vld [vmem:[%s8 + $0x170] sm:$0xff]
    %v562 = vld [vmem:[%s8 + $0x178] sm:$0xff]
    %v563 = vld [vmem:[#allocation14] sm:$0x1]
    %v564 = vld [vmem:[#allocation16] sm:$0x1]
    %v565 = vld [vmem:[#allocation17] sm:$0x1]
    %v566 = vld [vmem:[%s12] sm:$0xff]
    %v567 = vld [vmem:[%s12 + $0x8] sm:$0xff]
    %v568 = vld [vmem:[%s12 + $0x10] sm:$0xff]
    %v569 = vld [vmem:[%s12 + $0x18] sm:$0xff]
    %v570 = vld [vmem:[#allocation19] sm:$0x7]
    %v571 = vld [vmem:[%s14] sm:$0xff]
    %v572 = vld [vmem:[%s14 + $0x8] sm:$0x3f]
    %v573 = vld [vmem:[#allocation20] sm:$0x1]
    %v574 = vld [vmem:[#allocation22] sm:$0x3]
    %v575 = vld [vmem:[#allocation23] sm:$0x3]
    %v576 = vlaneseq
    %v577 = vshrl.u32 %v576, 7
    %v578 = vadd.s32 %v577, 8
    %v579 = vld [vmem:[#allocation5] sm:$0xff]
    %v580 = vld [vmem:[#allocation5 + $0x8] sm:$0xff]
    %v581 = vld [vmem:[#allocation5 + $0x10] sm:$0xff]
    %v582 = vld [vmem:[#allocation5 + $0x18] sm:$0xff]
    %v583 = vld [vmem:[#allocation5 + $0x20] sm:$0xff]
    %v584 = vld [vmem:[#allocation5 + $0x28] sm:$0xff]
    %v585 = vld [vmem:[#allocation5 + $0x30] sm:$0xff]
    %v586 = vld [vmem:[#allocation5 + $0x38] sm:$0xff]
    %v587 = vld [vmem:[#allocation5 + $0x40] sm:$0xff]
    %v588 = vld [vmem:[#allocation5 + $0x48] sm:$0xff]
    %v589 = vld [vmem:[#allocation5 + $0x50] sm:$0xff]
    %v590 = vld [vmem:[#allocation5 + $0x58] sm:$0xff]
    %591 = vmatprep.subr.mxu0 %v208
    %592 = vmatpush1.msra.mxu0 %v207
    %593 = vmatprep.subr.mxu0 %v211
    %594 = vmatpush1.msra.mxu0 %v210
    %595 = vmatprep.subr.mxu0 %v214
    %596 = vmatpush1.msra.mxu0 %v213
    %597 = vmatprep.subr.mxu0 %v217
    %598 = vmatpush1.msra.mxu0 %v216
    %599 = vmatprep.subr.mxu0 %v220
    %600 = vmatpush1.msra.mxu0 %v219
    %601 = vmatprep.subr.mxu0 %v223
    %602 = vmatpush1.msra.mxu0 %v222
    %603 = vmatprep.subr.mxu0 %v226
    %604 = vmatpush1.msra.mxu0 %v225
    %605 = vmatprep.subr.mxu0 %v229
    %606 = vmatpush1.msra.mxu0 %v228
    %607 = vmatprep.subr.mxu0 %v232
    %608 = vmatpush1.msra.mxu0 %v231
    %609 = vmatprep.subr.mxu0 %v235
    %610 = vmatpush1.msra.mxu0 %v234
    %611 = vmatprep.subr.mxu0 %v238
    %612 = vmatpush1.msra.mxu0 %v237
    %613 = vmatprep.subr.mxu0 %v241
    %614 = vmatpush1.msra.mxu0 %v240
    %615 = vmatprep.subr.mxu0 %v244
    %616 = vmatpush1.msra.mxu0 %v243
    %617 = vmatprep.subr.mxu0 %v247
    %618 = vmatpush1.msra.mxu0 %v246
    %619 = vmatprep.subr.mxu0 %v250
    %620 = vmatpush1.msra.mxu0 %v249
    %621 = vmatprep.subr.mxu0 %v253
    %622 = vmatpush1.msra.mxu0 %v252
    %623 = vmatprep.subr.mxu0 %v256
    %624 = vmatpush1.msra.mxu0 %v255
    %625 = vmatprep.subr.mxu0 %v259
    %626 = vmatpush1.msra.mxu0 %v258
    %627 = vmatprep.subr.mxu0 %v262
    %628 = vmatpush1.msra.mxu0 %v261
    %629 = vmatprep.subr.mxu0 %v265
    %630 = vmatpush1.msra.mxu0 %v264
    %631 = vmatprep.subr.mxu0 %v268
    %632 = vmatpush1.msra.mxu0 %v267
    %633 = vmatprep.subr.mxu0 %v271
    %634 = vmatpush1.msra.mxu0 %v270
    %635 = vmatprep.subr.mxu0 %v274
    %636 = vmatpush1.msra.mxu0 %v273
    %637 = vmatprep.subr.mxu0 %v277
    %638 = vmatpush1.msra.mxu0 %v276
    %639 = vmatprep.subr.mxu0 %v280
    %640 = vmatpush1.msra.mxu0 %v279
    %641 = vmatprep.subr.mxu0 %v283
    %642 = vmatpush1.msra.mxu0 %v282
    %643 = vmatprep.subr.mxu0 %v286
    %644 = vmatpush1.msra.mxu0 %v285
    %645 = vmatprep.subr.mxu0 %v289
    %646 = vmatpush1.msra.mxu0 %v288
    %647 = vmatprep.subr.mxu0 %v292
    %648 = vmatpush1.msra.mxu0 %v291
    %649 = vmatprep.subr.mxu0 %v295
    %650 = vmatpush1.msra.mxu0 %v294
    %651 = vmatprep.subr.mxu0 %v298
    %652 = vmatpush1.msra.mxu0 %v297
    %653 = vmatprep.subr.mxu0 %v301
    %654 = vmatpush1.msra.mxu0 %v300
    %655 = vmatprep.mubr.f32.mxu0 %v580
    %656 = vmatmul.mubr.f32.gmra.mrb[0].mxu0 %v579
    %v657 = vpop.f32.mrb[0].mxu0
    %v658 = vadd.f32 0.0, %v657
    %v659 = vpop.f32.mrb[0].mxu0
    %v660 = vadd.f32 0.0, %v659
    %661 = vmatprep.mubr.f32.mxu0 %v586
    %662 = vmatmul.mubr.f32.gmra.mrb[0].mxu0 %v585
    %v663 = vpop.f32.mrb[0].mxu0
    %v664 = vadd.f32 0.0, %v663
    %v665 = vpop.f32.mrb[0].mxu0
    %v666 = vadd.f32 0.0, %v665
    %667 = vdwg.mxu0
    %668 = vmatprep.subr.mxu0 %v304
    %669 = vmatpush1.msra.mxu0 %v303
    %670 = vmatprep.subr.mxu0 %v307
    %671 = vmatpush1.msra.mxu0 %v306
    %672 = vmatprep.subr.mxu0 %v310
    %673 = vmatpush1.msra.mxu0 %v309
    %674 = vmatprep.subr.mxu0 %v313
    %675 = vmatpush1.msra.mxu0 %v312
    %676 = vmatprep.subr.mxu0 %v316
    %677 = vmatpush1.msra.mxu0 %v315
    %678 = vmatprep.subr.mxu0 %v319
    %679 = vmatpush1.msra.mxu0 %v318
    %680 = vmatprep.subr.mxu0 %v322
    %681 = vmatpush1.msra.mxu0 %v321
    %682 = vmatprep.subr.mxu0 %v325
    %683 = vmatpush1.msra.mxu0 %v324
    %684 = vmatprep.subr.mxu0 %v328
    %685 = vmatpush1.msra.mxu0 %v327
    %686 = vmatprep.subr.mxu0 %v331
    %687 = vmatpush1.msra.mxu0 %v330
    %688 = vmatprep.subr.mxu0 %v334
    %689 = vmatpush1.msra.mxu0 %v333
    %690 = vmatprep.subr.mxu0 %v337
    %691 = vmatpush1.msra.mxu0 %v336
    %692 = vmatprep.subr.mxu0 %v340
    %693 = vmatpush1.msra.mxu0 %v339
    %694 = vmatprep.subr.mxu0 %v343
    %695 = vmatpush1.msra.mxu0 %v342
    %696 = vmatprep.subr.mxu0 %v346
    %697 = vmatpush1.msra.mxu0 %v345
    %698 = vmatprep.subr.mxu0 %v349
    %699 = vmatpush1.msra.mxu0 %v348
    %700 = vmatprep.subr.mxu0 %v352
    %701 = vmatpush1.msra.mxu0 %v351
    %702 = vmatprep.subr.mxu0 %v355
    %703 = vmatpush1.msra.mxu0 %v354
    %704 = vmatprep.subr.mxu0 %v358
    %705 = vmatpush1.msra.mxu0 %v357
    %706 = vmatprep.subr.mxu0 %v361
    %707 = vmatpush1.msra.mxu0 %v360
    %708 = vmatprep.subr.mxu0 %v364
    %709 = vmatpush1.msra.mxu0 %v363
    %710 = vmatprep.subr.mxu0 %v367
    %711 = vmatpush1.msra.mxu0 %v366
    %712 = vmatprep.subr.mxu0 %v370
    %713 = vmatpush1.msra.mxu0 %v369
    %714 = vmatprep.subr.mxu0 %v373
    %715 = vmatpush1.msra.mxu0 %v372
    %716 = vmatprep.subr.mxu0 %v376
    %717 = vmatpush1.msra.mxu0 %v375
    %718 = vmatprep.subr.mxu0 %v379
    %719 = vmatpush1.msra.mxu0 %v378
    %720 = vmatprep.subr.mxu0 %v382
    %721 = vmatpush1.msra.mxu0 %v381
    %722 = vmatprep.subr.mxu0 %v385
    %723 = vmatpush1.msra.mxu0 %v384
    %724 = vmatprep.subr.mxu0 %v388
    %725 = vmatpush1.msra.mxu0 %v387
    %726 = vmatprep.subr.mxu0 %v391
    %727 = vmatpush1.msra.mxu0 %v390
    %728 = vmatprep.subr.mxu0 %v394
    %729 = vmatpush1.msra.mxu0 %v393
    %730 = vmatprep.subr.mxu0 %v397
    %731 = vmatpush1.msra.mxu0 %v396
    %732 = vmatprep.mubr.f32.mxu0 %v582
    %733 = vmatmul.mubr.f32.gmra.mrb[0].mxu0 %v581
    %v734 = vpop.f32.mrb[0].mxu0
    %v735 = vadd.f32 %v658, %v734
    %v736 = vpop.f32.mrb[0].mxu0
    %v737 = vadd.f32 %v660, %v736
    %738 = vmatprep.mubr.f32.mxu0 %v588
    %739 = vmatmul.mubr.f32.gmra.mrb[0].mxu0 %v587
    %v740 = vpop.f32.mrb[0].mxu0
    %v741 = vadd.f32 %v664, %v740
    %v742 = vpop.f32.mrb[0].mxu0
    %v743 = vadd.f32 %v666, %v742
    %744 = vdwg.mxu0
    %745 = vmatprep.subr.mxu0 %v400
    %746 = vmatpush1.msra.mxu0 %v399
    %747 = vmatprep.subr.mxu0 %v403
    %748 = vmatpush1.msra.mxu0 %v402
    %749 = vmatprep.subr.mxu0 %v406
    %750 = vmatpush1.msra.mxu0 %v405
    %751 = vmatprep.subr.mxu0 %v409
    %752 = vmatpush1.msra.mxu0 %v408
    %753 = vmatprep.subr.mxu0 %v412
    %754 = vmatpush1.msra.mxu0 %v411
    %755 = vmatprep.subr.mxu0 %v415
    %756 = vmatpush1.msra.mxu0 %v414
    %757 = vmatprep.subr.mxu0 %v418
    %758 = vmatpush1.msra.mxu0 %v417
    %759 = vmatprep.subr.mxu0 %v421
    %760 = vmatpush1.msra.mxu0 %v420
    %761 = vmatprep.subr.mxu0 %v424
    %762 = vmatpush1.msra.mxu0 %v423
    %763 = vmatprep.subr.mxu0 %v427
    %764 = vmatpush1.msra.mxu0 %v426
    %765 = vmatprep.subr.mxu0 %v430
    %766 = vmatpush1.msra.mxu0 %v429
    %767 = vmatprep.subr.mxu0 %v433
    %768 = vmatpush1.msra.mxu0 %v432
    %769 = vmatprep.subr.mxu0 %v436
    %770 = vmatpush1.msra.mxu0 %v435
    %771 = vmatprep.subr.mxu0 %v439
    %772 = vmatpush1.msra.mxu0 %v438
    %773 = vmatprep.subr.mxu0 %v442
    %774 = vmatpush1.msra.mxu0 %v441
    %775 = vmatprep.subr.mxu0 %v445
    %776 = vmatpush1.msra.mxu0 %v444
    %777 = vmatprep.subr.mxu0 %v448
    %778 = vmatpush1.msra.mxu0 %v447
    %779 = vmatprep.subr.mxu0 %v451
    %780 = vmatpush1.msra.mxu0 %v450
    %781 = vmatprep.subr.mxu0 %v454
    %782 = vmatpush1.msra.mxu0 %v453
    %783 = vmatprep.subr.mxu0 %v457
    %784 = vmatpush1.msra.mxu0 %v456
    %785 = vmatprep.subr.mxu0 %v460
    %786 = vmatpush1.msra.mxu0 %v459
    %787 = vmatprep.subr.mxu0 %v463
    %788 = vmatpush1.msra.mxu0 %v462
    %789 = vmatprep.subr.mxu0 %v466
    %790 = vmatpush1.msra.mxu0 %v465
    %791 = vmatprep.subr.mxu0 %v469
    %792 = vmatpush1.msra.mxu0 %v468
    %793 = vmatprep.subr.mxu0 %v472
    %794 = vmatpush1.msra.mxu0 %v471
    %795 = vmatprep.subr.mxu0 %v475
    %796 = vmatpush1.msra.mxu0 %v474
    %797 = vmatprep.subr.mxu0 %v478
    %798 = vmatpush1.msra.mxu0 %v477
    %799 = vmatprep.subr.mxu0 %v481
    %800 = vmatpush1.msra.mxu0 %v480
    %801 = vmatprep.subr.mxu0 %v484
    %802 = vmatpush1.msra.mxu0 %v483
    %803 = vmatprep.subr.mxu0 %v487
    %804 = vmatpush1.msra.mxu0 %v486
    %805 = vmatprep.subr.mxu0 %v490
    %806 = vmatpush1.msra.mxu0 %v489
    %807 = vmatprep.subr.mxu0 %v493
    %808 = vmatpush1.msra.mxu0 %v492
    %809 = vmatprep.mubr.f32.mxu0 %v584
    %810 = vmatmul.mubr.f32.gmra.mrb[0].mxu0 %v583
    %v811 = vpop.f32.mrb[0].mxu0
    %v812 = vadd.f32 %v735, %v811
    %v813 = vpop.f32.mrb[0].mxu0
    %v814 = vadd.f32 %v737, %v813
    %815 = vmatprep.mubr.f32.mxu0 %v590
    %816 = vmatmul.mubr.f32.gmra.mrb[0].mxu0 %v589
    %v817 = vpop.f32.mrb[0].mxu0
    %v818 = vadd.f32 %v741, %v817
    %v819 = vpop.f32.mrb[0].mxu0
    %v820 = vadd.f32 %v743, %v819
    %821 = vdwg.mxu0
    %822 = vmatprep.subr.mxu0 0.0
    %823 = vmatpush1.msra.mxu0 %v209
    %824 = vmatprep.subr.mxu0 0.0
    %825 = vmatpush1.msra.mxu0 %v212
    %826 = vmatprep.subr.mxu0 0.0
    %827 = vmatpush1.msra.mxu0 %v215
    %828 = vmatprep.subr.mxu0 0.0
    %829 = vmatpush1.msra.mxu0 %v218
    %830 = vmatprep.subr.mxu0 0.0
    %831 = vmatpush1.msra.mxu0 %v221
    %832 = vmatprep.subr.mxu0 0.0
    %833 = vmatpush1.msra.mxu0 %v224
    %834 = vmatprep.subr.mxu0 0.0
    %835 = vmatpush1.msra.mxu0 %v227
    %836 = vmatprep.subr.mxu0 0.0
    %837 = vmatpush1.msra.mxu0 %v230
    %838 = vmatprep.subr.mxu0 0.0
    %839 = vmatpush1.msra.mxu0 %v233
    %840 = vmatprep.subr.mxu0 0.0
    %841 = vmatpush1.msra.mxu0 %v236
    %842 = vmatprep.subr.mxu0 0.0
    %843 = vmatpush1.msra.mxu0 %v239
    %844 = vmatprep.subr.mxu0 0.0
    %845 = vmatpush1.msra.mxu0 %v242
    %846 = vmatprep.subr.mxu0 0.0
    %847 = vmatpush1.msra.mxu0 %v245
    %848 = vmatprep.subr.mxu0 0.0
    %849 = vmatpush1.msra.mxu0 %v248
    %850 = vmatprep.subr.mxu0 0.0
    %851 = vmatpush1.msra.mxu0 %v251
    %852 = vmatprep.subr.mxu0 0.0
    %853 = vmatpush1.msra.mxu0 %v254
    %854 = vmatprep.subr.mxu0 0.0
    %855 = vmatpush1.msra.mxu0 %v257
    %856 = vmatprep.subr.mxu0 0.0
    %857 = vmatpush1.msra.mxu0 %v260
    %858 = vmatprep.subr.mxu0 0.0
    %859 = vmatpush1.msra.mxu0 %v263
    %860 = vmatprep.subr.mxu0 0.0
    %861 = vmatpush1.msra.mxu0 %v266
    %862 = vmatprep.subr.mxu0 0.0
    %863 = vmatpush1.msra.mxu0 %v269
    %864 = vmatprep.subr.mxu0 0.0
    %865 = vmatpush1.msra.mxu0 %v272
    %866 = vmatprep.subr.mxu0 0.0
    %867 = vmatpush1.msra.mxu0 %v275
    %868 = vmatprep.subr.mxu0 0.0
    %869 = vmatpush1.msra.mxu0 %v278
    %870 = vmatprep.subr.mxu0 0.0
    %871 = vmatpush1.msra.mxu0 %v281
    %872 = vmatprep.subr.mxu0 0.0
    %873 = vmatpush1.msra.mxu0 %v284
    %874 = vmatprep.subr.mxu0 0.0
    %875 = vmatpush1.msra.mxu0 %v287
    %876 = vmatprep.subr.mxu0 0.0
    %877 = vmatpush1.msra.mxu0 %v290
    %878 = vmatprep.subr.mxu0 0.0
    %879 = vmatpush1.msra.mxu0 %v293
    %880 = vmatprep.subr.mxu0 0.0
    %881 = vmatpush1.msra.mxu0 %v296
    %882 = vmatprep.subr.mxu0 0.0
    %883 = vmatpush1.msra.mxu0 %v299
    %884 = vmatprep.subr.mxu0 0.0
    %885 = vmatpush1.msra.mxu0 %v302
    %886 = vmatprep.mubr.f32.mxu0 %v580
    %887 = vmatmul.mubr.f32.gmra.mrb[0].mxu0 %v579
    %v888 = vpop.f32.mrb[0].mxu0
    %v889 = vadd.f32 0.0, %v888
    %v890 = vpop.f32.mrb[0].mxu0
    %891 = vmatprep.mubr.f32.mxu0 %v586
    %892 = vmatmul.mubr.f32.gmra.mrb[0].mxu0 %v585
    %v893 = vpop.f32.mrb[0].mxu0
    %v894 = vadd.f32 0.0, %v893
    %v895 = vpop.f32.mrb[0].mxu0
    %896 = vdwg.mxu0
    %897 = vmatprep.subr.mxu0 0.0
    %898 = vmatpush1.msra.mxu0 %v305
    %899 = vmatprep.subr.mxu0 0.0
    %900 = vmatpush1.msra.mxu0 %v308
    %901 = vmatprep.subr.mxu0 0.0
    %902 = vmatpush1.msra.mxu0 %v311
    %903 = vmatprep.subr.mxu0 0.0
    %904 = vmatpush1.msra.mxu0 %v314
    %905 = vmatprep.subr.mxu0 0.0
    %906 = vmatpush1.msra.mxu0 %v317
    %907 = vmatprep.subr.mxu0 0.0
    %908 = vmatpush1.msra.mxu0 %v320
    %909 = vmatprep.subr.mxu0 0.0
    %910 = vmatpush1.msra.mxu0 %v323
    %911 = vmatprep.subr.mxu0 0.0
    %912 = vmatpush1.msra.mxu0 %v326
    %913 = vmatprep.subr.mxu0 0.0
    %914 = vmatpush1.msra.mxu0 %v329
    %915 = vmatprep.subr.mxu0 0.0
    %916 = vmatpush1.msra.mxu0 %v332
    %917 = vmatprep.subr.mxu0 0.0
    %918 = vmatpush1.msra.mxu0 %v335
    %919 = vmatprep.subr.mxu0 0.0
    %920 = vmatpush1.msra.mxu0 %v338
    %921 = vmatprep.subr.mxu0 0.0
    %922 = vmatpush1.msra.mxu0 %v341
    %923 = vmatprep.subr.mxu0 0.0
    %924 = vmatpush1.msra.mxu0 %v344
    %925 = vmatprep.subr.mxu0 0.0
    %926 = vmatpush1.msra.mxu0 %v347
    %927 = vmatprep.subr.mxu0 0.0
    %928 = vmatpush1.msra.mxu0 %v350
    %929 = vmatprep.subr.mxu0 0.0
    %930 = vmatpush1.msra.mxu0 %v353
    %931 = vmatprep.subr.mxu0 0.0
    %932 = vmatpush1.msra.mxu0 %v356
    %933 = vmatprep.subr.mxu0 0.0
    %934 = vmatpush1.msra.mxu0 %v359
    %935 = vmatprep.subr.mxu0 0.0
    %936 = vmatpush1.msra.mxu0 %v362
    %937 = vmatprep.subr.mxu0 0.0
    %938 = vmatpush1.msra.mxu0 %v365
    %939 = vmatprep.subr.mxu0 0.0
    %940 = vmatpush1.msra.mxu0 %v368
    %941 = vmatprep.subr.mxu0 0.0
    %942 = vmatpush1.msra.mxu0 %v371
    %943 = vmatprep.subr.mxu0 0.0
    %944 = vmatpush1.msra.mxu0 %v374
    %945 = vmatprep.subr.mxu0 0.0
    %946 = vmatpush1.msra.mxu0 %v377
    %947 = vmatprep.subr.mxu0 0.0
    %948 = vmatpush1.msra.mxu0 %v380
    %949 = vmatprep.subr.mxu0 0.0
    %950 = vmatpush1.msra.mxu0 %v383
    %951 = vmatprep.subr.mxu0 0.0
    %952 = vmatpush1.msra.mxu0 %v386
    %953 = vmatprep.subr.mxu0 0.0
    %954 = vmatpush1.msra.mxu0 %v389
    %955 = vmatprep.subr.mxu0 0.0
    %956 = vmatpush1.msra.mxu0 %v392
    %957 = vmatprep.subr.mxu0 0.0
    %958 = vmatpush1.msra.mxu0 %v395
    %959 = vmatprep.subr.mxu0 0.0
    %960 = vmatpush1.msra.mxu0 %v398
    %961 = vmatprep.mubr.f32.mxu0 %v582
    %962 = vmatmul.mubr.f32.gmra.mrb[0].mxu0 %v581
    %v963 = vpop.f32.mrb[0].mxu0
    %v964 = vadd.f32 %v889, %v963
    %v965 = vpop.f32.mrb[0].mxu0
    %966 = vmatprep.mubr.f32.mxu0 %v588
    %967 = vmatmul.mubr.f32.gmra.mrb[0].mxu0 %v587
    %v968 = vpop.f32.mrb[0].mxu0
    %v969 = vadd.f32 %v894, %v968
    %v970 = vpop.f32.mrb[0].mxu0
    %971 = vdwg.mxu0
    %972 = vmatprep.subr.mxu0 0.0
    %973 = vmatpush1.msra.mxu0 %v401
    %974 = vmatprep.subr.mxu0 0.0
    %975 = vmatpush1.msra.mxu0 %v404
    %976 = vmatprep.subr.mxu0 0.0
    %977 = vmatpush1.msra.mxu0 %v407
    %978 = vmatprep.subr.mxu0 0.0
    %979 = vmatpush1.msra.mxu0 %v410
    %980 = vmatprep.subr.mxu0 0.0
    %981 = vmatpush1.msra.mxu0 %v413
    %982 = vmatprep.subr.mxu0 0.0
    %983 = vmatpush1.msra.mxu0 %v416
    %984 = vmatprep.subr.mxu0 0.0
    %985 = vmatpush1.msra.mxu0 %v419
    %986 = vmatprep.subr.mxu0 0.0
    %987 = vmatpush1.msra.mxu0 %v422
    %988 = vmatprep.subr.mxu0 0.0
    %989 = vmatpush1.msra.mxu0 %v425
    %990 = vmatprep.subr.mxu0 0.0
    %991 = vmatpush1.msra.mxu0 %v428
    %992 = vmatprep.subr.mxu0 0.0
    %993 = vmatpush1.msra.mxu0 %v431
    %994 = vmatprep.subr.mxu0 0.0
    %995 = vmatpush1.msra.mxu0 %v434
    %996 = vmatprep.subr.mxu0 0.0
    %997 = vmatpush1.msra.mxu0 %v437
    %998 = vmatprep.subr.mxu0 0.0
    %999 = vmatpush1.msra.mxu0 %v440
    %1000 = vmatprep.subr.mxu0 0.0
    %1001 = vmatpush1.msra.mxu0 %v443
    %1002 = vmatprep.subr.mxu0 0.0
    %1003 = vmatpush1.msra.mxu0 %v446
    %1004 = vmatprep.subr.mxu0 0.0
    %1005 = vmatpush1.msra.mxu0 %v449
    %1006 = vmatprep.subr.mxu0 0.0
    %1007 = vmatpush1.msra.mxu0 %v452
    %1008 = vmatprep.subr.mxu0 0.0
    %1009 = vmatpush1.msra.mxu0 %v455
    %1010 = vmatprep.subr.mxu0 0.0
    %1011 = vmatpush1.msra.mxu0 %v458
    %1012 = vmatprep.subr.mxu0 0.0
    %1013 = vmatpush1.msra.mxu0 %v461
    %1014 = vmatprep.subr.mxu0 0.0
    %1015 = vmatpush1.msra.mxu0 %v464
    %1016 = vmatprep.subr.mxu0 0.0
    %1017 = vmatpush1.msra.mxu0 %v467
    %1018 = vmatprep.subr.mxu0 0.0
    %1019 = vmatpush1.msra.mxu0 %v470
    %1020 = vmatprep.subr.mxu0 0.0
    %1021 = vmatpush1.msra.mxu0 %v473
    %1022 = vmatprep.subr.mxu0 0.0
    %1023 = vmatpush1.msra.mxu0 %v476
    %1024 = vmatprep.subr.mxu0 0.0
    %1025 = vmatpush1.msra.mxu0 %v479
    %1026 = vmatprep.subr.mxu0 0.0
    %1027 = vmatpush1.msra.mxu0 %v482
    %1028 = vmatprep.subr.mxu0 0.0
    %1029 = vmatpush1.msra.mxu0 %v485
    %1030 = vmatprep.subr.mxu0 0.0
    %1031 = vmatpush1.msra.mxu0 %v488
    %1032 = vmatprep.subr.mxu0 0.0
    %1033 = vmatpush1.msra.mxu0 %v491
    %1034 = vmatprep.subr.mxu0 0.0
    %1035 = vmatpush1.msra.mxu0 %v494
    %1036 = vmatprep.mubr.f32.mxu0 %v584
    %1037 = vmatmul.mubr.f32.gmra.mrb[0].mxu0 %v583
    %v1038 = vpop.f32.mrb[0].mxu0
    %v1039 = vadd.f32 %v964, %v1038
    %v1040 = vpop.f32.mrb[0].mxu0
    %1041 = vmatprep.mubr.f32.mxu0 %v590
    %1042 = vmatmul.mubr.f32.gmra.mrb[0].mxu0 %v589
    %v1043 = vpop.f32.mrb[0].mxu0
    %v1044 = vadd.f32 %v969, %v1043
    %v1045 = vpop.f32.mrb[0].mxu0
    %1046 = vdwg.mxu0
    %v1047 = vrot.slane %v812, 7
    %v1048 = vrot.slane %v818, 7
    %vm1049 = vcmp.lt.s32.totalorder %v577, 1
    %v1050 = vsel %vm1049, %v1047, %v1048
    %v1051 = vsel %vm1049, %v1048, %v1047
    %v1052 = vadd.s32 %v577, 4294967295
    %v1053 = vadd.s32 %v578, 4294967295
    %vm1054 = vcmp.ge.s32.totalorder %v1052, 0
    %vm1055 = vcmp.ge.s32.totalorder %v1053, 0
    %vm1056 = vcmp.lt.s32.totalorder %v1052, 16
    %vm1057 = vcmp.lt.s32.totalorder %v1053, 16
    %vm1058 = vmand %vm1054, %vm1056
    %vm1059 = vmand %vm1055, %vm1057
    %v1060 = vsel %vm1058, 1, 0
    %v1061 = vsel %vm1059, 1, 0
    %vm1062 = vcmp.eq.s32.totalorder %v1060, 1
    %vm1063 = vcmp.eq.s32.totalorder %v1061, 1
    %v1064 = vsel %vm1062, %v1051, 0.0
    %v1065 = vsel %vm1063, %v1050, 0.0
    %v1066 = vadd.f32 %v1064, %v814
    %v1067 = vadd.f32 %v1065, %v820
    %v1068 = vrot.slane %v1039, 1
    %v1069 = vrot.slane %v1044, 1
    %vm1070 = vcmp.lt.s32.totalorder %v577, 7
    %v1071 = vsel %vm1070, %v1068, %v1069
    %v1072 = vsel %vm1070, %v1069, %v1068
    %v1073 = vadd.s32 %v577, 1
    %v1074 = vadd.s32 %v578, 1
    %vm1075 = vcmp.ge.s32.totalorder %v1073, 0
    %vm1076 = vcmp.ge.s32.totalorder %v1074, 0
    %vm1077 = vcmp.lt.s32.totalorder %v1073, 16
    %vm1078 = vcmp.lt.s32.totalorder %v1074, 16
    %vm1079 = vmand %vm1075, %vm1077
    %vm1080 = vmand %vm1076, %vm1078
    %v1081 = vsel %vm1079, 1, 0
    %v1082 = vsel %vm1080, 1, 0
    %vm1083 = vcmp.eq.s32.totalorder %v1081, 1
    %vm1084 = vcmp.eq.s32.totalorder %v1082, 1
    %v1085 = vsel %vm1083, %v1071, 0.0
    %v1086 = vsel %vm1084, %v1072, 0.0
    %v1087 = vadd.f32 %v1066, %v1085
    %v1088 = vadd.f32 %v1067, %v1086
    %v1090 = vlaneseq
    %v1091 = vshrl.u32 %v1090, 7
    %v1092 = vsub.s32 0, %v1091
    %v1093 = vrot.slane %v495, %v1092
    %v1095 = vadd.f32 %v1087, %v1093
    %v1096 = vadd.f32 %v1088, %v1093
    %v1098 = vlaneseq
    %v1099 = vshrl.u32 %v1098, 7
    %v1100 = vsub.s32 0, %v1099
    %v1101 = vrot.slane %v512, %v1100
    %1103 = vmatprep.subr.mxu0 0.0
    %1104 = vmatpush1.msra.mxu0 %v496
    %1105 = vmatprep.subr.mxu0 0.0
    %1106 = vmatpush1.msra.mxu0 %v497
    %1107 = vmatprep.subr.mxu0 0.0
    %1108 = vmatpush1.msra.mxu0 %v498
    %1109 = vmatprep.subr.mxu0 0.0
    %1110 = vmatpush1.msra.mxu0 %v499
    %1111 = vmatprep.subr.mxu0 0.0
    %1112 = vmatpush1.msra.mxu0 %v500
    %1113 = vmatprep.subr.mxu0 0.0
    %1114 = vmatpush1.msra.mxu0 %v501
    %1115 = vmatprep.subr.mxu0 0.0
    %1116 = vmatpush1.msra.mxu0 %v502
    %1117 = vmatprep.subr.mxu0 0.0
    %1118 = vmatpush1.msra.mxu0 %v503
    %1119 = vmatprep.subr.mxu0 0.0
    %1120 = vmatpush1.msra.mxu0 %v504
    %1121 = vmatprep.subr.mxu0 0.0
    %1122 = vmatpush1.msra.mxu0 %v505
    %1123 = vmatprep.subr.mxu0 0.0
    %1124 = vmatpush1.msra.mxu0 %v506
    %1125 = vmatprep.subr.mxu0 0.0
    %1126 = vmatpush1.msra.mxu0 %v507
    %1127 = vmatprep.subr.mxu0 0.0
    %1128 = vmatpush1.msra.mxu0 %v508
    %1129 = vmatprep.subr.mxu0 0.0
    %1130 = vmatpush1.msra.mxu0 %v509
    %1131 = vmatprep.subr.mxu0 0.0
    %1132 = vmatpush1.msra.mxu0 %v510
    %1133 = vmatprep.subr.mxu0 0.0
    %1134 = vmatpush1.msra.mxu0 %v511
    %1135 = vmatprep.subr.mxu0 0.0
    %1136 = vmatpush1.msra.mxu0 0.0
    %1137 = vmatprep.subr.mxu0 0.0
    %1138 = vmatpush1.msra.mxu0 0.0
    %1139 = vmatprep.subr.mxu0 0.0
    %1140 = vmatpush1.msra.mxu0 0.0
    %1141 = vmatprep.subr.mxu0 0.0
    %1142 = vmatpush1.msra.mxu0 0.0
    %1143 = vmatprep.subr.mxu0 0.0
    %1144 = vmatpush1.msra.mxu0 0.0
    %1145 = vmatprep.subr.mxu0 0.0
    %1146 = vmatpush1.msra.mxu0 0.0
    %1147 = vmatprep.subr.mxu0 0.0
    %1148 = vmatpush1.msra.mxu0 0.0
    %1149 = vmatprep.subr.mxu0 0.0
    %1150 = vmatpush1.msra.mxu0 0.0
    %1151 = vmatprep.subr.mxu0 0.0
    %1152 = vmatpush1.msra.mxu0 0.0
    %1153 = vmatprep.subr.mxu0 0.0
    %1154 = vmatpush1.msra.mxu0 0.0
    %1155 = vmatprep.subr.mxu0 0.0
    %1156 = vmatpush1.msra.mxu0 0.0
    %1157 = vmatprep.subr.mxu0 0.0
    %1158 = vmatpush1.msra.mxu0 0.0
    %1159 = vmatprep.subr.mxu0 0.0
    %1160 = vmatpush1.msra.mxu0 0.0
    %1161 = vmatprep.subr.mxu0 0.0
    %1162 = vmatpush1.msra.mxu0 0.0
    %1163 = vmatprep.subr.mxu0 0.0
    %1164 = vmatpush1.msra.mxu0 0.0
    %1165 = vmatprep.subr.mxu0 0.0
    %1166 = vmatpush1.msra.mxu0 0.0
    %1167 = vmatprep.mubr.f32.mxu0 0.0
    %1168 = vmatmul.mubr.f32.gmra.mrb[0].mxu0 %v1095
    %v1169 = vpop.f32.mrb[0].mxu0
    %v1170 = vadd.f32 %v1101, %v1169
    %v1171 = vpop.f32.mrb[0].mxu0
    %1172 = vmatprep.mubr.f32.mxu0 0.0
    %1173 = vmatmul.mubr.f32.gmra.mrb[0].mxu0 %v1096
    %v1174 = vpop.f32.mrb[0].mxu0
    %v1175 = vadd.f32 %v1101, %v1174
    %v1176 = vpop.f32.mrb[0].mxu0
    %1177 = vdwg.mxu0
    %s1178 = sld [smem:[#allocation3]]
    %s1179 = sld [smem:[#allocation3 + $0x1]]
    %v1180 = vstv %s1178
    %vm1181 = vcmp.ge.s32.totalorder %v577, %v1180
    %vm1182 = vcmp.ge.s32.totalorder %v578, %v1180
    %v1183 = vstv %s1179
    %vm1184 = vcmp.le.s32.totalorder %v577, %v1183
    %vm1185 = vcmp.le.s32.totalorder %v578, %v1183
    %vm1186 = vmand %vm1181, %vm1184
    %vm1187 = vmand %vm1182, %vm1185
    %v1188 = vsel %vm1186, 1, 0
    %v1189 = vsel %vm1187, 1, 0
    %v1190 = vcvt.s32.f32 %v1188
    %v1191 = vcvt.s32.f32 %v1189
    %v1192 = vmul.f32 %v1170, %v1190
    %v1193 = vmul.f32 %v1175, %v1191
    %vm1194 = vcmask 7168
    %v1195 = vsel %vm1194, %v1192, -inf
    %v1196 = vsel %vm1194, %v1193, -inf
    %v1197 = vmax.f32 %v1195, %v1196
    %v1198 = vrot.slane %v1197, 4
    %v1199 = vmax.f32 %v1197, %v1198
    %v1200 = vrot.slane %v1199, 2
    %v1201 = vmax.f32 %v1199, %v1200
    %v1202 = vrot.slane %v1201, 1
    %v1203 = vmax.f32 %v1201, %v1202
    %v1204 = vsub.f32 %v1192, %v1203
    %v1205 = vsub.f32 %v1193, %v1203
    %v1206 = vmul.f32 %v1204, 1.442695
    %v1207 = vpow.pop %v1206
    %v1208 = vmul.f32 %v1205, 1.442695
    %v1209 = vpow.pop %v1208
    %v1210 = vsel %vm1194, %v1207, 0.0
    %v1211 = vsel %vm1194, %v1209, 0.0
    %v1212 = vadd.f32 %v1210, %v1211
    %v1213 = vrot.slane %v1212, 4
    %v1214 = vadd.f32 %v1212, %v1213
    %v1215 = vrot.slane %v1214, 2
    %v1216 = vadd.f32 %v1214, %v1215
    %v1217 = vrot.slane %v1216, 1
    %v1218 = vadd.f32 %v1216, %v1217
    %v1219 = vrcp.pop %v1218
    %v1220 = vmul.f32 %v1207, %v1219
    %v1221 = vmul.f32 %v1209, %v1219
    %v1222 = vmul.f32 %v1220, %v1190
    %v1223 = vmul.f32 %v1221, %v1191
    %v1224 = vsel %vm1194, %v1222, 0.0
    %v1225 = vsel %vm1194, %v1223, 0.0
    %v1226 = vadd.f32 %v1224, %v1225
    %v1227 = vrot.slane %v1226, 4
    %v1228 = vadd.f32 %v1226, %v1227
    %v1229 = vrot.slane %v1228, 2
    %v1230 = vadd.f32 %v1228, %v1229
    %v1231 = vrot.slane %v1230, 1
    %v1232 = vadd.f32 %v1230, %v1231
    %v1233 = vadd.f32 %v1232, 1e-13
    %v1234 = vrcp.pop %v1233
    %v1235 = vmul.f32 %v1222, %v1234
    %v1236 = vmul.f32 %v1223, %v1234
    %1238 = vset.pattern.permute.xlu0 0
    %1239 = vperm.xlu0 %1238, %v1235
    %v1240 = vpop.permute.xlu0 %1239
    %1243 = vset.pattern.permute.xlu0 0
    %1244 = vperm.xlu0 %1243, %v1236
    %v1245 = vpop.permute.xlu0 %1244
    %v1247 = vmul.f32 %v1240, %v1095
    %v1248 = vmul.f32 %v1245, %v1096
    %v1249 = vadd.f32 %v1247, %v1248
    %v1250 = vrot.slane %v1249, 4
    %v1251 = vadd.f32 %v1249, %v1250
    %v1252 = vrot.slane %v1251, 2
    %v1253 = vadd.f32 %v1251, %v1252
    %v1254 = vrot.slane %v1253, 1
    %v1255 = vadd.f32 %v1253, %v1254
    %v1256 = vmul.f32 %v1255, %v513
    %v1257 = vadd.f32 %v1256, %v514
    %1258 = vmatprep.subr.mxu0 0.0
    %1259 = vmatpush1.msra.mxu0 %v515
    %1260 = vmatprep.subr.mxu0 0.0
    %1261 = vmatpush1.msra.mxu0 %v516
    %1262 = vmatprep.subr.mxu0 0.0
    %1263 = vmatpush1.msra.mxu0 %v517
    %1264 = vmatprep.subr.mxu0 0.0
    %1265 = vmatpush1.msra.mxu0 %v518
    %1266 = vmatprep.subr.mxu0 0.0
    %1267 = vmatpush1.msra.mxu0 %v519
    %1268 = vmatprep.subr.mxu0 0.0
    %1269 = vmatpush1.msra.mxu0 %v520
    %1270 = vmatprep.subr.mxu0 0.0
    %1271 = vmatpush1.msra.mxu0 %v521
    %1272 = vmatprep.subr.mxu0 0.0
    %1273 = vmatpush1.msra.mxu0 %v522
    %1274 = vmatprep.subr.mxu0 0.0
    %1275 = vmatpush1.msra.mxu0 %v523
    %1276 = vmatprep.subr.mxu0 0.0
    %1277 = vmatpush1.msra.mxu0 %v524
    %1278 = vmatprep.subr.mxu0 0.0
    %1279 = vmatpush1.msra.mxu0 %v525
    %1280 = vmatprep.subr.mxu0 0.0
    %1281 = vmatpush1.msra.mxu0 %v526
    %1282 = vmatprep.subr.mxu0 0.0
    %1283 = vmatpush1.msra.mxu0 %v527
    %1284 = vmatprep.subr.mxu0 0.0
    %1285 = vmatpush1.msra.mxu0 %v528
    %1286 = vmatprep.subr.mxu0 0.0
    %1287 = vmatpush1.msra.mxu0 %v529
    %1288 = vmatprep.subr.mxu0 0.0
    %1289 = vmatpush1.msra.mxu0 %v530
    %1290 = vmatprep.subr.mxu0 0.0
    %1291 = vmatpush1.msra.mxu0 0.0
    %1292 = vmatprep.subr.mxu0 0.0
    %1293 = vmatpush1.msra.mxu0 0.0
    %1294 = vmatprep.subr.mxu0 0.0
    %1295 = vmatpush1.msra.mxu0 0.0
    %1296 = vmatprep.subr.mxu0 0.0
    %1297 = vmatpush1.msra.mxu0 0.0
    %1298 = vmatprep.subr.mxu0 0.0
    %1299 = vmatpush1.msra.mxu0 0.0
    %1300 = vmatprep.subr.mxu0 0.0
    %1301 = vmatpush1.msra.mxu0 0.0
    %1302 = vmatprep.subr.mxu0 0.0
    %1303 = vmatpush1.msra.mxu0 0.0
    %1304 = vmatprep.subr.mxu0 0.0
    %1305 = vmatpush1.msra.mxu0 0.0
    %1306 = vmatprep.subr.mxu0 0.0
    %1307 = vmatpush1.msra.mxu0 0.0
    %1308 = vmatprep.subr.mxu0 0.0
    %1309 = vmatpush1.msra.mxu0 0.0
    %1310 = vmatprep.subr.mxu0 0.0
    %1311 = vmatpush1.msra.mxu0 0.0
    %1312 = vmatprep.subr.mxu0 0.0
    %1313 = vmatpush1.msra.mxu0 0.0
    %1314 = vmatprep.subr.mxu0 0.0
    %1315 = vmatpush1.msra.mxu0 0.0
    %1316 = vmatprep.subr.mxu0 0.0
    %1317 = vmatpush1.msra.mxu0 0.0
    %1318 = vmatprep.subr.mxu0 0.0
    %1319 = vmatpush1.msra.mxu0 0.0
    %1320 = vmatprep.subr.mxu0 0.0
    %1321 = vmatpush1.msra.mxu0 0.0
    %1322 = vmatprep.mubr.f32.mxu0 0.0
    %1323 = vmatmul.mubr.f32.gmra.mrb[0].mxu0 %v1257
    %v1324 = vpop.f32.mrb[0].mxu0
    %v1325 = vadd.f32 0.0, %v1324
    %v1326 = vpop.f32.mrb[0].mxu0
    %1327 = vdwg.mxu0
    %v1328 = vadd.f32 %v563, %v1325
    %s1329 = sld [smem:[#allocation3 + $0x2]]
    %s1330 = sld [smem:[#allocation3 + $0x3]]
    %v1331 = vstv %s1329
    %vm1332 = vcmp.ge.s32.totalorder %v577, %v1331
    %vm1333 = vcmp.ge.s32.totalorder %v578, %v1331
    %v1334 = vstv %s1330
    %vm1335 = vcmp.le.s32.totalorder %v577, %v1334
    %vm1336 = vcmp.le.s32.totalorder %v578, %v1334
    %vm1337 = vmand %vm1332, %vm1335
    %vm1338 = vmand %vm1333, %vm1336
    %v1339 = vsel %vm1337, 1, 0
    %v1340 = vsel %vm1338, 1, 0
    %v1341 = vcvt.s32.f32 %v1339
    %v1342 = vcvt.s32.f32 %v1340
    %v1343 = vmul.f32 %v1170, %v1341
    %v1344 = vmul.f32 %v1175, %v1342
    %v1345 = vsel %vm1194, %v1343, -inf
    %v1346 = vsel %vm1194, %v1344, -inf
    %v1347 = vmax.f32 %v1345, %v1346
    %v1348 = vrot.slane %v1347, 4
    %v1349 = vmax.f32 %v1347, %v1348
    %v1350 = vrot.slane %v1349, 2
    %v1351 = vmax.f32 %v1349, %v1350
    %v1352 = vrot.slane %v1351, 1
    %v1353 = vmax.f32 %v1351, %v1352
    %v1354 = vsub.f32 %v1343, %v1353
    %v1355 = vsub.f32 %v1344, %v1353
    %v1356 = vmul.f32 %v1354, 1.442695
    %v1357 = vpow.pop %v1356
    %v1358 = vmul.f32 %v1355, 1.442695
    %v1359 = vpow.pop %v1358
    %v1360 = vsel %vm1194, %v1357, 0.0
    %v1361 = vsel %vm1194, %v1359, 0.0
    %v1362 = vadd.f32 %v1360, %v1361
    %v1363 = vrot.slane %v1362, 4
    %v1364 = vadd.f32 %v1362, %v1363
    %v1365 = vrot.slane %v1364, 2
    %v1366 = vadd.f32 %v1364, %v1365
    %v1367 = vrot.slane %v1366, 1
    %v1368 = vadd.f32 %v1366, %v1367
    %v1369 = vrcp.pop %v1368
    %v1370 = vmul.f32 %v1357, %v1369
    %v1371 = vmul.f32 %v1359, %v1369
    %v1372 = vmul.f32 %v1370, %v1341
    %v1373 = vmul.f32 %v1371, %v1342
    %v1374 = vsel %vm1194, %v1372, 0.0
    %v1375 = vsel %vm1194, %v1373, 0.0
    %v1376 = vadd.f32 %v1374, %v1375
    %v1377 = vrot.slane %v1376, 4
    %v1378 = vadd.f32 %v1376, %v1377
    %v1379 = vrot.slane %v1378, 2
    %v1380 = vadd.f32 %v1378, %v1379
    %v1381 = vrot.slane %v1380, 1
    %v1382 = vadd.f32 %v1380, %v1381
    %v1383 = vadd.f32 %v1382, 1e-13
    %v1384 = vrcp.pop %v1383
    %v1385 = vmul.f32 %v1372, %v1384
    %v1386 = vmul.f32 %v1373, %v1384
    %1388 = vset.pattern.permute.xlu0 0
    %1389 = vperm.xlu0 %1388, %v1385
    %v1390 = vpop.permute.xlu0 %1389
    %1393 = vset.pattern.permute.xlu0 0
    %1394 = vperm.xlu0 %1393, %v1386
    %v1395 = vpop.permute.xlu0 %1394
    %v1397 = vmul.f32 %v1390, %v1095
    %v1398 = vmul.f32 %v1395, %v1096
    %v1399 = vadd.f32 %v1397, %v1398
    %v1400 = vrot.slane %v1399, 4
    %v1401 = vadd.f32 %v1399, %v1400
    %v1402 = vrot.slane %v1401, 2
    %v1403 = vadd.f32 %v1401, %v1402
    %v1404 = vrot.slane %v1403, 1
    %v1405 = vadd.f32 %v1403, %v1404
    %v1406 = vmul.f32 %v1405, %v513
    %v1407 = vadd.f32 %v1406, %v514
    %v1409 = vrot.slane %v1407, 1
    %1411 = vmatprep.subr.mxu0 0.0
    %1412 = vmatpush1.msra.mxu0 %v531
    %1413 = vmatprep.subr.mxu0 0.0
    %1414 = vmatpush1.msra.mxu0 %v532
    %1415 = vmatprep.subr.mxu0 0.0
    %1416 = vmatpush1.msra.mxu0 %v533
    %1417 = vmatprep.subr.mxu0 0.0
    %1418 = vmatpush1.msra.mxu0 %v534
    %1419 = vmatprep.subr.mxu0 0.0
    %1420 = vmatpush1.msra.mxu0 %v535
    %1421 = vmatprep.subr.mxu0 0.0
    %1422 = vmatpush1.msra.mxu0 %v536
    %1423 = vmatprep.subr.mxu0 0.0
    %1424 = vmatpush1.msra.mxu0 %v537
    %1425 = vmatprep.subr.mxu0 0.0
    %1426 = vmatpush1.msra.mxu0 %v538
    %1427 = vmatprep.subr.mxu0 0.0
    %1428 = vmatpush1.msra.mxu0 %v539
    %1429 = vmatprep.subr.mxu0 0.0
    %1430 = vmatpush1.msra.mxu0 %v540
    %1431 = vmatprep.subr.mxu0 0.0
    %1432 = vmatpush1.msra.mxu0 %v541
    %1433 = vmatprep.subr.mxu0 0.0
    %1434 = vmatpush1.msra.mxu0 %v542
    %1435 = vmatprep.subr.mxu0 0.0
    %1436 = vmatpush1.msra.mxu0 %v543
    %1437 = vmatprep.subr.mxu0 0.0
    %1438 = vmatpush1.msra.mxu0 %v544
    %1439 = vmatprep.subr.mxu0 0.0
    %1440 = vmatpush1.msra.mxu0 %v545
    %1441 = vmatprep.subr.mxu0 0.0
    %1442 = vmatpush1.msra.mxu0 %v546
    %1443 = vmatprep.subr.mxu0 0.0
    %1444 = vmatpush1.msra.mxu0 0.0
    %1445 = vmatprep.subr.mxu0 0.0
    %1446 = vmatpush1.msra.mxu0 0.0
    %1447 = vmatprep.subr.mxu0 0.0
    %1448 = vmatpush1.msra.mxu0 0.0
    %1449 = vmatprep.subr.mxu0 0.0
    %1450 = vmatpush1.msra.mxu0 0.0
    %1451 = vmatprep.subr.mxu0 0.0
    %1452 = vmatpush1.msra.mxu0 0.0
    %1453 = vmatprep.subr.mxu0 0.0
    %1454 = vmatpush1.msra.mxu0 0.0
    %1455 = vmatprep.subr.mxu0 0.0
    %1456 = vmatpush1.msra.mxu0 0.0
    %1457 = vmatprep.subr.mxu0 0.0
    %1458 = vmatpush1.msra.mxu0 0.0
    %1459 = vmatprep.subr.mxu0 0.0
    %1460 = vmatpush1.msra.mxu0 0.0
    %1461 = vmatprep.subr.mxu0 0.0
    %1462 = vmatpush1.msra.mxu0 0.0
    %1463 = vmatprep.subr.mxu0 0.0
    %1464 = vmatpush1.msra.mxu0 0.0
    %1465 = vmatprep.subr.mxu0 0.0
    %1466 = vmatpush1.msra.mxu0 0.0
    %1467 = vmatprep.subr.mxu0 0.0
    %1468 = vmatpush1.msra.mxu0 0.0
    %1469 = vmatprep.subr.mxu0 0.0
    %1470 = vmatpush1.msra.mxu0 0.0
    %1471 = vmatprep.subr.mxu0 0.0
    %1472 = vmatpush1.msra.mxu0 0.0
    %1473 = vmatprep.subr.mxu0 0.0
    %1474 = vmatpush1.msra.mxu0 0.0
    %1475 = vmatprep.mubr.f32.mxu0 0.0
    %1476 = vmatmul.mubr.f32.gmra.mrb[0].mxu0 %v1409
    %v1477 = vpop.f32.mrb[0].mxu0
    %v1478 = vadd.f32 0.0, %v1477
    %v1479 = vpop.f32.mrb[0].mxu0
    %1480 = vdwg.mxu0
    %v1481 = vadd.f32 %v1328, %v1478
    %s1482 = sld [smem:[#allocation3 + $0x4]]
    %s1483 = sld [smem:[#allocation3 + $0x5]]
    %v1484 = vstv %s1482
    %vm1485 = vcmp.ge.s32.totalorder %v577, %v1484
    %vm1486 = vcmp.ge.s32.totalorder %v578, %v1484
    %v1487 = vstv %s1483
    %vm1488 = vcmp.le.s32.totalorder %v577, %v1487
    %vm1489 = vcmp.le.s32.totalorder %v578, %v1487
    %vm1490 = vmand %vm1485, %vm1488
    %vm1491 = vmand %vm1486, %vm1489
    %v1492 = vsel %vm1490, 1, 0
    %v1493 = vsel %vm1491, 1, 0
    %v1494 = vcvt.s32.f32 %v1492
    %v1495 = vcvt.s32.f32 %v1493
    %v1496 = vmul.f32 %v1170, %v1494
    %v1497 = vmul.f32 %v1175, %v1495
    %v1498 = vsel %vm1194, %v1496, -inf
    %v1499 = vsel %vm1194, %v1497, -inf
    %v1500 = vmax.f32 %v1498, %v1499
    %v1501 = vrot.slane %v1500, 4
    %v1502 = vmax.f32 %v1500, %v1501
    %v1503 = vrot.slane %v1502, 2
    %v1504 = vmax.f32 %v1502, %v1503
    %v1505 = vrot.slane %v1504, 1
    %v1506 = vmax.f32 %v1504, %v1505
    %v1507 = vsub.f32 %v1496, %v1506
    %v1508 = vsub.f32 %v1497, %v1506
    %v1509 = vmul.f32 %v1507, 1.442695
    %v1510 = vpow.pop %v1509
    %v1511 = vmul.f32 %v1508, 1.442695
    %v1512 = vpow.pop %v1511
    %v1513 = vsel %vm1194, %v1510, 0.0
    %v1514 = vsel %vm1194, %v1512, 0.0
    %v1515 = vadd.f32 %v1513, %v1514
    %v1516 = vrot.slane %v1515, 4
    %v1517 = vadd.f32 %v1515, %v1516
    %v1518 = vrot.slane %v1517, 2
    %v1519 = vadd.f32 %v1517, %v1518
    %v1520 = vrot.slane %v1519, 1
    %v1521 = vadd.f32 %v1519, %v1520
    %v1522 = vrcp.pop %v1521
    %v1523 = vmul.f32 %v1510, %v1522
    %v1524 = vmul.f32 %v1512, %v1522
    %v1525 = vmul.f32 %v1523, %v1494
    %v1526 = vmul.f32 %v1524, %v1495
    %v1527 = vsel %vm1194, %v1525, 0.0
    %v1528 = vsel %vm1194, %v1526, 0.0
    %v1529 = vadd.f32 %v1527, %v1528
    %v1530 = vrot.slane %v1529, 4
    %v1531 = vadd.f32 %v1529, %v1530
    %v1532 = vrot.slane %v1531, 2
    %v1533 = vadd.f32 %v1531, %v1532
    %v1534 = vrot.slane %v1533, 1
    %v1535 = vadd.f32 %v1533, %v1534
    %v1536 = vadd.f32 %v1535, 1e-13
    %v1537 = vrcp.pop %v1536
    %v1538 = vmul.f32 %v1525, %v1537
    %v1539 = vmul.f32 %v1526, %v1537
    %1541 = vset.pattern.permute.xlu0 0
    %1542 = vperm.xlu0 %1541, %v1538
    %v1543 = vpop.permute.xlu0 %1542
    %1546 = vset.pattern.permute.xlu0 0
    %1547 = vperm.xlu0 %1546, %v1539
    %v1548 = vpop.permute.xlu0 %1547
    %v1550 = vmul.f32 %v1543, %v1095
    %v1551 = vmul.f32 %v1548, %v1096
    %v1552 = vadd.f32 %v1550, %v1551
    %v1553 = vrot.slane %v1552, 4
    %v1554 = vadd.f32 %v1552, %v1553
    %v1555 = vrot.slane %v1554, 2
    %v1556 = vadd.f32 %v1554, %v1555
    %v1557 = vrot.slane %v1556, 1
    %v1558 = vadd.f32 %v1556, %v1557
    %v1559 = vmul.f32 %v1558, %v513
    %v1560 = vadd.f32 %v1559, %v514
    %v1562 = vrot.slane %v1560, 2
    %1564 = vmatprep.subr.mxu0 0.0
    %1565 = vmatpush1.msra.mxu0 %v547
    %1566 = vmatprep.subr.mxu0 0.0
    %1567 = vmatpush1.msra.mxu0 %v548
    %1568 = vmatprep.subr.mxu0 0.0
    %1569 = vmatpush1.msra.mxu0 %v549
    %1570 = vmatprep.subr.mxu0 0.0
    %1571 = vmatpush1.msra.mxu0 %v550
    %1572 = vmatprep.subr.mxu0 0.0
    %1573 = vmatpush1.msra.mxu0 %v551
    %1574 = vmatprep.subr.mxu0 0.0
    %1575 = vmatpush1.msra.mxu0 %v552
    %1576 = vmatprep.subr.mxu0 0.0
    %1577 = vmatpush1.msra.mxu0 %v553
    %1578 = vmatprep.subr.mxu0 0.0
    %1579 = vmatpush1.msra.mxu0 %v554
    %1580 = vmatprep.subr.mxu0 0.0
    %1581 = vmatpush1.msra.mxu0 %v555
    %1582 = vmatprep.subr.mxu0 0.0
    %1583 = vmatpush1.msra.mxu0 %v556
    %1584 = vmatprep.subr.mxu0 0.0
    %1585 = vmatpush1.msra.mxu0 %v557
    %1586 = vmatprep.subr.mxu0 0.0
    %1587 = vmatpush1.msra.mxu0 %v558
    %1588 = vmatprep.subr.mxu0 0.0
    %1589 = vmatpush1.msra.mxu0 %v559
    %1590 = vmatprep.subr.mxu0 0.0
    %1591 = vmatpush1.msra.mxu0 %v560
    %1592 = vmatprep.subr.mxu0 0.0
    %1593 = vmatpush1.msra.mxu0 %v561
    %1594 = vmatprep.subr.mxu0 0.0
    %1595 = vmatpush1.msra.mxu0 %v562
    %1596 = vmatprep.subr.mxu0 0.0
    %1597 = vmatpush1.msra.mxu0 0.0
    %1598 = vmatprep.subr.mxu0 0.0
    %1599 = vmatpush1.msra.mxu0 0.0
    %1600 = vmatprep.subr.mxu0 0.0
    %1601 = vmatpush1.msra.mxu0 0.0
    %1602 = vmatprep.subr.mxu0 0.0
    %1603 = vmatpush1.msra.mxu0 0.0
    %1604 = vmatprep.subr.mxu0 0.0
    %1605 = vmatpush1.msra.mxu0 0.0
    %1606 = vmatprep.subr.mxu0 0.0
    %1607 = vmatpush1.msra.mxu0 0.0
    %1608 = vmatprep.subr.mxu0 0.0
    %1609 = vmatpush1.msra.mxu0 0.0
    %1610 = vmatprep.subr.mxu0 0.0
    %1611 = vmatpush1.msra.mxu0 0.0
    %1612 = vmatprep.subr.mxu0 0.0
    %1613 = vmatpush1.msra.mxu0 0.0
    %1614 = vmatprep.subr.mxu0 0.0
    %1615 = vmatpush1.msra.mxu0 0.0
    %1616 = vmatprep.subr.mxu0 0.0
    %1617 = vmatpush1.msra.mxu0 0.0
    %1618 = vmatprep.subr.mxu0 0.0
    %1619 = vmatpush1.msra.mxu0 0.0
    %1620 = vmatprep.subr.mxu0 0.0
    %1621 = vmatpush1.msra.mxu0 0.0
    %1622 = vmatprep.subr.mxu0 0.0
    %1623 = vmatpush1.msra.mxu0 0.0
    %1624 = vmatprep.subr.mxu0 0.0
    %1625 = vmatpush1.msra.mxu0 0.0
    %1626 = vmatprep.subr.mxu0 0.0
    %1627 = vmatpush1.msra.mxu0 0.0
    %1628 = vmatprep.mubr.f32.mxu0 0.0
    %1629 = vmatmul.mubr.f32.gmra.mrb[0].mxu0 %v1562
    %v1630 = vpop.f32.mrb[0].mxu0
    %v1631 = vadd.f32 0.0, %v1630
    %v1632 = vpop.f32.mrb[0].mxu0
    %1633 = vdwg.mxu0
    %v1634 = vadd.f32 %v1481, %v1631
    %v1635 = vmax.f32 %v1634, 0.0
    %v1636 = vmul.f32 %v1635, %v564
    %v1637 = vadd.f32 %v1636, %v565
    %vm1638 = vcmask 23552
    %v1640 = vsel %vm1638, %v574, 0
    %vm1642 = vcmask 1042432
    %v1644 = vsel %vm1642, %v570, 0
    %1646 = vmatprep.subr.mxu0 0.0
    %1647 = vmatpush1.msra.mxu0 %v1644
    %1648 = vmatprep.subr.mxu0 0.0
    %1649 = vmatpush1.msra.mxu0 0.0
    %1650 = vmatprep.subr.mxu0 0.0
    %1651 = vmatpush1.msra.mxu0 0.0
    %1652 = vmatprep.subr.mxu0 0.0
    %1653 = vmatpush1.msra.mxu0 0.0
    %1654 = vmatprep.subr.mxu0 0.0
    %1655 = vmatpush1.msra.mxu0 0.0
    %1656 = vmatprep.subr.mxu0 0.0
    %1657 = vmatpush1.msra.mxu0 0.0
    %1658 = vmatprep.subr.mxu0 0.0
    %1659 = vmatpush1.msra.mxu0 0.0
    %1660 = vmatprep.subr.mxu0 0.0
    %1661 = vmatpush1.msra.mxu0 0.0
    %1662 = vmatprep.subr.mxu0 0.0
    %1663 = vmatpush1.msra.mxu0 0.0
    %1664 = vmatprep.subr.mxu0 0.0
    %1665 = vmatpush1.msra.mxu0 0.0
    %1666 = vmatprep.subr.mxu0 0.0
    %1667 = vmatpush1.msra.mxu0 0.0
    %1668 = vmatprep.subr.mxu0 0.0
    %1669 = vmatpush1.msra.mxu0 0.0
    %1670 = vmatprep.subr.mxu0 0.0
    %1671 = vmatpush1.msra.mxu0 0.0
    %1672 = vmatprep.subr.mxu0 0.0
    %1673 = vmatpush1.msra.mxu0 0.0
    %1674 = vmatprep.subr.mxu0 0.0
    %1675 = vmatpush1.msra.mxu0 0.0
    %1676 = vmatprep.subr.mxu0 0.0
    %1677 = vmatpush1.msra.mxu0 0.0
    %1678 = vmatprep.subr.mxu0 0.0
    %1679 = vmatpush1.msra.mxu0 0.0
    %1680 = vmatprep.subr.mxu0 0.0
    %1681 = vmatpush1.msra.mxu0 0.0
    %1682 = vmatprep.subr.mxu0 0.0
    %1683 = vmatpush1.msra.mxu0 0.0
    %1684 = vmatprep.subr.mxu0 0.0
    %1685 = vmatpush1.msra.mxu0 0.0
    %1686 = vmatprep.subr.mxu0 0.0
    %1687 = vmatpush1.msra.mxu0 0.0
    %1688 = vmatprep.subr.mxu0 0.0
    %1689 = vmatpush1.msra.mxu0 0.0
    %1690 = vmatprep.subr.mxu0 0.0
    %1691 = vmatpush1.msra.mxu0 0.0
    %1692 = vmatprep.subr.mxu0 0.0
    %1693 = vmatpush1.msra.mxu0 0.0
    %1694 = vmatprep.subr.mxu0 0.0
    %1695 = vmatpush1.msra.mxu0 0.0
    %1696 = vmatprep.subr.mxu0 0.0
    %1697 = vmatpush1.msra.mxu0 0.0
    %1698 = vmatprep.subr.mxu0 0.0
    %1699 = vmatpush1.msra.mxu0 0.0
    %1700 = vmatprep.subr.mxu0 0.0
    %1701 = vmatpush1.msra.mxu0 0.0
    %1702 = vmatprep.subr.mxu0 0.0
    %1703 = vmatpush1.msra.mxu0 0.0
    %1704 = vmatprep.subr.mxu0 0.0
    %1705 = vmatpush1.msra.mxu0 0.0
    %1706 = vmatprep.subr.mxu0 0.0
    %1707 = vmatpush1.msra.mxu0 0.0
    %1708 = vmatprep.subr.mxu0 0.0
    %1709 = vmatpush1.msra.mxu0 0.0
    %1710 = vmatprep.mubr.f32.mxu0 0.0
    %1711 = vmatmul.mubr.f32.gmra.mrb[0].mxu0 %v1640
    %v1712 = vpop.f32.mrb[0].mxu0
    %v1713 = vadd.f32 0.0, %v1712
    %v1714 = vpop.f32.mrb[0].mxu0
    %1715 = vdwg.mxu0
    %vm1716 = vcmask 261120
    %v1718 = vsel %vm1716, %v1637, 0
    %1720 = vmatprep.subr.mxu0 0.0
    %1721 = vmatpush1.msra.mxu0 %v566
    %1722 = vmatprep.subr.mxu0 0.0
    %1723 = vmatpush1.msra.mxu0 %v567
    %1724 = vmatprep.subr.mxu0 0.0
    %1725 = vmatpush1.msra.mxu0 %v568
    %1726 = vmatprep.subr.mxu0 0.0
    %1727 = vmatpush1.msra.mxu0 %v569
    %1728 = vmatprep.subr.mxu0 0.0
    %1729 = vmatpush1.msra.mxu0 0.0
    %1730 = vmatprep.subr.mxu0 0.0
    %1731 = vmatpush1.msra.mxu0 0.0
    %1732 = vmatprep.subr.mxu0 0.0
    %1733 = vmatpush1.msra.mxu0 0.0
    %1734 = vmatprep.subr.mxu0 0.0
    %1735 = vmatpush1.msra.mxu0 0.0
    %1736 = vmatprep.subr.mxu0 0.0
    %1737 = vmatpush1.msra.mxu0 0.0
    %1738 = vmatprep.subr.mxu0 0.0
    %1739 = vmatpush1.msra.mxu0 0.0
    %1740 = vmatprep.subr.mxu0 0.0
    %1741 = vmatpush1.msra.mxu0 0.0
    %1742 = vmatprep.subr.mxu0 0.0
    %1743 = vmatpush1.msra.mxu0 0.0
    %1744 = vmatprep.subr.mxu0 0.0
    %1745 = vmatpush1.msra.mxu0 0.0
    %1746 = vmatprep.subr.mxu0 0.0
    %1747 = vmatpush1.msra.mxu0 0.0
    %1748 = vmatprep.subr.mxu0 0.0
    %1749 = vmatpush1.msra.mxu0 0.0
    %1750 = vmatprep.subr.mxu0 0.0
    %1751 = vmatpush1.msra.mxu0 0.0
    %1752 = vmatprep.subr.mxu0 0.0
    %1753 = vmatpush1.msra.mxu0 0.0
    %1754 = vmatprep.subr.mxu0 0.0
    %1755 = vmatpush1.msra.mxu0 0.0
    %1756 = vmatprep.subr.mxu0 0.0
    %1757 = vmatpush1.msra.mxu0 0.0
    %1758 = vmatprep.subr.mxu0 0.0
    %1759 = vmatpush1.msra.mxu0 0.0
    %1760 = vmatprep.subr.mxu0 0.0
    %1761 = vmatpush1.msra.mxu0 0.0
    %1762 = vmatprep.subr.mxu0 0.0
    %1763 = vmatpush1.msra.mxu0 0.0
    %1764 = vmatprep.subr.mxu0 0.0
    %1765 = vmatpush1.msra.mxu0 0.0
    %1766 = vmatprep.subr.mxu0 0.0
    %1767 = vmatpush1.msra.mxu0 0.0
    %1768 = vmatprep.subr.mxu0 0.0
    %1769 = vmatpush1.msra.mxu0 0.0
    %1770 = vmatprep.subr.mxu0 0.0
    %1771 = vmatpush1.msra.mxu0 0.0
    %1772 = vmatprep.subr.mxu0 0.0
    %1773 = vmatpush1.msra.mxu0 0.0
    %1774 = vmatprep.subr.mxu0 0.0
    %1775 = vmatpush1.msra.mxu0 0.0
    %1776 = vmatprep.subr.mxu0 0.0
    %1777 = vmatpush1.msra.mxu0 0.0
    %1778 = vmatprep.subr.mxu0 0.0
    %1779 = vmatpush1.msra.mxu0 0.0
    %1780 = vmatprep.subr.mxu0 0.0
    %1781 = vmatpush1.msra.mxu0 0.0
    %1782 = vmatprep.subr.mxu0 0.0
    %1783 = vmatpush1.msra.mxu0 0.0
    %1784 = vmatprep.mubr.f32.mxu0 0.0
    %1785 = vmatmul.mubr.f32.gmra.mrb[0].mxu0 %v1718
    %v1786 = vpop.f32.mrb[0].mxu0
    %v1787 = vadd.f32 %v1713, %v1786
    %v1788 = vpop.f32.mrb[0].mxu0
    %1789 = vdwg.mxu0
    %vm1790 = vcmask 113664
    %v1792 = vsel %vm1790, %v575, 0
    %vm1794 = vcmask 1045504
    %v1796 = vsel %vm1794, %v572, 0
    %1798 = vmatprep.subr.mxu0 0.0
    %1799 = vmatpush1.msra.mxu0 %v571
    %1800 = vmatprep.subr.mxu0 0.0
    %1801 = vmatpush1.msra.mxu0 %v1796
    %1802 = vmatprep.subr.mxu0 0.0
    %1803 = vmatpush1.msra.mxu0 0.0
    %1804 = vmatprep.subr.mxu0 0.0
    %1805 = vmatpush1.msra.mxu0 0.0
    %1806 = vmatprep.subr.mxu0 0.0
    %1807 = vmatpush1.msra.mxu0 0.0
    %1808 = vmatprep.subr.mxu0 0.0
    %1809 = vmatpush1.msra.mxu0 0.0
    %1810 = vmatprep.subr.mxu0 0.0
    %1811 = vmatpush1.msra.mxu0 0.0
    %1812 = vmatprep.subr.mxu0 0.0
    %1813 = vmatpush1.msra.mxu0 0.0
    %1814 = vmatprep.subr.mxu0 0.0
    %1815 = vmatpush1.msra.mxu0 0.0
    %1816 = vmatprep.subr.mxu0 0.0
    %1817 = vmatpush1.msra.mxu0 0.0
    %1818 = vmatprep.subr.mxu0 0.0
    %1819 = vmatpush1.msra.mxu0 0.0
    %1820 = vmatprep.subr.mxu0 0.0
    %1821 = vmatpush1.msra.mxu0 0.0
    %1822 = vmatprep.subr.mxu0 0.0
    %1823 = vmatpush1.msra.mxu0 0.0
    %1824 = vmatprep.subr.mxu0 0.0
    %1825 = vmatpush1.msra.mxu0 0.0
    %1826 = vmatprep.subr.mxu0 0.0
    %1827 = vmatpush1.msra.mxu0 0.0
    %1828 = vmatprep.subr.mxu0 0.0
    %1829 = vmatpush1.msra.mxu0 0.0
    %1830 = vmatprep.subr.mxu0 0.0
    %1831 = vmatpush1.msra.mxu0 0.0
    %1832 = vmatprep.subr.mxu0 0.0
    %1833 = vmatpush1.msra.mxu0 0.0
    %1834 = vmatprep.subr.mxu0 0.0
    %1835 = vmatpush1.msra.mxu0 0.0
    %1836 = vmatprep.subr.mxu0 0.0
    %1837 = vmatpush1.msra.mxu0 0.0
    %1838 = vmatprep.subr.mxu0 0.0
    %1839 = vmatpush1.msra.mxu0 0.0
    %1840 = vmatprep.subr.mxu0 0.0
    %1841 = vmatpush1.msra.mxu0 0.0
    %1842 = vmatprep.subr.mxu0 0.0
    %1843 = vmatpush1.msra.mxu0 0.0
    %1844 = vmatprep.subr.mxu0 0.0
    %1845 = vmatpush1.msra.mxu0 0.0
    %1846 = vmatprep.subr.mxu0 0.0
    %1847 = vmatpush1.msra.mxu0 0.0
    %1848 = vmatprep.subr.mxu0 0.0
    %1849 = vmatpush1.msra.mxu0 0.0
    %1850 = vmatprep.subr.mxu0 0.0
    %1851 = vmatpush1.msra.mxu0 0.0
    %1852 = vmatprep.subr.mxu0 0.0
    %1853 = vmatpush1.msra.mxu0 0.0
    %1854 = vmatprep.subr.mxu0 0.0
    %1855 = vmatpush1.msra.mxu0 0.0
    %1856 = vmatprep.subr.mxu0 0.0
    %1857 = vmatpush1.msra.mxu0 0.0
    %1858 = vmatprep.subr.mxu0 0.0
    %1859 = vmatpush1.msra.mxu0 0.0
    %1860 = vmatprep.subr.mxu0 0.0
    %1861 = vmatpush1.msra.mxu0 0.0
    %1862 = vmatprep.mubr.f32.mxu0 0.0
    %1863 = vmatmul.mubr.f32.gmra.mrb[0].mxu0 %v1792
    %v1864 = vpop.f32.mrb[0].mxu0
    %v1865 = vadd.f32 0.0, %v1864
    %v1866 = vpop.f32.mrb[0].mxu0
    %1867 = vdwg.mxu0
    %v1868 = vadd.f32 %v1787, %v1865
    %v1869 = vadd.f32 %v1868, %v573
    %vm1870 = vcmask 16384
    %1871 = vst.msk [vmem:[#allocation25] sm:$0x1] %vm1870, %v1869
    %s1872 = scalar_lea.vmem [#allocation5], 96
    %v1873 = vld [vmem:[%s1872] sm:$0xff]
    %v1874 = vld [vmem:[%s1872 + $0x8] sm:$0xff]
    %v1875 = vld [vmem:[%s1872 + $0x10] sm:$0xff]
    %v1876 = vld [vmem:[%s1872 + $0x18] sm:$0xff]
    %v1877 = vld [vmem:[%s1872 + $0x20] sm:$0xff]
    %v1878 = vld [vmem:[%s1872 + $0x28] sm:$0xff]
    %v1879 = vld [vmem:[%s1872 + $0x30] sm:$0xff]
    %v1880 = vld [vmem:[%s1872 + $0x38] sm:$0xff]
    %v1881 = vld [vmem:[%s1872 + $0x40] sm:$0xff]
    %v1882 = vld [vmem:[%s1872 + $0x48] sm:$0xff]
    %v1883 = vld [vmem:[%s1872 + $0x50] sm:$0xff]
    %v1884 = vld [vmem:[%s1872 + $0x58] sm:$0xff]
    %1885 = vmatprep.subr.mxu0 %v208
    %1886 = vmatpush1.msra.mxu0 %v207
    %1887 = vmatprep.subr.mxu0 %v211
    %1888 = vmatpush1.msra.mxu0 %v210
    %1889 = vmatprep.subr.mxu0 %v214
    %1890 = vmatpush1.msra.mxu0 %v213
    %1891 = vmatprep.subr.mxu0 %v217
    %1892 = vmatpush1.msra.mxu0 %v216
    %1893 = vmatprep.subr.mxu0 %v220
    %1894 = vmatpush1.msra.mxu0 %v219
    %1895 = vmatprep.subr.mxu0 %v223
    %1896 = vmatpush1.msra.mxu0 %v222
    %1897 = vmatprep.subr.mxu0 %v226
    %1898 = vmatpush1.msra.mxu0 %v225
    %1899 = vmatprep.subr.mxu0 %v229
    %1900 = vmatpush1.msra.mxu0 %v228
    %1901 = vmatprep.subr.mxu0 %v232
    %1902 = vmatpush1.msra.mxu0 %v231
    %1903 = vmatprep.subr.mxu0 %v235
    %1904 = vmatpush1.msra.mxu0 %v234
    %1905 = vmatprep.subr.mxu0 %v238
    %1906 = vmatpush1.msra.mxu0 %v237
    %1907 = vmatprep.subr.mxu0 %v241
    %1908 = vmatpush1.msra.mxu0 %v240
    %1909 = vmatprep.subr.mxu0 %v244
    %1910 = vmatpush1.msra.mxu0 %v243
    %1911 = vmatprep.subr.mxu0 %v247
    %1912 = vmatpush1.msra.mxu0 %v246
    %1913 = vmatprep.subr.mxu0 %v250
    %1914 = vmatpush1.msra.mxu0 %v249
    %1915 = vmatprep.subr.mxu0 %v253
    %1916 = vmatpush1.msra.mxu0 %v252
    %1917 = vmatprep.subr.mxu0 %v256
    %1918 = vmatpush1.msra.mxu0 %v255
    %1919 = vmatprep.subr.mxu0 %v259
    %1920 = vmatpush1.msra.mxu0 %v258
    %1921 = vmatprep.subr.mxu0 %v262
    %1922 = vmatpush1.msra.mxu0 %v261
    %1923 = vmatprep.subr.mxu0 %v265
    %1924 = vmatpush1.msra.mxu0 %v264
    %1925 = vmatprep.subr.mxu0 %v268
    %1926 = vmatpush1.msra.mxu0 %v267
    %1927 = vmatprep.subr.mxu0 %v271
    %1928 = vmatpush1.msra.mxu0 %v270
    %1929 = vmatprep.subr.mxu0 %v274
    %1930 = vmatpush1.msra.mxu0 %v273
    %1931 = vmatprep.subr.mxu0 %v277
    %1932 = vmatpush1.msra.mxu0 %v276
    %1933 = vmatprep.subr.mxu0 %v280
    %1934 = vmatpush1.msra.mxu0 %v279
    %1935 = vmatprep.subr.mxu0 %v283
    %1936 = vmatpush1.msra.mxu0 %v282
    %1937 = vmatprep.subr.mxu0 %v286
    %1938 = vmatpush1.msra.mxu0 %v285
    %1939 = vmatprep.subr.mxu0 %v289
    %1940 = vmatpush1.msra.mxu0 %v288
    %1941 = vmatprep.subr.mxu0 %v292
    %1942 = vmatpush1.msra.mxu0 %v291
    %1943 = vmatprep.subr.mxu0 %v295
    %1944 = vmatpush1.msra.mxu0 %v294
    %1945 = vmatprep.subr.mxu0 %v298
    %1946 = vmatpush1.msra.mxu0 %v297
    %1947 = vmatprep.subr.mxu0 %v301
    %1948 = vmatpush1.msra.mxu0 %v300
    %1949 = vmatprep.mubr.f32.mxu0 %v1874
    %1950 = vmatmul.mubr.f32.gmra.mrb[0].mxu0 %v1873
    %v1951 = vpop.f32.mrb[0].mxu0
    %v1952 = vadd.f32 0.0, %v1951
    %v1953 = vpop.f32.mrb[0].mxu0
    %v1954 = vadd.f32 0.0, %v1953
    %1955 = vmatprep.mubr.f32.mxu0 %v1880
    %1956 = vmatmul.mubr.f32.gmra.mrb[0].mxu0 %v1879
    %v1957 = vpop.f32.mrb[0].mxu0
    %v1958 = vadd.f32 0.0, %v1957
    %v1959 = vpop.f32.mrb[0].mxu0
    %v1960 = vadd.f32 0.0, %v1959
    %1961 = vdwg.mxu0
    %1962 = vmatprep.subr.mxu0 %v304
    %1963 = vmatpush1.msra.mxu0 %v303
    %1964 = vmatprep.subr.mxu0 %v307
    %1965 = vmatpush1.msra.mxu0 %v306
    %1966 = vmatprep.subr.mxu0 %v310
    %1967 = vmatpush1.msra.mxu0 %v309
    %1968 = vmatprep.subr.mxu0 %v313
    %1969 = vmatpush1.msra.mxu0 %v312
    %1970 = vmatprep.subr.mxu0 %v316
    %1971 = vmatpush1.msra.mxu0 %v315
    %1972 = vmatprep.subr.mxu0 %v319
    %1973 = vmatpush1.msra.mxu0 %v318
    %1974 = vmatprep.subr.mxu0 %v322
    %1975 = vmatpush1.msra.mxu0 %v321
    %1976 = vmatprep.subr.mxu0 %v325
    %1977 = vmatpush1.msra.mxu0 %v324
    %1978 = vmatprep.subr.mxu0 %v328
    %1979 = vmatpush1.msra.mxu0 %v327
    %1980 = vmatprep.subr.mxu0 %v331
    %1981 = vmatpush1.msra.mxu0 %v330
    %1982 = vmatprep.subr.mxu0 %v334
    %1983 = vmatpush1.msra.mxu0 %v333
    %1984 = vmatprep.subr.mxu0 %v337
    %1985 = vmatpush1.msra.mxu0 %v336
    %1986 = vmatprep.subr.mxu0 %v340
    %1987 = vmatpush1.msra.mxu0 %v339
    %1988 = vmatprep.subr.mxu0 %v343
    %1989 = vmatpush1.msra.mxu0 %v342
    %1990 = vmatprep.subr.mxu0 %v346
    %1991 = vmatpush1.msra.mxu0 %v345
    %1992 = vmatprep.subr.mxu0 %v349
    %1993 = vmatpush1.msra.mxu0 %v348
    %1994 = vmatprep.subr.mxu0 %v352
    %1995 = vmatpush1.msra.mxu0 %v351
    %1996 = vmatprep.subr.mxu0 %v355
    %1997 = vmatpush1.msra.mxu0 %v354
    %1998 = vmatprep.subr.mxu0 %v358
    %1999 = vmatpush1.msra.mxu0 %v357
    %2000 = vmatprep.subr.mxu0 %v361
    %2001 = vmatpush1.msra.mxu0 %v360
    %2002 = vmatprep.subr.mxu0 %v364
    %2003 = vmatpush1.msra.mxu0 %v363
    %2004 = vmatprep.subr.mxu0 %v367
    %2005 = vmatpush1.msra.mxu0 %v366
    %2006 = vmatprep.subr.mxu0 %v370
    %2007 = vmatpush1.msra.mxu0 %v369
    %2008 = vmatprep.subr.mxu0 %v373
    %2009 = vmatpush1.msra.mxu0 %v372
    %2010 = vmatprep.subr.mxu0 %v376
    %2011 = vmatpush1.msra.mxu0 %v375
    %2012 = vmatprep.subr.mxu0 %v379
    %2013 = vmatpush1.msra.mxu0 %v378
    %2014 = vmatprep.subr.mxu0 %v382
    %2015 = vmatpush1.msra.mxu0 %v381
    %2016 = vmatprep.subr.mxu0 %v385
    %2017 = vmatpush1.msra.mxu0 %v384
    %2018 = vmatprep.subr.mxu0 %v388
    %2019 = vmatpush1.msra.mxu0 %v387
    %2020 = vmatprep.subr.mxu0 %v391
    %2021 = vmatpush1.msra.mxu0 %v390
    %2022 = vmatprep.subr.mxu0 %v394
    %2023 = vmatpush1.msra.mxu0 %v393
    %2024 = vmatprep.subr.mxu0 %v397
    %2025 = vmatpush1.msra.mxu0 %v396
    %2026 = vmatprep.mubr.f32.mxu0 %v1876
    %2027 = vmatmul.mubr.f32.gmra.mrb[0].mxu0 %v1875
    %v2028 = vpop.f32.mrb[0].mxu0
    %v2029 = vadd.f32 %v1952, %v2028
    %v2030 = vpop.f32.mrb[0].mxu0
    %v2031 = vadd.f32 %v1954, %v2030
    %2032 = vmatprep.mubr.f32.mxu0 %v1882
    %2033 = vmatmul.mubr.f32.gmra.mrb[0].mxu0 %v1881
    %v2034 = vpop.f32.mrb[0].mxu0
    %v2035 = vadd.f32 %v1958, %v2034
    %v2036 = vpop.f32.mrb[0].mxu0
    %v2037 = vadd.f32 %v1960, %v2036
    %2038 = vdwg.mxu0
    %2039 = vmatprep.subr.mxu0 %v400
    %2040 = vmatpush1.msra.mxu0 %v399
    %2041 = vmatprep.subr.mxu0 %v403
    %2042 = vmatpush1.msra.mxu0 %v402
    %2043 = vmatprep.subr.mxu0 %v406
    %2044 = vmatpush1.msra.mxu0 %v405
    %2045 = vmatprep.subr.mxu0 %v409
    %2046 = vmatpush1.msra.mxu0 %v408
    %2047 = vmatprep.subr.mxu0 %v412
    %2048 = vmatpush1.msra.mxu0 %v411
    %2049 = vmatprep.subr.mxu0 %v415
    %2050 = vmatpush1.msra.mxu0 %v414
    %2051 = vmatprep.subr.mxu0 %v418
    %2052 = vmatpush1.msra.mxu0 %v417
    %2053 = vmatprep.subr.mxu0 %v421
    %2054 = vmatpush1.msra.mxu0 %v420
    %2055 = vmatprep.subr.mxu0 %v424
    %2056 = vmatpush1.msra.mxu0 %v423
    %2057 = vmatprep.subr.mxu0 %v427
    %2058 = vmatpush1.msra.mxu0 %v426
    %2059 = vmatprep.subr.mxu0 %v430
    %2060 = vmatpush1.msra.mxu0 %v429
    %2061 = vmatprep.subr.mxu0 %v433
    %2062 = vmatpush1.msra.mxu0 %v432
    %2063 = vmatprep.subr.mxu0 %v436
    %2064 = vmatpush1.msra.mxu0 %v435
    %2065 = vmatprep.subr.mxu0 %v439
    %2066 = vmatpush1.msra.mxu0 %v438
    %2067 = vmatprep.subr.mxu0 %v442
    %2068 = vmatpush1.msra.mxu0 %v441
    %2069 = vmatprep.subr.mxu0 %v445
    %2070 = vmatpush1.msra.mxu0 %v444
    %2071 = vmatprep.subr.mxu0 %v448
    %2072 = vmatpush1.msra.mxu0 %v447
    %2073 = vmatprep.subr.mxu0 %v451
    %2074 = vmatpush1.msra.mxu0 %v450
    %2075 = vmatprep.subr.mxu0 %v454
    %2076 = vmatpush1.msra.mxu0 %v453
    %2077 = vmatprep.subr.mxu0 %v457
    %2078 = vmatpush1.msra.mxu0 %v456
    %2079 = vmatprep.subr.mxu0 %v460
    %2080 = vmatpush1.msra.mxu0 %v459
    %2081 = vmatprep.subr.mxu0 %v463
    %2082 = vmatpush1.msra.mxu0 %v462
    %2083 = vmatprep.subr.mxu0 %v466
    %2084 = vmatpush1.msra.mxu0 %v465
    %2085 = vmatprep.subr.mxu0 %v469
    %2086 = vmatpush1.msra.mxu0 %v468
    %2087 = vmatprep.subr.mxu0 %v472
    %2088 = vmatpush1.msra.mxu0 %v471
    %2089 = vmatprep.subr.mxu0 %v475
    %2090 = vmatpush1.msra.mxu0 %v474
    %2091 = vmatprep.subr.mxu0 %v478
    %2092 = vmatpush1.msra.mxu0 %v477
    %2093 = vmatprep.subr.mxu0 %v481
    %2094 = vmatpush1.msra.mxu0 %v480
    %2095 = vmatprep.subr.mxu0 %v484
    %2096 = vmatpush1.msra.mxu0 %v483
    %2097 = vmatprep.subr.mxu0 %v487
    %2098 = vmatpush1.msra.mxu0 %v486
    %2099 = vmatprep.subr.mxu0 %v490
    %2100 = vmatpush1.msra.mxu0 %v489
    %2101 = vmatprep.subr.mxu0 %v493
    %2102 = vmatpush1.msra.mxu0 %v492
    %2103 = vmatprep.mubr.f32.mxu0 %v1878
    %2104 = vmatmul.mubr.f32.gmra.mrb[0].mxu0 %v1877
    %v2105 = vpop.f32.mrb[0].mxu0
    %v2106 = vadd.f32 %v2029, %v2105
    %v2107 = vpop.f32.mrb[0].mxu0
    %v2108 = vadd.f32 %v2031, %v2107
    %2109 = vmatprep.mubr.f32.mxu0 %v1884
    %2110 = vmatmul.mubr.f32.gmra.mrb[0].mxu0 %v1883
    %v2111 = vpop.f32.mrb[0].mxu0
    %v2112 = vadd.f32 %v2035, %v2111
    %v2113 = vpop.f32.mrb[0].mxu0
    %v2114 = vadd.f32 %v2037, %v2113
    %2115 = vdwg.mxu0
    %2116 = vmatprep.subr.mxu0 0.0
    %2117 = vmatpush1.msra.mxu0 %v209
    %2118 = vmatprep.subr.mxu0 0.0
    %2119 = vmatpush1.msra.mxu0 %v212
    %2120 = vmatprep.subr.mxu0 0.0
    %2121 = vmatpush1.msra.mxu0 %v215
    %2122 = vmatprep.subr.mxu0 0.0
    %2123 = vmatpush1.msra.mxu0 %v218
    %2124 = vmatprep.subr.mxu0 0.0
    %2125 = vmatpush1.msra.mxu0 %v221
    %2126 = vmatprep.subr.mxu0 0.0
    %2127 = vmatpush1.msra.mxu0 %v224
    %2128 = vmatprep.subr.mxu0 0.0
    %2129 = vmatpush1.msra.mxu0 %v227
    %2130 = vmatprep.subr.mxu0 0.0
    %2131 = vmatpush1.msra.mxu0 %v230
    %2132 = vmatprep.subr.mxu0 0.0
    %2133 = vmatpush1.msra.mxu0 %v233
    %2134 = vmatprep.subr.mxu0 0.0
    %2135 = vmatpush1.msra.mxu0 %v236
    %2136 = vmatprep.subr.mxu0 0.0
    %2137 = vmatpush1.msra.mxu0 %v239
    %2138 = vmatprep.subr.mxu0 0.0
    %2139 = vmatpush1.msra.mxu0 %v242
    %2140 = vmatprep.subr.mxu0 0.0
    %2141 = vmatpush1.msra.mxu0 %v245
    %2142 = vmatprep.subr.mxu0 0.0
    %2143 = vmatpush1.msra.mxu0 %v248
    %2144 = vmatprep.subr.mxu0 0.0
    %2145 = vmatpush1.msra.mxu0 %v251
    %2146 = vmatprep.subr.mxu0 0.0
    %2147 = vmatpush1.msra.mxu0 %v254
    %2148 = vmatprep.subr.mxu0 0.0
    %2149 = vmatpush1.msra.mxu0 %v257
    %2150 = vmatprep.subr.mxu0 0.0
    %2151 = vmatpush1.msra.mxu0 %v260
    %2152 = vmatprep.subr.mxu0 0.0
    %2153 = vmatpush1.msra.mxu0 %v263
    %2154 = vmatprep.subr.mxu0 0.0
    %2155 = vmatpush1.msra.mxu0 %v266
    %2156 = vmatprep.subr.mxu0 0.0
    %2157 = vmatpush1.msra.mxu0 %v269
    %2158 = vmatprep.subr.mxu0 0.0
    %2159 = vmatpush1.msra.mxu0 %v272
    %2160 = vmatprep.subr.mxu0 0.0
    %2161 = vmatpush1.msra.mxu0 %v275
    %2162 = vmatprep.subr.mxu0 0.0
    %2163 = vmatpush1.msra.mxu0 %v278
    %2164 = vmatprep.subr.mxu0 0.0
    %2165 = vmatpush1.msra.mxu0 %v281
    %2166 = vmatprep.subr.mxu0 0.0
    %2167 = vmatpush1.msra.mxu0 %v284
    %2168 = vmatprep.subr.mxu0 0.0
    %2169 = vmatpush1.msra.mxu0 %v287
    %2170 = vmatprep.subr.mxu0 0.0
    %2171 = vmatpush1.msra.mxu0 %v290
    %2172 = vmatprep.subr.mxu0 0.0
    %2173 = vmatpush1.msra.mxu0 %v293
    %2174 = vmatprep.subr.mxu0 0.0
    %2175 = vmatpush1.msra.mxu0 %v296
    %2176 = vmatprep.subr.mxu0 0.0
    %2177 = vmatpush1.msra.mxu0 %v299
    %2178 = vmatprep.subr.mxu0 0.0
    %2179 = vmatpush1.msra.mxu0 %v302
    %2180 = vmatprep.mubr.f32.mxu0 %v1874
    %2181 = vmatmul.mubr.f32.gmra.mrb[0].mxu0 %v1873
    %v2182 = vpop.f32.mrb[0].mxu0
    %v2183 = vadd.f32 0.0, %v2182
    %v2184 = vpop.f32.mrb[0].mxu0
    %2185 = vmatprep.mubr.f32.mxu0 %v1880
    %2186 = vmatmul.mubr.f32.gmra.mrb[0].mxu0 %v1879
    %v2187 = vpop.f32.mrb[0].mxu0
    %v2188 = vadd.f32 0.0, %v2187
    %v2189 = vpop.f32.mrb[0].mxu0
    %2190 = vdwg.mxu0
    %2191 = vmatprep.subr.mxu0 0.0
    %2192 = vmatpush1.msra.mxu0 %v305
    %2193 = vmatprep.subr.mxu0 0.0
    %2194 = vmatpush1.msra.mxu0 %v308
    %2195 = vmatprep.subr.mxu0 0.0
    %2196 = vmatpush1.msra.mxu0 %v311
    %2197 = vmatprep.subr.mxu0 0.0
    %2198 = vmatpush1.msra.mxu0 %v314
    %2199 = vmatprep.subr.mxu0 0.0
    %2200 = vmatpush1.msra.mxu0 %v317
    %2201 = vmatprep.subr.mxu0 0.0
    %2202 = vmatpush1.msra.mxu0 %v320
    %2203 = vmatprep.subr.mxu0 0.0
    %2204 = vmatpush1.msra.mxu0 %v323
    %2205 = vmatprep.subr.mxu0 0.0
    %2206 = vmatpush1.msra.mxu0 %v326
    %2207 = vmatprep.subr.mxu0 0.0
    %2208 = vmatpush1.msra.mxu0 %v329
    %2209 = vmatprep.subr.mxu0 0.0
    %2210 = vmatpush1.msra.mxu0 %v332
    %2211 = vmatprep.subr.mxu0 0.0
    %2212 = vmatpush1.msra.mxu0 %v335
    %2213 = vmatprep.subr.mxu0 0.0
    %2214 = vmatpush1.msra.mxu0 %v338
    %2215 = vmatprep.subr.mxu0 0.0
    %2216 = vmatpush1.msra.mxu0 %v341
    %2217 = vmatprep.subr.mxu0 0.0
    %2218 = vmatpush1.msra.mxu0 %v344
    %2219 = vmatprep.subr.mxu0 0.0
    %2220 = vmatpush1.msra.mxu0 %v347
    %2221 = vmatprep.subr.mxu0 0.0
    %2222 = vmatpush1.msra.mxu0 %v350
    %2223 = vmatprep.subr.mxu0 0.0
    %2224 = vmatpush1.msra.mxu0 %v353
    %2225 = vmatprep.subr.mxu0 0.0
    %2226 = vmatpush1.msra.mxu0 %v356
    %2227 = vmatprep.subr.mxu0 0.0
    %2228 = vmatpush1.msra.mxu0 %v359
    %2229 = vmatprep.subr.mxu0 0.0
    %2230 = vmatpush1.msra.mxu0 %v362
    %2231 = vmatprep.subr.mxu0 0.0
    %2232 = vmatpush1.msra.mxu0 %v365
    %2233 = vmatprep.subr.mxu0 0.0
    %2234 = vmatpush1.msra.mxu0 %v368
    %2235 = vmatprep.subr.mxu0 0.0
    %2236 = vmatpush1.msra.mxu0 %v371
    %2237 = vmatprep.subr.mxu0 0.0
    %2238 = vmatpush1.msra.mxu0 %v374
    %2239 = vmatprep.subr.mxu0 0.0
    %2240 = vmatpush1.msra.mxu0 %v377
    %2241 = vmatprep.subr.mxu0 0.0
    %2242 = vmatpush1.msra.mxu0 %v380
    %2243 = vmatprep.subr.mxu0 0.0
    %2244 = vmatpush1.msra.mxu0 %v383
    %2245 = vmatprep.subr.mxu0 0.0
    %2246 = vmatpush1.msra.mxu0 %v386
    %2247 = vmatprep.subr.mxu0 0.0
    %2248 = vmatpush1.msra.mxu0 %v389
    %2249 = vmatprep.subr.mxu0 0.0
    %2250 = vmatpush1.msra.mxu0 %v392
    %2251 = vmatprep.subr.mxu0 0.0
    %2252 = vmatpush1.msra.mxu0 %v395
    %2253 = vmatprep.subr.mxu0 0.0
    %2254 = vmatpush1.msra.mxu0 %v398
    %2255 = vmatprep.mubr.f32.mxu0 %v1876
    %2256 = vmatmul.mubr.f32.gmra.mrb[0].mxu0 %v1875
    %v2257 = vpop.f32.mrb[0].mxu0
    %v2258 = vadd.f32 %v2183, %v2257
    %v2259 = vpop.f32.mrb[0].mxu0
    %2260 = vmatprep.mubr.f32.mxu0 %v1882
    %2261 = vmatmul.mubr.f32.gmra.mrb[0].mxu0 %v1881
    %v2262 = vpop.f32.mrb[0].mxu0
    %v2263 = vadd.f32 %v2188, %v2262
    %v2264 = vpop.f32.mrb[0].mxu0
    %2265 = vdwg.mxu0
    %2266 = vmatprep.subr.mxu0 0.0
    %2267 = vmatpush1.msra.mxu0 %v401
    %2268 = vmatprep.subr.mxu0 0.0
    %2269 = vmatpush1.msra.mxu0 %v404
    %2270 = vmatprep.subr.mxu0 0.0
    %2271 = vmatpush1.msra.mxu0 %v407
    %2272 = vmatprep.subr.mxu0 0.0
    %2273 = vmatpush1.msra.mxu0 %v410
    %2274 = vmatprep.subr.mxu0 0.0
    %2275 = vmatpush1.msra.mxu0 %v413
    %2276 = vmatprep.subr.mxu0 0.0
    %2277 = vmatpush1.msra.mxu0 %v416
    %2278 = vmatprep.subr.mxu0 0.0
    %2279 = vmatpush1.msra.mxu0 %v419
    %2280 = vmatprep.subr.mxu0 0.0
    %2281 = vmatpush1.msra.mxu0 %v422
    %2282 = vmatprep.subr.mxu0 0.0
    %2283 = vmatpush1.msra.mxu0 %v425
    %2284 = vmatprep.subr.mxu0 0.0
    %2285 = vmatpush1.msra.mxu0 %v428
    %2286 = vmatprep.subr.mxu0 0.0
    %2287 = vmatpush1.msra.mxu0 %v431
    %2288 = vmatprep.subr.mxu0 0.0
    %2289 = vmatpush1.msra.mxu0 %v434
    %2290 = vmatprep.subr.mxu0 0.0
    %2291 = vmatpush1.msra.mxu0 %v437
    %2292 = vmatprep.subr.mxu0 0.0
    %2293 = vmatpush1.msra.mxu0 %v440
    %2294 = vmatprep.subr.mxu0 0.0
    %2295 = vmatpush1.msra.mxu0 %v443
    %2296 = vmatprep.subr.mxu0 0.0
    %2297 = vmatpush1.msra.mxu0 %v446
    %2298 = vmatprep.subr.mxu0 0.0
    %2299 = vmatpush1.msra.mxu0 %v449
    %2300 = vmatprep.subr.mxu0 0.0
    %2301 = vmatpush1.msra.mxu0 %v452
    %2302 = vmatprep.subr.mxu0 0.0
    %2303 = vmatpush1.msra.mxu0 %v455
    %2304 = vmatprep.subr.mxu0 0.0
    %2305 = vmatpush1.msra.mxu0 %v458
    %2306 = vmatprep.subr.mxu0 0.0
    %2307 = vmatpush1.msra.mxu0 %v461
    %2308 = vmatprep.subr.mxu0 0.0
    %2309 = vmatpush1.msra.mxu0 %v464
    %2310 = vmatprep.subr.mxu0 0.0
    %2311 = vmatpush1.msra.mxu0 %v467
    %2312 = vmatprep.subr.mxu0 0.0
    %2313 = vmatpush1.msra.mxu0 %v470
    %2314 = vmatprep.subr.mxu0 0.0
    %2315 = vmatpush1.msra.mxu0 %v473
    %2316 = vmatprep.subr.mxu0 0.0
    %2317 = vmatpush1.msra.mxu0 %v476
    %2318 = vmatprep.subr.mxu0 0.0
    %2319 = vmatpush1.msra.mxu0 %v479
    %2320 = vmatprep.subr.mxu0 0.0
    %2321 = vmatpush1.msra.mxu0 %v482
    %2322 = vmatprep.subr.mxu0 0.0
    %2323 = vmatpush1.msra.mxu0 %v485
    %2324 = vmatprep.subr.mxu0 0.0
    %2325 = vmatpush1.msra.mxu0 %v488
    %2326 = vmatprep.subr.mxu0 0.0
    %2327 = vmatpush1.msra.mxu0 %v491
    %2328 = vmatprep.subr.mxu0 0.0
    %2329 = vmatpush1.msra.mxu0 %v494
    %2330 = vmatprep.mubr.f32.mxu0 %v1878
    %2331 = vmatmul.mubr.f32.gmra.mrb[0].mxu0 %v1877
    %v2332 = vpop.f32.mrb[0].mxu0
    %v2333 = vadd.f32 %v2258, %v2332
    %v2334 = vpop.f32.mrb[0].mxu0
    %2335 = vmatprep.mubr.f32.mxu0 %v1884
    %2336 = vmatmul.mubr.f32.gmra.mrb[0].mxu0 %v1883
    %v2337 = vpop.f32.mrb[0].mxu0
    %v2338 = vadd.f32 %v2263, %v2337
    %v2339 = vpop.f32.mrb[0].mxu0
    %2340 = vdwg.mxu0
    %v2341 = vrot.slane %v2106, 7
    %v2342 = vrot.slane %v2112, 7
    %v2343 = vsel %vm1049, %v2341, %v2342
    %v2344 = vsel %vm1049, %v2342, %v2341
    %v2345 = vsel %vm1062, %v2344, 0.0
    %v2346 = vsel %vm1063, %v2343, 0.0
    %v2347 = vadd.f32 %v2345, %v2108
    %v2348 = vadd.f32 %v2346, %v2114
    %v2349 = vrot.slane %v2333, 1
    %v2350 = vrot.slane %v2338, 1
    %v2351 = vsel %vm1070, %v2349, %v2350
    %v2352 = vsel %vm1070, %v2350, %v2349
    %v2353 = vsel %vm1083, %v2351, 0.0
    %v2354 = vsel %vm1084, %v2352, 0.0
    %v2355 = vadd.f32 %v2347, %v2353
    %v2356 = vadd.f32 %v2348, %v2354
    %v2357 = vadd.f32 %v2355, %v1093
    %v2358 = vadd.f32 %v2356, %v1093
    %2359 = vmatprep.subr.mxu0 0.0
    %2360 = vmatpush1.msra.mxu0 %v496
    %2361 = vmatprep.subr.mxu0 0.0
    %2362 = vmatpush1.msra.mxu0 %v497
    %2363 = vmatprep.subr.mxu0 0.0
    %2364 = vmatpush1.msra.mxu0 %v498
    %2365 = vmatprep.subr.mxu0 0.0
    %2366 = vmatpush1.msra.mxu0 %v499
    %2367 = vmatprep.subr.mxu0 0.0
    %2368 = vmatpush1.msra.mxu0 %v500
    %2369 = vmatprep.subr.mxu0 0.0
    %2370 = vmatpush1.msra.mxu0 %v501
    %2371 = vmatprep.subr.mxu0 0.0
    %2372 = vmatpush1.msra.mxu0 %v502
    %2373 = vmatprep.subr.mxu0 0.0
    %2374 = vmatpush1.msra.mxu0 %v503
    %2375 = vmatprep.subr.mxu0 0.0
    %2376 = vmatpush1.msra.mxu0 %v504
    %2377 = vmatprep.subr.mxu0 0.0
    %2378 = vmatpush1.msra.mxu0 %v505
    %2379 = vmatprep.subr.mxu0 0.0
    %2380 = vmatpush1.msra.mxu0 %v506
    %2381 = vmatprep.subr.mxu0 0.0
    %2382 = vmatpush1.msra.mxu0 %v507
    %2383 = vmatprep.subr.mxu0 0.0
    %2384 = vmatpush1.msra.mxu0 %v508
    %2385 = vmatprep.subr.mxu0 0.0
    %2386 = vmatpush1.msra.mxu0 %v509
    %2387 = vmatprep.subr.mxu0 0.0
    %2388 = vmatpush1.msra.mxu0 %v510
    %2389 = vmatprep.subr.mxu0 0.0
    %2390 = vmatpush1.msra.mxu0 %v511
    %2391 = vmatprep.subr.mxu0 0.0
    %2392 = vmatpush1.msra.mxu0 0.0
    %2393 = vmatprep.subr.mxu0 0.0
    %2394 = vmatpush1.msra.mxu0 0.0
    %2395 = vmatprep.subr.mxu0 0.0
    %2396 = vmatpush1.msra.mxu0 0.0
    %2397 = vmatprep.subr.mxu0 0.0
    %2398 = vmatpush1.msra.mxu0 0.0
    %2399 = vmatprep.subr.mxu0 0.0
    %2400 = vmatpush1.msra.mxu0 0.0
    %2401 = vmatprep.subr.mxu0 0.0
    %2402 = vmatpush1.msra.mxu0 0.0
    %2403 = vmatprep.subr.mxu0 0.0
    %2404 = vmatpush1.msra.mxu0 0.0
    %2405 = vmatprep.subr.mxu0 0.0
    %2406 = vmatpush1.msra.mxu0 0.0
    %2407 = vmatprep.subr.mxu0 0.0
    %2408 = vmatpush1.msra.mxu0 0.0
    %2409 = vmatprep.subr.mxu0 0.0
    %2410 = vmatpush1.msra.mxu0 0.0
    %2411 = vmatprep.subr.mxu0 0.0
    %2412 = vmatpush1.msra.mxu0 0.0
    %2413 = vmatprep.subr.mxu0 0.0
    %2414 = vmatpush1.msra.mxu0 0.0
    %2415 = vmatprep.subr.mxu0 0.0
    %2416 = vmatpush1.msra.mxu0 0.0
    %2417 = vmatprep.subr.mxu0 0.0
    %2418 = vmatpush1.msra.mxu0 0.0
    %2419 = vmatprep.subr.mxu0 0.0
    %2420 = vmatpush1.msra.mxu0 0.0
    %2421 = vmatprep.subr.mxu0 0.0
    %2422 = vmatpush1.msra.mxu0 0.0
    %2423 = vmatprep.mubr.f32.mxu0 0.0
    %2424 = vmatmul.mubr.f32.gmra.mrb[0].mxu0 %v2357
    %v2425 = vpop.f32.mrb[0].mxu0
    %v2426 = vadd.f32 %v1101, %v2425
    %v2427 = vpop.f32.mrb[0].mxu0
    %2428 = vmatprep.mubr.f32.mxu0 0.0
    %2429 = vmatmul.mubr.f32.gmra.mrb[0].mxu0 %v2358
    %v2430 = vpop.f32.mrb[0].mxu0
    %v2431 = vadd.f32 %v1101, %v2430
    %v2432 = vpop.f32.mrb[0].mxu0
    %2433 = vdwg.mxu0
    %s2434 = sld [smem:[#allocation3 + $0x80]]
    %s2435 = sld [smem:[#allocation3 + $0x81]]
    %v2436 = vstv %s2434
    %vm2437 = vcmp.ge.s32.totalorder %v577, %v2436
    %vm2438 = vcmp.ge.s32.totalorder %v578, %v2436
    %v2439 = vstv %s2435
    %vm2440 = vcmp.le.s32.totalorder %v577, %v2439
    %vm2441 = vcmp.le.s32.totalorder %v578, %v2439
    %vm2442 = vmand %vm2437, %vm2440
    %vm2443 = vmand %vm2438, %vm2441
    %v2444 = vsel %vm2442, 1, 0
    %v2445 = vsel %vm2443, 1, 0
    %v2446 = vcvt.s32.f32 %v2444
    %v2447 = vcvt.s32.f32 %v2445
    %v2448 = vmul.f32 %v2426, %v2446
    %v2449 = vmul.f32 %v2431, %v2447
    %v2450 = vsel %vm1194, %v2448, -inf
    %v2451 = vsel %vm1194, %v2449, -inf
    %v2452 = vmax.f32 %v2450, %v2451
    %v2453 = vrot.slane %v2452, 4
    %v2454 = vmax.f32 %v2452, %v2453
    %v2455 = vrot.slane %v2454, 2
    %v2456 = vmax.f32 %v2454, %v2455
    %v2457 = vrot.slane %v2456, 1
    %v2458 = vmax.f32 %v2456, %v2457
    %v2459 = vsub.f32 %v2448, %v2458
    %v2460 = vsub.f32 %v2449, %v2458
    %v2461 = vmul.f32 %v2459, 1.442695
    %v2462 = vpow.pop %v2461
    %v2463 = vmul.f32 %v2460, 1.442695
    %v2464 = vpow.pop %v2463
    %v2465 = vsel %vm1194, %v2462, 0.0
    %v2466 = vsel %vm1194, %v2464, 0.0
    %v2467 = vadd.f32 %v2465, %v2466
    %v2468 = vrot.slane %v2467, 4
    %v2469 = vadd.f32 %v2467, %v2468
    %v2470 = vrot.slane %v2469, 2
    %v2471 = vadd.f32 %v2469, %v2470
    %v2472 = vrot.slane %v2471, 1
    %v2473 = vadd.f32 %v2471, %v2472
    %v2474 = vrcp.pop %v2473
    %v2475 = vmul.f32 %v2462, %v2474
    %v2476 = vmul.f32 %v2464, %v2474
    %v2477 = vmul.f32 %v2475, %v2446
    %v2478 = vmul.f32 %v2476, %v2447
    %v2479 = vsel %vm1194, %v2477, 0.0
    %v2480 = vsel %vm1194, %v2478, 0.0
    %v2481 = vadd.f32 %v2479, %v2480
    %v2482 = vrot.slane %v2481, 4
    %v2483 = vadd.f32 %v2481, %v2482
    %v2484 = vrot.slane %v2483, 2
    %v2485 = vadd.f32 %v2483, %v2484
    %v2486 = vrot.slane %v2485, 1
    %v2487 = vadd.f32 %v2485, %v2486
    %v2488 = vadd.f32 %v2487, 1e-13
    %v2489 = vrcp.pop %v2488
    %v2490 = vmul.f32 %v2477, %v2489
    %v2491 = vmul.f32 %v2478, %v2489
    %2493 = vset.pattern.permute.xlu0 0
    %2494 = vperm.xlu0 %2493, %v2490
    %v2495 = vpop.permute.xlu0 %2494
    %2498 = vset.pattern.permute.xlu0 0
    %2499 = vperm.xlu0 %2498, %v2491
    %v2500 = vpop.permute.xlu0 %2499
    %v2502 = vmul.f32 %v2495, %v2357
    %v2503 = vmul.f32 %v2500, %v2358
    %v2504 = vadd.f32 %v2502, %v2503
    %v2505 = vrot.slane %v2504, 4
    %v2506 = vadd.f32 %v2504, %v2505
    %v2507 = vrot.slane %v2506, 2
    %v2508 = vadd.f32 %v2506, %v2507
    %v2509 = vrot.slane %v2508, 1
    %v2510 = vadd.f32 %v2508, %v2509
    %v2511 = vmul.f32 %v2510, %v513
    %v2512 = vadd.f32 %v2511, %v514
    %2513 = vmatprep.subr.mxu0 0.0
    %2514 = vmatpush1.msra.mxu0 %v515
    %2515 = vmatprep.subr.mxu0 0.0
    %2516 = vmatpush1.msra.mxu0 %v516
    %2517 = vmatprep.subr.mxu0 0.0
    %2518 = vmatpush1.msra.mxu0 %v517
    %2519 = vmatprep.subr.mxu0 0.0
    %2520 = vmatpush1.msra.mxu0 %v518
    %2521 = vmatprep.subr.mxu0 0.0
    %2522 = vmatpush1.msra.mxu0 %v519
    %2523 = vmatprep.subr.mxu0 0.0
    %2524 = vmatpush1.msra.mxu0 %v520
    %2525 = vmatprep.subr.mxu0 0.0
    %2526 = vmatpush1.msra.mxu0 %v521
    %2527 = vmatprep.subr.mxu0 0.0
    %2528 = vmatpush1.msra.mxu0 %v522
    %2529 = vmatprep.subr.mxu0 0.0
    %2530 = vmatpush1.msra.mxu0 %v523
    %2531 = vmatprep.subr.mxu0 0.0
    %2532 = vmatpush1.msra.mxu0 %v524
    %2533 = vmatprep.subr.mxu0 0.0
    %2534 = vmatpush1.msra.mxu0 %v525
    %2535 = vmatprep.subr.mxu0 0.0
    %2536 = vmatpush1.msra.mxu0 %v526
    %2537 = vmatprep.subr.mxu0 0.0
    %2538 = vmatpush1.msra.mxu0 %v527
    %2539 = vmatprep.subr.mxu0 0.0
    %2540 = vmatpush1.msra.mxu0 %v528
    %2541 = vmatprep.subr.mxu0 0.0
    %2542 = vmatpush1.msra.mxu0 %v529
    %2543 = vmatprep.subr.mxu0 0.0
    %2544 = vmatpush1.msra.mxu0 %v530
    %2545 = vmatprep.subr.mxu0 0.0
    %2546 = vmatpush1.msra.mxu0 0.0
    %2547 = vmatprep.subr.mxu0 0.0
    %2548 = vmatpush1.msra.mxu0 0.0
    %2549 = vmatprep.subr.mxu0 0.0
    %2550 = vmatpush1.msra.mxu0 0.0
    %2551 = vmatprep.subr.mxu0 0.0
    %2552 = vmatpush1.msra.mxu0 0.0
    %2553 = vmatprep.subr.mxu0 0.0
    %2554 = vmatpush1.msra.mxu0 0.0
    %2555 = vmatprep.subr.mxu0 0.0
    %2556 = vmatpush1.msra.mxu0 0.0
    %2557 = vmatprep.subr.mxu0 0.0
    %2558 = vmatpush1.msra.mxu0 0.0
    %2559 = vmatprep.subr.mxu0 0.0
    %2560 = vmatpush1.msra.mxu0 0.0
    %2561 = vmatprep.subr.mxu0 0.0
    %2562 = vmatpush1.msra.mxu0 0.0
    %2563 = vmatprep.subr.mxu0 0.0
    %2564 = vmatpush1.msra.mxu0 0.0
    %2565 = vmatprep.subr.mxu0 0.0
    %2566 = vmatpush1.msra.mxu0 0.0
    %2567 = vmatprep.subr.mxu0 0.0
    %2568 = vmatpush1.msra.mxu0 0.0
    %2569 = vmatprep.subr.mxu0 0.0
    %2570 = vmatpush1.msra.mxu0 0.0
    %2571 = vmatprep.subr.mxu0 0.0
    %2572 = vmatpush1.msra.mxu0 0.0
    %2573 = vmatprep.subr.mxu0 0.0
    %2574 = vmatpush1.msra.mxu0 0.0
    %2575 = vmatprep.subr.mxu0 0.0
    %2576 = vmatpush1.msra.mxu0 0.0
    %2577 = vmatprep.mubr.f32.mxu0 0.0
    %2578 = vmatmul.mubr.f32.gmra.mrb[0].mxu0 %v2512
    %v2579 = vpop.f32.mrb[0].mxu0
    %v2580 = vadd.f32 0.0, %v2579
    %v2581 = vpop.f32.mrb[0].mxu0
    %2582 = vdwg.mxu0
    %v2583 = vadd.f32 %v563, %v2580
    %s2584 = sld [smem:[#allocation3 + $0x82]]
    %s2585 = sld [smem:[#allocation3 + $0x83]]
    %v2586 = vstv %s2584
    %vm2587 = vcmp.ge.s32.totalorder %v577, %v2586
    %vm2588 = vcmp.ge.s32.totalorder %v578, %v2586
    %v2589 = vstv %s2585
    %vm2590 = vcmp.le.s32.totalorder %v577, %v2589
    %vm2591 = vcmp.le.s32.totalorder %v578, %v2589
    %vm2592 = vmand %vm2587, %vm2590
    %vm2593 = vmand %vm2588, %vm2591
    %v2594 = vsel %vm2592, 1, 0
    %v2595 = vsel %vm2593, 1, 0
    %v2596 = vcvt.s32.f32 %v2594
    %v2597 = vcvt.s32.f32 %v2595
    %v2598 = vmul.f32 %v2426, %v2596
    %v2599 = vmul.f32 %v2431, %v2597
    %v2600 = vsel %vm1194, %v2598, -inf
    %v2601 = vsel %vm1194, %v2599, -inf
    %v2602 = vmax.f32 %v2600, %v2601
    %v2603 = vrot.slane %v2602, 4
    %v2604 = vmax.f32 %v2602, %v2603
    %v2605 = vrot.slane %v2604, 2
    %v2606 = vmax.f32 %v2604, %v2605
    %v2607 = vrot.slane %v2606, 1
    %v2608 = vmax.f32 %v2606, %v2607
    %v2609 = vsub.f32 %v2598, %v2608
    %v2610 = vsub.f32 %v2599, %v2608
    %v2611 = vmul.f32 %v2609, 1.442695
    %v2612 = vpow.pop %v2611
    %v2613 = vmul.f32 %v2610, 1.442695
    %v2614 = vpow.pop %v2613
    %v2615 = vsel %vm1194, %v2612, 0.0
    %v2616 = vsel %vm1194, %v2614, 0.0
    %v2617 = vadd.f32 %v2615, %v2616
    %v2618 = vrot.slane %v2617, 4
    %v2619 = vadd.f32 %v2617, %v2618
    %v2620 = vrot.slane %v2619, 2
    %v2621 = vadd.f32 %v2619, %v2620
    %v2622 = vrot.slane %v2621, 1
    %v2623 = vadd.f32 %v2621, %v2622
    %v2624 = vrcp.pop %v2623
    %v2625 = vmul.f32 %v2612, %v2624
    %v2626 = vmul.f32 %v2614, %v2624
    %v2627 = vmul.f32 %v2625, %v2596
    %v2628 = vmul.f32 %v2626, %v2597
    %v2629 = vsel %vm1194, %v2627, 0.0
    %v2630 = vsel %vm1194, %v2628, 0.0
    %v2631 = vadd.f32 %v2629, %v2630
    %v2632 = vrot.slane %v2631, 4
    %v2633 = vadd.f32 %v2631, %v2632
    %v2634 = vrot.slane %v2633, 2
    %v2635 = vadd.f32 %v2633, %v2634
    %v2636 = vrot.slane %v2635, 1
    %v2637 = vadd.f32 %v2635, %v2636
    %v2638 = vadd.f32 %v2637, 1e-13
    %v2639 = vrcp.pop %v2638
    %v2640 = vmul.f32 %v2627, %v2639
    %v2641 = vmul.f32 %v2628, %v2639
    %2643 = vset.pattern.permute.xlu0 0
    %2644 = vperm.xlu0 %2643, %v2640
    %v2645 = vpop.permute.xlu0 %2644
    %2648 = vset.pattern.permute.xlu0 0
    %2649 = vperm.xlu0 %2648, %v2641
    %v2650 = vpop.permute.xlu0 %2649
    %v2652 = vmul.f32 %v2645, %v2357
    %v2653 = vmul.f32 %v2650, %v2358
    %v2654 = vadd.f32 %v2652, %v2653
    %v2655 = vrot.slane %v2654, 4
    %v2656 = vadd.f32 %v2654, %v2655
    %v2657 = vrot.slane %v2656, 2
    %v2658 = vadd.f32 %v2656, %v2657
    %v2659 = vrot.slane %v2658, 1
    %v2660 = vadd.f32 %v2658, %v2659
    %v2661 = vmul.f32 %v2660, %v513
    %v2662 = vadd.f32 %v2661, %v514
    %v2664 = vrot.slane %v2662, 1
    %2666 = vmatprep.subr.mxu0 0.0
    %2667 = vmatpush1.msra.mxu0 %v531
    %2668 = vmatprep.subr.mxu0 0.0
    %2669 = vmatpush1.msra.mxu0 %v532
    %2670 = vmatprep.subr.mxu0 0.0
    %2671 = vmatpush1.msra.mxu0 %v533
    %2672 = vmatprep.subr.mxu0 0.0
    %2673 = vmatpush1.msra.mxu0 %v534
    %2674 = vmatprep.subr.mxu0 0.0
    %2675 = vmatpush1.msra.mxu0 %v535
    %2676 = vmatprep.subr.mxu0 0.0
    %2677 = vmatpush1.msra.mxu0 %v536
    %2678 = vmatprep.subr.mxu0 0.0
    %2679 = vmatpush1.msra.mxu0 %v537
    %2680 = vmatprep.subr.mxu0 0.0
    %2681 = vmatpush1.msra.mxu0 %v538
    %2682 = vmatprep.subr.mxu0 0.0
    %2683 = vmatpush1.msra.mxu0 %v539
    %2684 = vmatprep.subr.mxu0 0.0
    %2685 = vmatpush1.msra.mxu0 %v540
    %2686 = vmatprep.subr.mxu0 0.0
    %2687 = vmatpush1.msra.mxu0 %v541
    %2688 = vmatprep.subr.mxu0 0.0
    %2689 = vmatpush1.msra.mxu0 %v542
    %2690 = vmatprep.subr.mxu0 0.0
    %2691 = vmatpush1.msra.mxu0 %v543
    %2692 = vmatprep.subr.mxu0 0.0
    %2693 = vmatpush1.msra.mxu0 %v544
    %2694 = vmatprep.subr.mxu0 0.0
    %2695 = vmatpush1.msra.mxu0 %v545
    %2696 = vmatprep.subr.mxu0 0.0
    %2697 = vmatpush1.msra.mxu0 %v546
    %2698 = vmatprep.subr.mxu0 0.0
    %2699 = vmatpush1.msra.mxu0 0.0
    %2700 = vmatprep.subr.mxu0 0.0
    %2701 = vmatpush1.msra.mxu0 0.0
    %2702 = vmatprep.subr.mxu0 0.0
    %2703 = vmatpush1.msra.mxu0 0.0
    %2704 = vmatprep.subr.mxu0 0.0
    %2705 = vmatpush1.msra.mxu0 0.0
    %2706 = vmatprep.subr.mxu0 0.0
    %2707 = vmatpush1.msra.mxu0 0.0
    %2708 = vmatprep.subr.mxu0 0.0
    %2709 = vmatpush1.msra.mxu0 0.0
    %2710 = vmatprep.subr.mxu0 0.0
    %2711 = vmatpush1.msra.mxu0 0.0
    %2712 = vmatprep.subr.mxu0 0.0
    %2713 = vmatpush1.msra.mxu0 0.0
    %2714 = vmatprep.subr.mxu0 0.0
    %2715 = vmatpush1.msra.mxu0 0.0
    %2716 = vmatprep.subr.mxu0 0.0
    %2717 = vmatpush1.msra.mxu0 0.0
    %2718 = vmatprep.subr.mxu0 0.0
    %2719 = vmatpush1.msra.mxu0 0.0
    %2720 = vmatprep.subr.mxu0 0.0
    %2721 = vmatpush1.msra.mxu0 0.0
    %2722 = vmatprep.subr.mxu0 0.0
    %2723 = vmatpush1.msra.mxu0 0.0
    %2724 = vmatprep.subr.mxu0 0.0
    %2725 = vmatpush1.msra.mxu0 0.0
    %2726 = vmatprep.subr.mxu0 0.0
    %2727 = vmatpush1.msra.mxu0 0.0
    %2728 = vmatprep.subr.mxu0 0.0
    %2729 = vmatpush1.msra.mxu0 0.0
    %2730 = vmatprep.mubr.f32.mxu0 0.0
    %2731 = vmatmul.mubr.f32.gmra.mrb[0].mxu0 %v2664
    %v2732 = vpop.f32.mrb[0].mxu0
    %v2733 = vadd.f32 0.0, %v2732
    %v2734 = vpop.f32.mrb[0].mxu0
    %2735 = vdwg.mxu0
    %v2736 = vadd.f32 %v2583, %v2733
    %s2737 = sld [smem:[#allocation3 + $0x84]]
    %s2738 = sld [smem:[#allocation3 + $0x85]]
    %v2739 = vstv %s2737
    %vm2740 = vcmp.ge.s32.totalorder %v577, %v2739
    %vm2741 = vcmp.ge.s32.totalorder %v578, %v2739
    %v2742 = vstv %s2738
    %vm2743 = vcmp.le.s32.totalorder %v577, %v2742
    %vm2744 = vcmp.le.s32.totalorder %v578, %v2742
    %vm2745 = vmand %vm2740, %vm2743
    %vm2746 = vmand %vm2741, %vm2744
    %v2747 = vsel %vm2745, 1, 0
    %v2748 = vsel %vm2746, 1, 0
    %v2749 = vcvt.s32.f32 %v2747
    %v2750 = vcvt.s32.f32 %v2748
    %v2751 = vmul.f32 %v2426, %v2749
    %v2752 = vmul.f32 %v2431, %v2750
    %v2753 = vsel %vm1194, %v2751, -inf
    %v2754 = vsel %vm1194, %v2752, -inf
    %v2755 = vmax.f32 %v2753, %v2754
    %v2756 = vrot.slane %v2755, 4
    %v2757 = vmax.f32 %v2755, %v2756
    %v2758 = vrot.slane %v2757, 2
    %v2759 = vmax.f32 %v2757, %v2758
    %v2760 = vrot.slane %v2759, 1
    %v2761 = vmax.f32 %v2759, %v2760
    %v2762 = vsub.f32 %v2751, %v2761
    %v2763 = vsub.f32 %v2752, %v2761
    %v2764 = vmul.f32 %v2762, 1.442695
    %v2765 = vpow.pop %v2764
    %v2766 = vmul.f32 %v2763, 1.442695
    %v2767 = vpow.pop %v2766
    %v2768 = vsel %vm1194, %v2765, 0.0
    %v2769 = vsel %vm1194, %v2767, 0.0
    %v2770 = vadd.f32 %v2768, %v2769
    %v2771 = vrot.slane %v2770, 4
    %v2772 = vadd.f32 %v2770, %v2771
    %v2773 = vrot.slane %v2772, 2
    %v2774 = vadd.f32 %v2772, %v2773
    %v2775 = vrot.slane %v2774, 1
    %v2776 = vadd.f32 %v2774, %v2775
    %v2777 = vrcp.pop %v2776
    %v2778 = vmul.f32 %v2765, %v2777
    %v2779 = vmul.f32 %v2767, %v2777
    %v2780 = vmul.f32 %v2778, %v2749
    %v2781 = vmul.f32 %v2779, %v2750
    %v2782 = vsel %vm1194, %v2780, 0.0
    %v2783 = vsel %vm1194, %v2781, 0.0
    %v2784 = vadd.f32 %v2782, %v2783
    %v2785 = vrot.slane %v2784, 4
    %v2786 = vadd.f32 %v2784, %v2785
    %v2787 = vrot.slane %v2786, 2
    %v2788 = vadd.f32 %v2786, %v2787
    %v2789 = vrot.slane %v2788, 1
    %v2790 = vadd.f32 %v2788, %v2789
    %v2791 = vadd.f32 %v2790, 1e-13
    %v2792 = vrcp.pop %v2791
    %v2793 = vmul.f32 %v2780, %v2792
    %v2794 = vmul.f32 %v2781, %v2792
    %2796 = vset.pattern.permute.xlu0 0
    %2797 = vperm.xlu0 %2796, %v2793
    %v2798 = vpop.permute.xlu0 %2797
    %2801 = vset.pattern.permute.xlu0 0
    %2802 = vperm.xlu0 %2801, %v2794
    %v2803 = vpop.permute.xlu0 %2802
    %v2805 = vmul.f32 %v2798, %v2357
    %v2806 = vmul.f32 %v2803, %v2358
    %v2807 = vadd.f32 %v2805, %v2806
    %v2808 = vrot.slane %v2807, 4
    %v2809 = vadd.f32 %v2807, %v2808
    %v2810 = vrot.slane %v2809, 2
    %v2811 = vadd.f32 %v2809, %v2810
    %v2812 = vrot.slane %v2811, 1
    %v2813 = vadd.f32 %v2811, %v2812
    %v2814 = vmul.f32 %v2813, %v513
    %v2815 = vadd.f32 %v2814, %v514
    %v2817 = vrot.slane %v2815, 2
    %2819 = vmatprep.subr.mxu0 0.0
    %2820 = vmatpush1.msra.mxu0 %v547
    %2821 = vmatprep.subr.mxu0 0.0
    %2822 = vmatpush1.msra.mxu0 %v548
    %2823 = vmatprep.subr.mxu0 0.0
    %2824 = vmatpush1.msra.mxu0 %v549
    %2825 = vmatprep.subr.mxu0 0.0
    %2826 = vmatpush1.msra.mxu0 %v550
    %2827 = vmatprep.subr.mxu0 0.0
    %2828 = vmatpush1.msra.mxu0 %v551
    %2829 = vmatprep.subr.mxu0 0.0
    %2830 = vmatpush1.msra.mxu0 %v552
    %2831 = vmatprep.subr.mxu0 0.0
    %2832 = vmatpush1.msra.mxu0 %v553
    %2833 = vmatprep.subr.mxu0 0.0
    %2834 = vmatpush1.msra.mxu0 %v554
    %2835 = vmatprep.subr.mxu0 0.0
    %2836 = vmatpush1.msra.mxu0 %v555
    %2837 = vmatprep.subr.mxu0 0.0
    %2838 = vmatpush1.msra.mxu0 %v556
    %2839 = vmatprep.subr.mxu0 0.0
    %2840 = vmatpush1.msra.mxu0 %v557
    %2841 = vmatprep.subr.mxu0 0.0
    %2842 = vmatpush1.msra.mxu0 %v558
    %2843 = vmatprep.subr.mxu0 0.0
    %2844 = vmatpush1.msra.mxu0 %v559
    %2845 = vmatprep.subr.mxu0 0.0
    %2846 = vmatpush1.msra.mxu0 %v560
    %2847 = vmatprep.subr.mxu0 0.0
    %2848 = vmatpush1.msra.mxu0 %v561
    %2849 = vmatprep.subr.mxu0 0.0
    %2850 = vmatpush1.msra.mxu0 %v562
    %2851 = vmatprep.subr.mxu0 0.0
    %2852 = vmatpush1.msra.mxu0 0.0
    %2853 = vmatprep.subr.mxu0 0.0
    %2854 = vmatpush1.msra.mxu0 0.0
    %2855 = vmatprep.subr.mxu0 0.0
    %2856 = vmatpush1.msra.mxu0 0.0
    %2857 = vmatprep.subr.mxu0 0.0
    %2858 = vmatpush1.msra.mxu0 0.0
    %2859 = vmatprep.subr.mxu0 0.0
    %2860 = vmatpush1.msra.mxu0 0.0
    %2861 = vmatprep.subr.mxu0 0.0
    %2862 = vmatpush1.msra.mxu0 0.0
    %2863 = vmatprep.subr.mxu0 0.0
    %2864 = vmatpush1.msra.mxu0 0.0
    %2865 = vmatprep.subr.mxu0 0.0
    %2866 = vmatpush1.msra.mxu0 0.0
    %2867 = vmatprep.subr.mxu0 0.0
    %2868 = vmatpush1.msra.mxu0 0.0
    %2869 = vmatprep.subr.mxu0 0.0
    %2870 = vmatpush1.msra.mxu0 0.0
    %2871 = vmatprep.subr.mxu0 0.0
    %2872 = vmatpush1.msra.mxu0 0.0
    %2873 = vmatprep.subr.mxu0 0.0
    %2874 = vmatpush1.msra.mxu0 0.0
    %2875 = vmatprep.subr.mxu0 0.0
    %2876 = vmatpush1.msra.mxu0 0.0
    %2877 = vmatprep.subr.mxu0 0.0
    %2878 = vmatpush1.msra.mxu0 0.0
    %2879 = vmatprep.subr.mxu0 0.0
    %2880 = vmatpush1.msra.mxu0 0.0
    %2881 = vmatprep.subr.mxu0 0.0
    %2882 = vmatpush1.msra.mxu0 0.0
    %2883 = vmatprep.mubr.f32.mxu0 0.0
    %2884 = vmatmul.mubr.f32.gmra.mrb[0].mxu0 %v2817
    %v2885 = vpop.f32.mrb[0].mxu0
    %v2886 = vadd.f32 0.0, %v2885
    %v2887 = vpop.f32.mrb[0].mxu0
    %2888 = vdwg.mxu0
    %v2889 = vadd.f32 %v2736, %v2886
    %v2890 = vmax.f32 %v2889, 0.0
    %v2891 = vmul.f32 %v2890, %v564
    %v2892 = vadd.f32 %v2891, %v565
    %v2893 = vrot.slane %v574, 1
    %v2894 = vsel %vm1638, %v2893, 0
    %2896 = vmatprep.subr.mxu0 0.0
    %2897 = vmatpush1.msra.mxu0 %v1644
    %2898 = vmatprep.subr.mxu0 0.0
    %2899 = vmatpush1.msra.mxu0 0.0
    %2900 = vmatprep.subr.mxu0 0.0
    %2901 = vmatpush1.msra.mxu0 0.0
    %2902 = vmatprep.subr.mxu0 0.0
    %2903 = vmatpush1.msra.mxu0 0.0
    %2904 = vmatprep.subr.mxu0 0.0
    %2905 = vmatpush1.msra.mxu0 0.0
    %2906 = vmatprep.subr.mxu0 0.0
    %2907 = vmatpush1.msra.mxu0 0.0
    %2908 = vmatprep.subr.mxu0 0.0
    %2909 = vmatpush1.msra.mxu0 0.0
    %2910 = vmatprep.subr.mxu0 0.0
    %2911 = vmatpush1.msra.mxu0 0.0
    %2912 = vmatprep.subr.mxu0 0.0
    %2913 = vmatpush1.msra.mxu0 0.0
    %2914 = vmatprep.subr.mxu0 0.0
    %2915 = vmatpush1.msra.mxu0 0.0
    %2916 = vmatprep.subr.mxu0 0.0
    %2917 = vmatpush1.msra.mxu0 0.0
    %2918 = vmatprep.subr.mxu0 0.0
    %2919 = vmatpush1.msra.mxu0 0.0
    %2920 = vmatprep.subr.mxu0 0.0
    %2921 = vmatpush1.msra.mxu0 0.0
    %2922 = vmatprep.subr.mxu0 0.0
    %2923 = vmatpush1.msra.mxu0 0.0
    %2924 = vmatprep.subr.mxu0 0.0
    %2925 = vmatpush1.msra.mxu0 0.0
    %2926 = vmatprep.subr.mxu0 0.0
    %2927 = vmatpush1.msra.mxu0 0.0
    %2928 = vmatprep.subr.mxu0 0.0
    %2929 = vmatpush1.msra.mxu0 0.0
    %2930 = vmatprep.subr.mxu0 0.0
    %2931 = vmatpush1.msra.mxu0 0.0
    %2932 = vmatprep.subr.mxu0 0.0
    %2933 = vmatpush1.msra.mxu0 0.0
    %2934 = vmatprep.subr.mxu0 0.0
    %2935 = vmatpush1.msra.mxu0 0.0
    %2936 = vmatprep.subr.mxu0 0.0
    %2937 = vmatpush1.msra.mxu0 0.0
    %2938 = vmatprep.subr.mxu0 0.0
    %2939 = vmatpush1.msra.mxu0 0.0
    %2940 = vmatprep.subr.mxu0 0.0
    %2941 = vmatpush1.msra.mxu0 0.0
    %2942 = vmatprep.subr.mxu0 0.0
    %2943 = vmatpush1.msra.mxu0 0.0
    %2944 = vmatprep.subr.mxu0 0.0
    %2945 = vmatpush1.msra.mxu0 0.0
    %2946 = vmatprep.subr.mxu0 0.0
    %2947 = vmatpush1.msra.mxu0 0.0
    %2948 = vmatprep.subr.mxu0 0.0
    %2949 = vmatpush1.msra.mxu0 0.0
    %2950 = vmatprep.subr.mxu0 0.0
    %2951 = vmatpush1.msra.mxu0 0.0
    %2952 = vmatprep.subr.mxu0 0.0
    %2953 = vmatpush1.msra.mxu0 0.0
    %2954 = vmatprep.subr.mxu0 0.0
    %2955 = vmatpush1.msra.mxu0 0.0
    %2956 = vmatprep.subr.mxu0 0.0
    %2957 = vmatpush1.msra.mxu0 0.0
    %2958 = vmatprep.subr.mxu0 0.0
    %2959 = vmatpush1.msra.mxu0 0.0
    %2960 = vmatprep.mubr.f32.mxu0 0.0
    %2961 = vmatmul.mubr.f32.gmra.mrb[0].mxu0 %v2894
    %v2962 = vpop.f32.mrb[0].mxu0
    %v2963 = vadd.f32 0.0, %v2962
    %v2964 = vpop.f32.mrb[0].mxu0
    %2965 = vdwg.mxu0
    %v2967 = vsel %vm1716, %v2892, 0
    %2969 = vmatprep.subr.mxu0 0.0
    %2970 = vmatpush1.msra.mxu0 %v566
    %2971 = vmatprep.subr.mxu0 0.0
    %2972 = vmatpush1.msra.mxu0 %v567
    %2973 = vmatprep.subr.mxu0 0.0
    %2974 = vmatpush1.msra.mxu0 %v568
    %2975 = vmatprep.subr.mxu0 0.0
    %2976 = vmatpush1.msra.mxu0 %v569
    %2977 = vmatprep.subr.mxu0 0.0
    %2978 = vmatpush1.msra.mxu0 0.0
    %2979 = vmatprep.subr.mxu0 0.0
    %2980 = vmatpush1.msra.mxu0 0.0
    %2981 = vmatprep.subr.mxu0 0.0
    %2982 = vmatpush1.msra.mxu0 0.0
    %2983 = vmatprep.subr.mxu0 0.0
    %2984 = vmatpush1.msra.mxu0 0.0
    %2985 = vmatprep.subr.mxu0 0.0
    %2986 = vmatpush1.msra.mxu0 0.0
    %2987 = vmatprep.subr.mxu0 0.0
    %2988 = vmatpush1.msra.mxu0 0.0
    %2989 = vmatprep.subr.mxu0 0.0
    %2990 = vmatpush1.msra.mxu0 0.0
    %2991 = vmatprep.subr.mxu0 0.0
    %2992 = vmatpush1.msra.mxu0 0.0
    %2993 = vmatprep.subr.mxu0 0.0
    %2994 = vmatpush1.msra.mxu0 0.0
    %2995 = vmatprep.subr.mxu0 0.0
    %2996 = vmatpush1.msra.mxu0 0.0
    %2997 = vmatprep.subr.mxu0 0.0
    %2998 = vmatpush1.msra.mxu0 0.0
    %2999 = vmatprep.subr.mxu0 0.0
    %3000 = vmatpush1.msra.mxu0 0.0
    %3001 = vmatprep.subr.mxu0 0.0
    %3002 = vmatpush1.msra.mxu0 0.0
    %3003 = vmatprep.subr.mxu0 0.0
    %3004 = vmatpush1.msra.mxu0 0.0
    %3005 = vmatprep.subr.mxu0 0.0
    %3006 = vmatpush1.msra.mxu0 0.0
    %3007 = vmatprep.subr.mxu0 0.0
    %3008 = vmatpush1.msra.mxu0 0.0
    %3009 = vmatprep.subr.mxu0 0.0
    %3010 = vmatpush1.msra.mxu0 0.0
    %3011 = vmatprep.subr.mxu0 0.0
    %3012 = vmatpush1.msra.mxu0 0.0
    %3013 = vmatprep.subr.mxu0 0.0
    %3014 = vmatpush1.msra.mxu0 0.0
    %3015 = vmatprep.subr.mxu0 0.0
    %3016 = vmatpush1.msra.mxu0 0.0
    %3017 = vmatprep.subr.mxu0 0.0
    %3018 = vmatpush1.msra.mxu0 0.0
    %3019 = vmatprep.subr.mxu0 0.0
    %3020 = vmatpush1.msra.mxu0 0.0
    %3021 = vmatprep.subr.mxu0 0.0
    %3022 = vmatpush1.msra.mxu0 0.0
    %3023 = vmatprep.subr.mxu0 0.0
    %3024 = vmatpush1.msra.mxu0 0.0
    %3025 = vmatprep.subr.mxu0 0.0
    %3026 = vmatpush1.msra.mxu0 0.0
    %3027 = vmatprep.subr.mxu0 0.0
    %3028 = vmatpush1.msra.mxu0 0.0
    %3029 = vmatprep.subr.mxu0 0.0
    %3030 = vmatpush1.msra.mxu0 0.0
    %3031 = vmatprep.subr.mxu0 0.0
    %3032 = vmatpush1.msra.mxu0 0.0
    %3033 = vmatprep.mubr.f32.mxu0 0.0
    %3034 = vmatmul.mubr.f32.gmra.mrb[0].mxu0 %v2967
    %v3035 = vpop.f32.mrb[0].mxu0
    %v3036 = vadd.f32 %v2963, %v3035
    %v3037 = vpop.f32.mrb[0].mxu0
    %3038 = vdwg.mxu0
    %v3039 = vrot.slane %v575, 1
    %v3040 = vsel %vm1790, %v3039, 0
    %3042 = vmatprep.subr.mxu0 0.0
    %3043 = vmatpush1.msra.mxu0 %v571
    %3044 = vmatprep.subr.mxu0 0.0
    %3045 = vmatpush1.msra.mxu0 %v1796
    %3046 = vmatprep.subr.mxu0 0.0
    %3047 = vmatpush1.msra.mxu0 0.0
    %3048 = vmatprep.subr.mxu0 0.0
    %3049 = vmatpush1.msra.mxu0 0.0
    %3050 = vmatprep.subr.mxu0 0.0
    %3051 = vmatpush1.msra.mxu0 0.0
    %3052 = vmatprep.subr.mxu0 0.0
    %3053 = vmatpush1.msra.mxu0 0.0
    %3054 = vmatprep.subr.mxu0 0.0
    %3055 = vmatpush1.msra.mxu0 0.0
    %3056 = vmatprep.subr.mxu0 0.0
    %3057 = vmatpush1.msra.mxu0 0.0
    %3058 = vmatprep.subr.mxu0 0.0
    %3059 = vmatpush1.msra.mxu0 0.0
    %3060 = vmatprep.subr.mxu0 0.0
    %3061 = vmatpush1.msra.mxu0 0.0
    %3062 = vmatprep.subr.mxu0 0.0
    %3063 = vmatpush1.msra.mxu0 0.0
    %3064 = vmatprep.subr.mxu0 0.0
    %3065 = vmatpush1.msra.mxu0 0.0
    %3066 = vmatprep.subr.mxu0 0.0
    %3067 = vmatpush1.msra.mxu0 0.0
    %3068 = vmatprep.subr.mxu0 0.0
    %3069 = vmatpush1.msra.mxu0 0.0
    %3070 = vmatprep.subr.mxu0 0.0
    %3071 = vmatpush1.msra.mxu0 0.0
    %3072 = vmatprep.subr.mxu0 0.0
    %3073 = vmatpush1.msra.mxu0 0.0
    %3074 = vmatprep.subr.mxu0 0.0
    %3075 = vmatpush1.msra.mxu0 0.0
    %3076 = vmatprep.subr.mxu0 0.0
    %3077 = vmatpush1.msra.mxu0 0.0
    %3078 = vmatprep.subr.mxu0 0.0
    %3079 = vmatpush1.msra.mxu0 0.0
    %3080 = vmatprep.subr.mxu0 0.0
    %3081 = vmatpush1.msra.mxu0 0.0
    %3082 = vmatprep.subr.mxu0 0.0
    %3083 = vmatpush1.msra.mxu0 0.0
    %3084 = vmatprep.subr.mxu0 0.0
    %3085 = vmatpush1.msra.mxu0 0.0
    %3086 = vmatprep.subr.mxu0 0.0
    %3087 = vmatpush1.msra.mxu0 0.0
    %3088 = vmatprep.subr.mxu0 0.0
    %3089 = vmatpush1.msra.mxu0 0.0
    %3090 = vmatprep.subr.mxu0 0.0
    %3091 = vmatpush1.msra.mxu0 0.0
    %3092 = vmatprep.subr.mxu0 0.0
    %3093 = vmatpush1.msra.mxu0 0.0
    %3094 = vmatprep.subr.mxu0 0.0
    %3095 = vmatpush1.msra.mxu0 0.0
    %3096 = vmatprep.subr.mxu0 0.0
    %3097 = vmatpush1.msra.mxu0 0.0
    %3098 = vmatprep.subr.mxu0 0.0
    %3099 = vmatpush1.msra.mxu0 0.0
    %3100 = vmatprep.subr.mxu0 0.0
    %3101 = vmatpush1.msra.mxu0 0.0
    %3102 = vmatprep.subr.mxu0 0.0
    %3103 = vmatpush1.msra.mxu0 0.0
    %3104 = vmatprep.subr.mxu0 0.0
    %3105 = vmatpush1.msra.mxu0 0.0
    %3106 = vmatprep.mubr.f32.mxu0 0.0
    %3107 = vmatmul.mubr.f32.gmra.mrb[0].mxu0 %v3040
    %v3108 = vpop.f32.mrb[0].mxu0
    %v3109 = vadd.f32 0.0, %v3108
    %v3110 = vpop.f32.mrb[0].mxu0
    %3111 = vdwg.mxu0
    %v3112 = vadd.f32 %v3036, %v3109
    %v3113 = vadd.f32 %v3112, %v573
    %3114 = vst.msk [vmem:[#allocation25 + $0x1] sm:$0x1] %vm1870, %v3113
    // Predicated region
    $region118: #{tpu_custom_call.1} parent=1 // pred_check
      _
    $region119: #{tpu_custom_call.1} parent=1 // pred_check_branch
      %3116 = sbr.rel (0) target = $region121
    $region120: #{tpu_custom_call.1} parent=1 // pred_region
      %s3118 = ssub.s32 32, 32
      %3119 = vsyncadd [#allocation7], %s3118
      %s3121 = sshll.u32 [#allocation25], 4
      %s3122 = int_to_ptr.vmem [resolvable:$true] %s3121
      %3124 = dma.vmem_to_hbm [thread:$0]  %s3122, 32, %s18, [#allocation7]
    $region121: #{tpu_custom_call.1} parent=1 // pred_fallthru
      _
    // Predicated region
    $region122: #{tpu_custom_call.1} parent=1 // pred_check
      _
    $region123: #{tpu_custom_call.1} parent=1 // pred_check_branch
      %3126 = sbr.rel (0) target = $region125
    $region124: #{tpu_custom_call.1} parent=1 // pred_region
      %3127 = dma.done [#allocation7], 32
    $region125: #{tpu_custom_call.1} parent=1 // pred_fallthru
      _
    %3128 = vsyncpa [#allocation6], 1
    %3129 = vsyncpa [#allocation9], 1
    %3130 = vsyncpa [#allocation12], 1
    %3131 = vsyncpa [#allocation15], 1
    %3132 = vsyncpa [#allocation18], 1
    %3133 = vsyncpa [#allocation21], 1
    %3134 = vsyncpa [#allocation24], 1
    %3135 = vsyncpa [#allocation7], 1

</llo_original>
